<compile_context>
chip_gen: v6e
topology: v6e:2x2x1
jax: 0.10.0
libtpu: 0.0.40
codegen_flags: <defaults>
</compile_context>

<pallas_src>
import functools

import jax
import jax.numpy as jnp
from jax.experimental import pallas as pl
from jax.experimental.pallas import tpu as pltpu


# --------------------------- fused Matcher kernel ----------------------------
def matcher_kernel(tok1_ref, tok2_ref, gx_ref, whh_ref, bhn_ref, wc_ref, bc_ref,
                   out_ref, xs_ref):
    """tok1_ref/tok2_ref: (B, T) int32 in SMEM (token ids, seq1 / seq2)
       gx_ref : (V, C) f32 VMEM  pre-folded gate table  emb@W_ih + b_ih + [b_hr|b_hz|0]
       whh_ref: (H, C) f32 VMEM  W_hh (transposed), zero-padded 3H -> C=128 lanes
       bhn_ref: (1, H) f32 VMEM  hidden bias of the n gate (stays inside r*(.))
       wc_ref : (H, 2) f32 VMEM ; bc_ref: (1, 2) f32 VMEM  combiner Linear
       out_ref: (B, 2) f32       softmax probabilities
       xs_ref : (T, 2B, C) f32 VMEM scratch of gathered gate-x rows."""
    B, T = tok1_ref.shape
    H, C = whh_ref.shape
    R = 2 * B                                   # 8 sublane rows per tile

    # ---- in-kernel embedding/gate gather: seq1 -> rows 0..B-1, seq2 -> B..2B-1
    for t in range(T):
        for b in range(B):
            xs_ref[t, pl.ds(b, 1), :] = gx_ref[pl.ds(tok1_ref[b, t], 1), :]
            xs_ref[t, pl.ds(B + b, 1), :] = gx_ref[pl.ds(tok2_ref[b, t], 1), :]

    whh = whh_ref[...]                                    # (H, C) f32, resident
    bhn = jnp.broadcast_to(bhn_ref[...], (R, H))          # hoisted broadcast

    def gru_step(t, h):
        # h: (R, H) f32 carry.  Only matmul on the chain: (R,H) @ (H,C), K=H=32.
        x = xs_ref[t]                                     # (R, C) aligned tile
        g = jnp.dot(h, whh, preferred_element_type=jnp.float32)          # (R, C)
        rz = jax.nn.sigmoid(x[:, :2 * H] + g[:, :2 * H])
        r, z = rz[:, :H], rz[:, H:]
        n = jnp.tanh(x[:, 2 * H:3 * H] + r * (g[:, 2 * H:3 * H] + bhn))
        return n + z * (h - n)                            # == (1-z)*n + z*h

    # passes 1 & 2 (independent, zero init), batched on the sublane axis
    h12 = jax.lax.fori_loop(0, T, gru_step,
                            jnp.zeros((R, H), jnp.float32),
                            unroll=True)                  # rows 0..3=h1, 4..7=h2
    # pass 3: GRU(seq1, h2) — roll h2 into rows 0..3 (seq1 already sits there)
    h3 = jax.lax.fori_loop(0, T, gru_step,
                           pltpu.roll(h12, shift=B, axis=0),
                           unroll=True)                   # rows 0..3 = new h1
    # pass 4: GRU(seq2, new h1) — roll new h1 into rows 4..7 (seq2 sits there)
    h4 = jax.lax.fori_loop(0, T, gru_step,
                           pltpu.roll(h3, shift=B, axis=0),
                           unroll=True)                   # rows 4..7 = new h2

    # ---- match head: softmax(Linear(|h1-h2|)) == sigmoid of the logit diff ---
    d = jnp.abs(h3 - pltpu.roll(h4, shift=B, axis=0))     # rows 0..3 = |h1 - h2|
    logits = jnp.dot(d, wc_ref[...],
                     preferred_element_type=jnp.float32) + bc_ref[...]   # (R, 2)
    p1 = jax.nn.sigmoid(logits[:, 1:2] - logits[:, 0:1])
    out_ref[...] = jnp.concatenate([1.0 - p1, p1], axis=-1)[:B]


# ------------------------------ parameter prep -------------------------------
def init_params(key, vocab_size, hidden_size):
    """Raw (PyTorch-layout, pre-transposed) parameters."""
    ks = jax.random.split(key, 7)
    H = hidden_size
    bound = 1.0 / jnp.sqrt(jnp.float32(H))
    u = lambda k, shape, b: jax.random.uniform(k, shape, jnp.float32, -b, b)
    return dict(
        embedding=u(ks[0], (vocab_size, H), 1.0),
        # GRU weights stored transposed (H, 3H); biases stored as (1, 3H).
        wih_t=u(ks[1], (H, 3 * H), bound),
        whh_t=u(ks[2], (H, 3 * H), bound),
        bih=u(ks[3], (1, 3 * H), bound),
        bhh=u(ks[4], (1, 3 * H), bound),
        # combiner: Linear(H -> 2), stored transposed (H, 2), bias (1, 2).
        wc_t=u(ks[5], (H, 2), bound),
        bc=u(ks[6], (1, 2), bound),
    )


def pack_params(params):
    """One-time host-side packing for the fused kernel.

    gx_table[v] = emb[v] @ W_ih + b_ih + [b_hr | b_hz | 0], padded to C lanes.
    W_hh is zero-padded 3H -> C so the per-step matmul output is lane-dense.
    b_hn is kept separate so n = tanh(gi_n + r * (h@W_hn + b_hn)) matches
    PyTorch GRU semantics exactly.
    """
    H = params["wih_t"].shape[0]
    V = params["embedding"].shape[0]
    C = ((3 * H + 127) // 128) * 128                       # pad gate slab to 128
    gx = params["embedding"] @ params["wih_t"] + params["bih"]           # (V, 3H)
    gx = gx.at[:, :2 * H].add(params["bhh"][:, :2 * H])    # fold b_hr, b_hz
    gx_table = jnp.zeros((V, C), jnp.float32).at[:, :3 * H].set(gx)
    whh_pad = jnp.zeros((H, C), jnp.float32).at[:, :3 * H].set(params["whh_t"])
    bhn = params["bhh"][:, 2 * H:]                         # (1, H)
    return dict(gx_table=gx_table, whh_pad=whh_pad, bhn=bhn,
                wc_t=params["wc_t"], bc=params["bc"])


# --------------------------------- forward -----------------------------------
@jax.jit
def matcher_forward(tokens1, tokens2, packed):
    """Jitted forward = exactly one pallas_call (no XLA glue around it)."""
    B, T = tokens1.shape
    C = packed["gx_table"].shape[1]
    smem = lambda: pl.BlockSpec(memory_space=pltpu.MemorySpace.SMEM)
    vmem = lambda: pl.BlockSpec(memory_space=pltpu.MemorySpace.VMEM)
    # Note: at large batch (e.g. the Torch-hardcoded 256), add a leading grid
    # axis over batch blocks with dimension_semantics=("parallel",) so v7x's
    # two TensorCores split the work; at B=4 a gridless single-core launch wins.
    return pl.pallas_call(
        matcher_kernel,
        out_shape=jax.ShapeDtypeStruct((B, 2), jnp.float32),
        in_specs=[smem(), smem(), vmem(), vmem(), vmem(), vmem(), vmem()],
        out_specs=vmem(),
        scratch_shapes=[pltpu.VMEM((T, 2 * B, C), jnp.float32)],
    )(tokens1, tokens2, packed["gx_table"], packed["whh_pad"],
      packed["bhn"], packed["wc_t"], packed["bc"])


# ------------------------- pure-JAX reference (check) -------------------------
def _gru_ref(x_tbh, h0, wih_t, whh_t, bih, bhh):
    H = h0.shape[-1]

    def step(h, x):
        gi = x @ wih_t + bih
        gh = h @ whh_t + bhh
        r = jax.nn.sigmoid(gi[:, :H] + gh[:, :H])
        z = jax.nn.sigmoid(gi[:, H:2 * H] + gh[:, H:2 * H])
        n = jnp.tanh(gi[:, 2 * H:] + r * gh[:, 2 * H:])
        return (1.0 - z) * n + z * h, None

    h, _ = jax.lax.scan(step, h0, x_tbh)
    return h


def matcher_reference(tokens1, tokens2, params):
    emb = params["embedding"]
    B, H = tokens1.shape[0], emb.shape[1]
    x1 = jnp.transpose(jnp.take(emb, tokens1, axis=0), (1, 0, 2))
    x2 = jnp.transpose(jnp.take(emb, tokens2, axis=0), (1, 0, 2))
    h0 = jnp.zeros((B, H), jnp.float32)
    run = functools.partial(_gru_ref, wih_t=params["wih_t"],
                            whh_t=params["whh_t"],
                            bih=params["bih"], bhh=params["bhh"])
    h1 = run(x1, h0)
    h2 = run(x2, h0)
    h1 = run(x1, h2)
    h2 = run(x2, h1)
    logits = jnp.abs(h1 - h2) @ params["wc_t"] + params["bc"]
    return jax.nn.softmax(logits, axis=-1)


if __name__ == "__main__":
    VOCAB = 50       # enc_input_size
    HIDDEN = 32      # enc_hidden_size
    B, T = 4, 8      # batch, sequence length

    key = jax.random.PRNGKey(0)
    k_par, k_t1, k_t2 = jax.random.split(key, 3)

    params = init_params(k_par, VOCAB, HIDDEN)
    tokens1 = jax.random.randint(k_t1, (B, T), 0, VOCAB, dtype=jnp.int32)
    tokens2 = jax.random.randint(k_t2, (B, T), 0, VOCAB, dtype=jnp.int32)

    packed = pack_params(params)                 # one-time parameter packing
    out = matcher_forward(tokens1, tokens2, packed)
    jax.block_until_ready(out)

    assert out.shape == (B, 2)
    # rows of a softmax must sum to 1
    assert jnp.allclose(jnp.sum(out, axis=-1), 1.0, atol=1e-5)
    # match the pure-JAX f32 reference (kernel is f32 throughout now)
    ref = matcher_reference(tokens1, tokens2, params)
    assert jnp.allclose(out, ref, atol=1e-2), (out, ref)
    print("KERNEL_OK")
</pallas_src>

<mosaic_0001>
module attributes {stable_mosaic.version = 11 : i64} {
  func.func @matcher_kernel(%arg0: memref<4x8xi32, #tpu.memory_space<smem>>, %arg1: memref<4x8xi32, #tpu.memory_space<smem>>, %arg2: memref<50x128xf32, #tpu.memory_space<vmem>>, %arg3: memref<32x128xf32, #tpu.memory_space<vmem>>, %arg4: memref<1x32xf32, #tpu.memory_space<vmem>>, %arg5: memref<32x2xf32, #tpu.memory_space<vmem>>, %arg6: memref<1x2xf32, #tpu.memory_space<vmem>>, %arg7: memref<4x2xf32, #tpu.memory_space<vmem>>, %arg8: memref<8x8x128xf32, #tpu.memory_space<vmem>>) attributes {dimension_semantics = [], scalar_prefetch = 0 : i64, scratch_operands = 1 : i64, tpu.core_type = #tpu.core_type<tc>} {
    %c0 = arith.constant 0 : index
    %c0_0 = arith.constant 0 : index
    %0 = memref.load %arg0[%c0, %c0_0] : memref<4x8xi32, #tpu.memory_space<smem>>
    %1 = arith.index_cast %0 : i32 to index
    %c0_1 = arith.constant 0 : index
    %2 = vector.load %arg2[%1, %c0_1] : memref<50x128xf32, #tpu.memory_space<vmem>>, vector<1x128xf32>
    %c0_2 = arith.constant 0 : index
    %c0_3 = arith.constant 0 : index
    %c0_4 = arith.constant 0 : index
    %3 = vector.load %arg8[%c0_2, %c0_3, %c0_4] : memref<8x8x128xf32, #tpu.memory_space<vmem>>, vector<1x1x128xf32>
    %4 = vector.shape_cast %3 : vector<1x1x128xf32> to vector<1x128xf32>
    %5 = vector.shape_cast %2 : vector<1x128xf32> to vector<1x1x128xf32>
    tpu.vector_store %arg8[%c0_2, %c0_3, %c0_4], %5 {strides = array<i32>} : memref<8x8x128xf32, #tpu.memory_space<vmem>>, vector<1x1x128xf32>,
    %c0_5 = arith.constant 0 : index
    %c0_6 = arith.constant 0 : index
    %6 = memref.load %arg1[%c0_5, %c0_6] : memref<4x8xi32, #tpu.memory_space<smem>>
    %7 = arith.index_cast %6 : i32 to index
    %c0_7 = arith.constant 0 : index
    %8 = vector.load %arg2[%7, %c0_7] : memref<50x128xf32, #tpu.memory_space<vmem>>, vector<1x128xf32>
    %c0_8 = arith.constant 0 : index
    %c4 = arith.constant 4 : index
    %c0_9 = arith.constant 0 : index
    %9 = vector.load %arg8[%c0_8, %c4, %c0_9] : memref<8x8x128xf32, #tpu.memory_space<vmem>>, vector<1x1x128xf32>
    %10 = vector.shape_cast %9 : vector<1x1x128xf32> to vector<1x128xf32>
    %11 = vector.shape_cast %8 : vector<1x128xf32> to vector<1x1x128xf32>
    tpu.vector_store %arg8[%c0_8, %c4, %c0_9], %11 {strides = array<i32>} : memref<8x8x128xf32, #tpu.memory_space<vmem>>, vector<1x1x128xf32>,
    %c1 = arith.constant 1 : index
    %c0_10 = arith.constant 0 : index
    %12 = memref.load %arg0[%c1, %c0_10] : memref<4x8xi32, #tpu.memory_space<smem>>
    %13 = arith.index_cast %12 : i32 to index
    %c0_11 = arith.constant 0 : index
    %14 = vector.load %arg2[%13, %c0_11] : memref<50x128xf32, #tpu.memory_space<vmem>>, vector<1x128xf32>
    %c0_12 = arith.constant 0 : index
    %c1_13 = arith.constant 1 : index
    %c0_14 = arith.constant 0 : index
    %15 = vector.load %arg8[%c0_12, %c1_13, %c0_14] : memref<8x8x128xf32, #tpu.memory_space<vmem>>, vector<1x1x128xf32>
    %16 = vector.shape_cast %15 : vector<1x1x128xf32> to vector<1x128xf32>
    %17 = vector.shape_cast %14 : vector<1x128xf32> to vector<1x1x128xf32>
    tpu.vector_store %arg8[%c0_12, %c1_13, %c0_14], %17 {strides = array<i32>} : memref<8x8x128xf32, #tpu.memory_space<vmem>>, vector<1x1x128xf32>,
    %c1_15 = arith.constant 1 : index
    %c0_16 = arith.constant 0 : index
    %18 = memref.load %arg1[%c1_15, %c0_16] : memref<4x8xi32, #tpu.memory_space<smem>>
    %19 = arith.index_cast %18 : i32 to index
    %c0_17 = arith.constant 0 : index
    %20 = vector.load %arg2[%19, %c0_17] : memref<50x128xf32, #tpu.memory_space<vmem>>, vector<1x128xf32>
    %c0_18 = arith.constant 0 : index
    %c5 = arith.constant 5 : index
    %c0_19 = arith.constant 0 : index
    %21 = vector.load %arg8[%c0_18, %c5, %c0_19] : memref<8x8x128xf32, #tpu.memory_space<vmem>>, vector<1x1x128xf32>
    %22 = vector.shape_cast %21 : vector<1x1x128xf32> to vector<1x128xf32>
    %23 = vector.shape_cast %20 : vector<1x128xf32> to vector<1x1x128xf32>
    tpu.vector_store %arg8[%c0_18, %c5, %c0_19], %23 {strides = array<i32>} : memref<8x8x128xf32, #tpu.memory_space<vmem>>, vector<1x1x128xf32>,
    %c2 = arith.constant 2 : index
    %c0_20 = arith.constant 0 : index
    %24 = memref.load %arg0[%c2, %c0_20] : memref<4x8xi32, #tpu.memory_space<smem>>
    %25 = arith.index_cast %24 : i32 to index
    %c0_21 = arith.constant 0 : index
    %26 = vector.load %arg2[%25, %c0_21] : memref<50x128xf32, #tpu.memory_space<vmem>>, vector<1x128xf32>
    %c0_22 = arith.constant 0 : index
    %c2_23 = arith.constant 2 : index
    %c0_24 = arith.constant 0 : index
    %27 = vector.load %arg8[%c0_22, %c2_23, %c0_24] : memref<8x8x128xf32, #tpu.memory_space<vmem>>, vector<1x1x128xf32>
    %28 = vector.shape_cast %27 : vector<1x1x128xf32> to vector<1x128xf32>
    %29 = vector.shape_cast %26 : vector<1x128xf32> to vector<1x1x128xf32>
    tpu.vector_store %arg8[%c0_22, %c2_23, %c0_24], %29 {strides = array<i32>} : memref<8x8x128xf32, #tpu.memory_space<vmem>>, vector<1x1x128xf32>,
    %c2_25 = arith.constant 2 : index
    %c0_26 = arith.constant 0 : index
    %30 = memref.load %arg1[%c2_25, %c0_26] : memref<4x8xi32, #tpu.memory_space<smem>>
    %31 = arith.index_cast %30 : i32 to index
    %c0_27 = arith.constant 0 : index
    %32 = vector.load %arg2[%31, %c0_27] : memref<50x128xf32, #tpu.memory_space<vmem>>, vector<1x128xf32>
    %c0_28 = arith.constant 0 : index
    %c6 = arith.constant 6 : index
    %c0_29 = arith.constant 0 : index
    %33 = vector.load %arg8[%c0_28, %c6, %c0_29] : memref<8x8x128xf32, #tpu.memory_space<vmem>>, vector<1x1x128xf32>
    %34 = vector.shape_cast %33 : vector<1x1x128xf32> to vector<1x128xf32>
    %35 = vector.shape_cast %32 : vector<1x128xf32> to vector<1x1x128xf32>
    tpu.vector_store %arg8[%c0_28, %c6, %c0_29], %35 {strides = array<i32>} : memref<8x8x128xf32, #tpu.memory_space<vmem>>, vector<1x1x128xf32>,
    %c3 = arith.constant 3 : index
    %c0_30 = arith.constant 0 : index
    %36 = memref.load %arg0[%c3, %c0_30] : memref<4x8xi32, #tpu.memory_space<smem>>
    %37 = arith.index_cast %36 : i32 to index
    %c0_31 = arith.constant 0 : index
    %38 = vector.load %arg2[%37, %c0_31] : memref<50x128xf32, #tpu.memory_space<vmem>>, vector<1x128xf32>
    %c0_32 = arith.constant 0 : index
    %c3_33 = arith.constant 3 : index
    %c0_34 = arith.constant 0 : index
    %39 = vector.load %arg8[%c0_32, %c3_33, %c0_34] : memref<8x8x128xf32, #tpu.memory_space<vmem>>, vector<1x1x128xf32>
    %40 = vector.shape_cast %39 : vector<1x1x128xf32> to vector<1x128xf32>
    %41 = vector.shape_cast %38 : vector<1x128xf32> to vector<1x1x128xf32>
    tpu.vector_store %arg8[%c0_32, %c3_33, %c0_34], %41 {strides = array<i32>} : memref<8x8x128xf32, #tpu.memory_space<vmem>>, vector<1x1x128xf32>,
    %c3_35 = arith.constant 3 : index
    %c0_36 = arith.constant 0 : index
    %42 = memref.load %arg1[%c3_35, %c0_36] : memref<4x8xi32, #tpu.memory_space<smem>>
    %43 = arith.index_cast %42 : i32 to index
    %c0_37 = arith.constant 0 : index
    %44 = vector.load %arg2[%43, %c0_37] : memref<50x128xf32, #tpu.memory_space<vmem>>, vector<1x128xf32>
    %c0_38 = arith.constant 0 : index
    %c7 = arith.constant 7 : index
    %c0_39 = arith.constant 0 : index
    %45 = vector.load %arg8[%c0_38, %c7, %c0_39] : memref<8x8x128xf32, #tpu.memory_space<vmem>>, vector<1x1x128xf32>
    %46 = vector.shape_cast %45 : vector<1x1x128xf32> to vector<1x128xf32>
    %47 = vector.shape_cast %44 : vector<1x128xf32> to vector<1x1x128xf32>
    tpu.vector_store %arg8[%c0_38, %c7, %c0_39], %47 {strides = array<i32>} : memref<8x8x128xf32, #tpu.memory_space<vmem>>, vector<1x1x128xf32>,
    %c0_40 = arith.constant 0 : index
    %c1_41 = arith.constant 1 : index
    %48 = memref.load %arg0[%c0_40, %c1_41] : memref<4x8xi32, #tpu.memory_space<smem>>
    %49 = arith.index_cast %48 : i32 to index
    %c0_42 = arith.constant 0 : index
    %50 = vector.load %arg2[%49, %c0_42] : memref<50x128xf32, #tpu.memory_space<vmem>>, vector<1x128xf32>
    %c1_43 = arith.constant 1 : index
    %c0_44 = arith.constant 0 : index
    %c0_45 = arith.constant 0 : index
    %51 = vector.load %arg8[%c1_43, %c0_44, %c0_45] : memref<8x8x128xf32, #tpu.memory_space<vmem>>, vector<1x1x128xf32>
    %52 = vector.shape_cast %51 : vector<1x1x128xf32> to vector<1x128xf32>
    %53 = vector.shape_cast %50 : vector<1x128xf32> to vector<1x1x128xf32>
    tpu.vector_store %arg8[%c1_43, %c0_44, %c0_45], %53 {strides = array<i32>} : memref<8x8x128xf32, #tpu.memory_space<vmem>>, vector<1x1x128xf32>,
    %c0_46 = arith.constant 0 : index
    %c1_47 = arith.constant 1 : index
    %54 = memref.load %arg1[%c0_46, %c1_47] : memref<4x8xi32, #tpu.memory_space<smem>>
    %55 = arith.index_cast %54 : i32 to index
    %c0_48 = arith.constant 0 : index
    %56 = vector.load %arg2[%55, %c0_48] : memref<50x128xf32, #tpu.memory_space<vmem>>, vector<1x128xf32>
    %c1_49 = arith.constant 1 : index
    %c4_50 = arith.constant 4 : index
    %c0_51 = arith.constant 0 : index
    %57 = vector.load %arg8[%c1_49, %c4_50, %c0_51] : memref<8x8x128xf32, #tpu.memory_space<vmem>>, vector<1x1x128xf32>
    %58 = vector.shape_cast %57 : vector<1x1x128xf32> to vector<1x128xf32>
    %59 = vector.shape_cast %56 : vector<1x128xf32> to vector<1x1x128xf32>
    tpu.vector_store %arg8[%c1_49, %c4_50, %c0_51], %59 {strides = array<i32>} : memref<8x8x128xf32, #tpu.memory_space<vmem>>, vector<1x1x128xf32>,
    %c1_52 = arith.constant 1 : index
    %c1_53 = arith.constant 1 : index
    %60 = memref.load %arg0[%c1_52, %c1_53] : memref<4x8xi32, #tpu.memory_space<smem>>
    %61 = arith.index_cast %60 : i32 to index
    %c0_54 = arith.constant 0 : index
    %62 = vector.load %arg2[%61, %c0_54] : memref<50x128xf32, #tpu.memory_space<vmem>>, vector<1x128xf32>
    %c1_55 = arith.constant 1 : index
    %c1_56 = arith.constant 1 : index
    %c0_57 = arith.constant 0 : index
    %63 = vector.load %arg8[%c1_55, %c1_56, %c0_57] : memref<8x8x128xf32, #tpu.memory_space<vmem>>, vector<1x1x128xf32>
    %64 = vector.shape_cast %63 : vector<1x1x128xf32> to vector<1x128xf32>
    %65 = vector.shape_cast %62 : vector<1x128xf32> to vector<1x1x128xf32>
    tpu.vector_store %arg8[%c1_55, %c1_56, %c0_57], %65 {strides = array<i32>} : memref<8x8x128xf32, #tpu.memory_space<vmem>>, vector<1x1x128xf32>,
    %c1_58 = arith.constant 1 : index
    %c1_59 = arith.constant 1 : index
    %66 = memref.load %arg1[%c1_58, %c1_59] : memref<4x8xi32, #tpu.memory_space<smem>>
    %67 = arith.index_cast %66 : i32 to index
    %c0_60 = arith.constant 0 : index
    %68 = vector.load %arg2[%67, %c0_60] : memref<50x128xf32, #tpu.memory_space<vmem>>, vector<1x128xf32>
    %c1_61 = arith.constant 1 : index
    %c5_62 = arith.constant 5 : index
    %c0_63 = arith.constant 0 : index
    %69 = vector.load %arg8[%c1_61, %c5_62, %c0_63] : memref<8x8x128xf32, #tpu.memory_space<vmem>>, vector<1x1x128xf32>
    %70 = vector.shape_cast %69 : vector<1x1x128xf32> to vector<1x128xf32>
    %71 = vector.shape_cast %68 : vector<1x128xf32> to vector<1x1x128xf32>
    tpu.vector_store %arg8[%c1_61, %c5_62, %c0_63], %71 {strides = array<i32>} : memref<8x8x128xf32, #tpu.memory_space<vmem>>, vector<1x1x128xf32>,
    %c2_64 = arith.constant 2 : index
    %c1_65 = arith.constant 1 : index
    %72 = memref.load %arg0[%c2_64, %c1_65] : memref<4x8xi32, #tpu.memory_space<smem>>
    %73 = arith.index_cast %72 : i32 to index
    %c0_66 = arith.constant 0 : index
    %74 = vector.load %arg2[%73, %c0_66] : memref<50x128xf32, #tpu.memory_space<vmem>>, vector<1x128xf32>
    %c1_67 = arith.constant 1 : index
    %c2_68 = arith.constant 2 : index
    %c0_69 = arith.constant 0 : index
    %75 = vector.load %arg8[%c1_67, %c2_68, %c0_69] : memref<8x8x128xf32, #tpu.memory_space<vmem>>, vector<1x1x128xf32>
    %76 = vector.shape_cast %75 : vector<1x1x128xf32> to vector<1x128xf32>
    %77 = vector.shape_cast %74 : vector<1x128xf32> to vector<1x1x128xf32>
    tpu.vector_store %arg8[%c1_67, %c2_68, %c0_69], %77 {strides = array<i32>} : memref<8x8x128xf32, #tpu.memory_space<vmem>>, vector<1x1x128xf32>,
    %c2_70 = arith.constant 2 : index
    %c1_71 = arith.constant 1 : index
    %78 = memref.load %arg1[%c2_70, %c1_71] : memref<4x8xi32, #tpu.memory_space<smem>>
    %79 = arith.index_cast %78 : i32 to index
    %c0_72 = arith.constant 0 : index
    %80 = vector.load %arg2[%79, %c0_72] : memref<50x128xf32, #tpu.memory_space<vmem>>, vector<1x128xf32>
    %c1_73 = arith.constant 1 : index
    %c6_74 = arith.constant 6 : index
    %c0_75 = arith.constant 0 : index
    %81 = vector.load %arg8[%c1_73, %c6_74, %c0_75] : memref<8x8x128xf32, #tpu.memory_space<vmem>>, vector<1x1x128xf32>
    %82 = vector.shape_cast %81 : vector<1x1x128xf32> to vector<1x128xf32>
    %83 = vector.shape_cast %80 : vector<1x128xf32> to vector<1x1x128xf32>
    tpu.vector_store %arg8[%c1_73, %c6_74, %c0_75], %83 {strides = array<i32>} : memref<8x8x128xf32, #tpu.memory_space<vmem>>, vector<1x1x128xf32>,
    %c3_76 = arith.constant 3 : index
    %c1_77 = arith.constant 1 : index
    %84 = memref.load %arg0[%c3_76, %c1_77] : memref<4x8xi32, #tpu.memory_space<smem>>
    %85 = arith.index_cast %84 : i32 to index
    %c0_78 = arith.constant 0 : index
    %86 = vector.load %arg2[%85, %c0_78] : memref<50x128xf32, #tpu.memory_space<vmem>>, vector<1x128xf32>
    %c1_79 = arith.constant 1 : index
    %c3_80 = arith.constant 3 : index
    %c0_81 = arith.constant 0 : index
    %87 = vector.load %arg8[%c1_79, %c3_80, %c0_81] : memref<8x8x128xf32, #tpu.memory_space<vmem>>, vector<1x1x128xf32>
    %88 = vector.shape_cast %87 : vector<1x1x128xf32> to vector<1x128xf32>
    %89 = vector.shape_cast %86 : vector<1x128xf32> to vector<1x1x128xf32>
    tpu.vector_store %arg8[%c1_79, %c3_80, %c0_81], %89 {strides = array<i32>} : memref<8x8x128xf32, #tpu.memory_space<vmem>>, vector<1x1x128xf32>,
    %c3_82 = arith.constant 3 : index
    %c1_83 = arith.constant 1 : index
    %90 = memref.load %arg1[%c3_82, %c1_83] : memref<4x8xi32, #tpu.memory_space<smem>>
    %91 = arith.index_cast %90 : i32 to index
    %c0_84 = arith.constant 0 : index
    %92 = vector.load %arg2[%91, %c0_84] : memref<50x128xf32, #tpu.memory_space<vmem>>, vector<1x128xf32>
    %c1_85 = arith.constant 1 : index
    %c7_86 = arith.constant 7 : index
    %c0_87 = arith.constant 0 : index
    %93 = vector.load %arg8[%c1_85, %c7_86, %c0_87] : memref<8x8x128xf32, #tpu.memory_space<vmem>>, vector<1x1x128xf32>
    %94 = vector.shape_cast %93 : vector<1x1x128xf32> to vector<1x128xf32>
    %95 = vector.shape_cast %92 : vector<1x128xf32> to vector<1x1x128xf32>
    tpu.vector_store %arg8[%c1_85, %c7_86, %c0_87], %95 {strides = array<i32>} : memref<8x8x128xf32, #tpu.memory_space<vmem>>, vector<1x1x128xf32>,
    %c0_88 = arith.constant 0 : index
    %c2_89 = arith.constant 2 : index
    %96 = memref.load %arg0[%c0_88, %c2_89] : memref<4x8xi32, #tpu.memory_space<smem>>
    %97 = arith.index_cast %96 : i32 to index
    %c0_90 = arith.constant 0 : index
    %98 = vector.load %arg2[%97, %c0_90] : memref<50x128xf32, #tpu.memory_space<vmem>>, vector<1x128xf32>
    %c2_91 = arith.constant 2 : index
    %c0_92 = arith.constant 0 : index
    %c0_93 = arith.constant 0 : index
    %99 = vector.load %arg8[%c2_91, %c0_92, %c0_93] : memref<8x8x128xf32, #tpu.memory_space<vmem>>, vector<1x1x128xf32>
    %100 = vector.shape_cast %99 : vector<1x1x128xf32> to vector<1x128xf32>
    %101 = vector.shape_cast %98 : vector<1x128xf32> to vector<1x1x128xf32>
    tpu.vector_store %arg8[%c2_91, %c0_92, %c0_93], %101 {strides = array<i32>} : memref<8x8x128xf32, #tpu.memory_space<vmem>>, vector<1x1x128xf32>,
    %c0_94 = arith.constant 0 : index
    %c2_95 = arith.constant 2 : index
    %102 = memref.load %arg1[%c0_94, %c2_95] : memref<4x8xi32, #tpu.memory_space<smem>>
    %103 = arith.index_cast %102 : i32 to index
    %c0_96 = arith.constant 0 : index
    %104 = vector.load %arg2[%103, %c0_96] : memref<50x128xf32, #tpu.memory_space<vmem>>, vector<1x128xf32>
    %c2_97 = arith.constant 2 : index
    %c4_98 = arith.constant 4 : index
    %c0_99 = arith.constant 0 : index
    %105 = vector.load %arg8[%c2_97, %c4_98, %c0_99] : memref<8x8x128xf32, #tpu.memory_space<vmem>>, vector<1x1x128xf32>
    %106 = vector.shape_cast %105 : vector<1x1x128xf32> to vector<1x128xf32>
    %107 = vector.shape_cast %104 : vector<1x128xf32> to vector<1x1x128xf32>
    tpu.vector_store %arg8[%c2_97, %c4_98, %c0_99], %107 {strides = array<i32>} : memref<8x8x128xf32, #tpu.memory_space<vmem>>, vector<1x1x128xf32>,
    %c1_100 = arith.constant 1 : index
    %c2_101 = arith.constant 2 : index
    %108 = memref.load %arg0[%c1_100, %c2_101] : memref<4x8xi32, #tpu.memory_space<smem>>
    %109 = arith.index_cast %108 : i32 to index
    %c0_102 = arith.constant 0 : index
    %110 = vector.load %arg2[%109, %c0_102] : memref<50x128xf32, #tpu.memory_space<vmem>>, vector<1x128xf32>
    %c2_103 = arith.constant 2 : index
    %c1_104 = arith.constant 1 : index
    %c0_105 = arith.constant 0 : index
    %111 = vector.load %arg8[%c2_103, %c1_104, %c0_105] : memref<8x8x128xf32, #tpu.memory_space<vmem>>, vector<1x1x128xf32>
    %112 = vector.shape_cast %111 : vector<1x1x128xf32> to vector<1x128xf32>
    %113 = vector.shape_cast %110 : vector<1x128xf32> to vector<1x1x128xf32>
    tpu.vector_store %arg8[%c2_103, %c1_104, %c0_105], %113 {strides = array<i32>} : memref<8x8x128xf32, #tpu.memory_space<vmem>>, vector<1x1x128xf32>,
    %c1_106 = arith.constant 1 : index
    %c2_107 = arith.constant 2 : index
    %114 = memref.load %arg1[%c1_106, %c2_107] : memref<4x8xi32, #tpu.memory_space<smem>>
    %115 = arith.index_cast %114 : i32 to index
    %c0_108 = arith.constant 0 : index
    %116 = vector.load %arg2[%115, %c0_108] : memref<50x128xf32, #tpu.memory_space<vmem>>, vector<1x128xf32>
    %c2_109 = arith.constant 2 : index
    %c5_110 = arith.constant 5 : index
    %c0_111 = arith.constant 0 : index
    %117 = vector.load %arg8[%c2_109, %c5_110, %c0_111] : memref<8x8x128xf32, #tpu.memory_space<vmem>>, vector<1x1x128xf32>
    %118 = vector.shape_cast %117 : vector<1x1x128xf32> to vector<1x128xf32>
    %119 = vector.shape_cast %116 : vector<1x128xf32> to vector<1x1x128xf32>
    tpu.vector_store %arg8[%c2_109, %c5_110, %c0_111], %119 {strides = array<i32>} : memref<8x8x128xf32, #tpu.memory_space<vmem>>, vector<1x1x128xf32>,
    %c2_112 = arith.constant 2 : index
    %c2_113 = arith.constant 2 : index
    %120 = memref.load %arg0[%c2_112, %c2_113] : memref<4x8xi32, #tpu.memory_space<smem>>
    %121 = arith.index_cast %120 : i32 to index
    %c0_114 = arith.constant 0 : index
    %122 = vector.load %arg2[%121, %c0_114] : memref<50x128xf32, #tpu.memory_space<vmem>>, vector<1x128xf32>
    %c2_115 = arith.constant 2 : index
    %c2_116 = arith.constant 2 : index
    %c0_117 = arith.constant 0 : index
    %123 = vector.load %arg8[%c2_115, %c2_116, %c0_117] : memref<8x8x128xf32, #tpu.memory_space<vmem>>, vector<1x1x128xf32>
    %124 = vector.shape_cast %123 : vector<1x1x128xf32> to vector<1x128xf32>
    %125 = vector.shape_cast %122 : vector<1x128xf32> to vector<1x1x128xf32>
    tpu.vector_store %arg8[%c2_115, %c2_116, %c0_117], %125 {strides = array<i32>} : memref<8x8x128xf32, #tpu.memory_space<vmem>>, vector<1x1x128xf32>,
    %c2_118 = arith.constant 2 : index
    %c2_119 = arith.constant 2 : index
    %126 = memref.load %arg1[%c2_118, %c2_119] : memref<4x8xi32, #tpu.memory_space<smem>>
    %127 = arith.index_cast %126 : i32 to index
    %c0_120 = arith.constant 0 : index
    %128 = vector.load %arg2[%127, %c0_120] : memref<50x128xf32, #tpu.memory_space<vmem>>, vector<1x128xf32>
    %c2_121 = arith.constant 2 : index
    %c6_122 = arith.constant 6 : index
    %c0_123 = arith.constant 0 : index
    %129 = vector.load %arg8[%c2_121, %c6_122, %c0_123] : memref<8x8x128xf32, #tpu.memory_space<vmem>>, vector<1x1x128xf32>
    %130 = vector.shape_cast %129 : vector<1x1x128xf32> to vector<1x128xf32>
    %131 = vector.shape_cast %128 : vector<1x128xf32> to vector<1x1x128xf32>
    tpu.vector_store %arg8[%c2_121, %c6_122, %c0_123], %131 {strides = array<i32>} : memref<8x8x128xf32, #tpu.memory_space<vmem>>, vector<1x1x128xf32>,
    %c3_124 = arith.constant 3 : index
    %c2_125 = arith.constant 2 : index
    %132 = memref.load %arg0[%c3_124, %c2_125] : memref<4x8xi32, #tpu.memory_space<smem>>
    %133 = arith.index_cast %132 : i32 to index
    %c0_126 = arith.constant 0 : index
    %134 = vector.load %arg2[%133, %c0_126] : memref<50x128xf32, #tpu.memory_space<vmem>>, vector<1x128xf32>
    %c2_127 = arith.constant 2 : index
    %c3_128 = arith.constant 3 : index
    %c0_129 = arith.constant 0 : index
    %135 = vector.load %arg8[%c2_127, %c3_128, %c0_129] : memref<8x8x128xf32, #tpu.memory_space<vmem>>, vector<1x1x128xf32>
    %136 = vector.shape_cast %135 : vector<1x1x128xf32> to vector<1x128xf32>
    %137 = vector.shape_cast %134 : vector<1x128xf32> to vector<1x1x128xf32>
    tpu.vector_store %arg8[%c2_127, %c3_128, %c0_129], %137 {strides = array<i32>} : memref<8x8x128xf32, #tpu.memory_space<vmem>>, vector<1x1x128xf32>,
    %c3_130 = arith.constant 3 : index
    %c2_131 = arith.constant 2 : index
    %138 = memref.load %arg1[%c3_130, %c2_131] : memref<4x8xi32, #tpu.memory_space<smem>>
    %139 = arith.index_cast %138 : i32 to index
    %c0_132 = arith.constant 0 : index
    %140 = vector.load %arg2[%139, %c0_132] : memref<50x128xf32, #tpu.memory_space<vmem>>, vector<1x128xf32>
    %c2_133 = arith.constant 2 : index
    %c7_134 = arith.constant 7 : index
    %c0_135 = arith.constant 0 : index
    %141 = vector.load %arg8[%c2_133, %c7_134, %c0_135] : memref<8x8x128xf32, #tpu.memory_space<vmem>>, vector<1x1x128xf32>
    %142 = vector.shape_cast %141 : vector<1x1x128xf32> to vector<1x128xf32>
    %143 = vector.shape_cast %140 : vector<1x128xf32> to vector<1x1x128xf32>
    tpu.vector_store %arg8[%c2_133, %c7_134, %c0_135], %143 {strides = array<i32>} : memref<8x8x128xf32, #tpu.memory_space<vmem>>, vector<1x1x128xf32>,
    %c0_136 = arith.constant 0 : index
    %c3_137 = arith.constant 3 : index
    %144 = memref.load %arg0[%c0_136, %c3_137] : memref<4x8xi32, #tpu.memory_space<smem>>
    %145 = arith.index_cast %144 : i32 to index
    %c0_138 = arith.constant 0 : index
    %146 = vector.load %arg2[%145, %c0_138] : memref<50x128xf32, #tpu.memory_space<vmem>>, vector<1x128xf32>
    %c3_139 = arith.constant 3 : index
    %c0_140 = arith.constant 0 : index
    %c0_141 = arith.constant 0 : index
    %147 = vector.load %arg8[%c3_139, %c0_140, %c0_141] : memref<8x8x128xf32, #tpu.memory_space<vmem>>, vector<1x1x128xf32>
    %148 = vector.shape_cast %147 : vector<1x1x128xf32> to vector<1x128xf32>
    %149 = vector.shape_cast %146 : vector<1x128xf32> to vector<1x1x128xf32>
    tpu.vector_store %arg8[%c3_139, %c0_140, %c0_141], %149 {strides = array<i32>} : memref<8x8x128xf32, #tpu.memory_space<vmem>>, vector<1x1x128xf32>,
    %c0_142 = arith.constant 0 : index
    %c3_143 = arith.constant 3 : index
    %150 = memref.load %arg1[%c0_142, %c3_143] : memref<4x8xi32, #tpu.memory_space<smem>>
    %151 = arith.index_cast %150 : i32 to index
    %c0_144 = arith.constant 0 : index
    %152 = vector.load %arg2[%151, %c0_144] : memref<50x128xf32, #tpu.memory_space<vmem>>, vector<1x128xf32>
    %c3_145 = arith.constant 3 : index
    %c4_146 = arith.constant 4 : index
    %c0_147 = arith.constant 0 : index
    %153 = vector.load %arg8[%c3_145, %c4_146, %c0_147] : memref<8x8x128xf32, #tpu.memory_space<vmem>>, vector<1x1x128xf32>
    %154 = vector.shape_cast %153 : vector<1x1x128xf32> to vector<1x128xf32>
    %155 = vector.shape_cast %152 : vector<1x128xf32> to vector<1x1x128xf32>
    tpu.vector_store %arg8[%c3_145, %c4_146, %c0_147], %155 {strides = array<i32>} : memref<8x8x128xf32, #tpu.memory_space<vmem>>, vector<1x1x128xf32>,
    %c1_148 = arith.constant 1 : index
    %c3_149 = arith.constant 3 : index
    %156 = memref.load %arg0[%c1_148, %c3_149] : memref<4x8xi32, #tpu.memory_space<smem>>
    %157 = arith.index_cast %156 : i32 to index
    %c0_150 = arith.constant 0 : index
    %158 = vector.load %arg2[%157, %c0_150] : memref<50x128xf32, #tpu.memory_space<vmem>>, vector<1x128xf32>
    %c3_151 = arith.constant 3 : index
    %c1_152 = arith.constant 1 : index
    %c0_153 = arith.constant 0 : index
    %159 = vector.load %arg8[%c3_151, %c1_152, %c0_153] : memref<8x8x128xf32, #tpu.memory_space<vmem>>, vector<1x1x128xf32>
    %160 = vector.shape_cast %159 : vector<1x1x128xf32> to vector<1x128xf32>
    %161 = vector.shape_cast %158 : vector<1x128xf32> to vector<1x1x128xf32>
    tpu.vector_store %arg8[%c3_151, %c1_152, %c0_153], %161 {strides = array<i32>} : memref<8x8x128xf32, #tpu.memory_space<vmem>>, vector<1x1x128xf32>,
    %c1_154 = arith.constant 1 : index
    %c3_155 = arith.constant 3 : index
    %162 = memref.load %arg1[%c1_154, %c3_155] : memref<4x8xi32, #tpu.memory_space<smem>>
    %163 = arith.index_cast %162 : i32 to index
    %c0_156 = arith.constant 0 : index
    %164 = vector.load %arg2[%163, %c0_156] : memref<50x128xf32, #tpu.memory_space<vmem>>, vector<1x128xf32>
    %c3_157 = arith.constant 3 : index
    %c5_158 = arith.constant 5 : index
    %c0_159 = arith.constant 0 : index
    %165 = vector.load %arg8[%c3_157, %c5_158, %c0_159] : memref<8x8x128xf32, #tpu.memory_space<vmem>>, vector<1x1x128xf32>
    %166 = vector.shape_cast %165 : vector<1x1x128xf32> to vector<1x128xf32>
    %167 = vector.shape_cast %164 : vector<1x128xf32> to vector<1x1x128xf32>
    tpu.vector_store %arg8[%c3_157, %c5_158, %c0_159], %167 {strides = array<i32>} : memref<8x8x128xf32, #tpu.memory_space<vmem>>, vector<1x1x128xf32>,
    %c2_160 = arith.constant 2 : index
    %c3_161 = arith.constant 3 : index
    %168 = memref.load %arg0[%c2_160, %c3_161] : memref<4x8xi32, #tpu.memory_space<smem>>
    %169 = arith.index_cast %168 : i32 to index
    %c0_162 = arith.constant 0 : index
    %170 = vector.load %arg2[%169, %c0_162] : memref<50x128xf32, #tpu.memory_space<vmem>>, vector<1x128xf32>
    %c3_163 = arith.constant 3 : index
    %c2_164 = arith.constant 2 : index
    %c0_165 = arith.constant 0 : index
    %171 = vector.load %arg8[%c3_163, %c2_164, %c0_165] : memref<8x8x128xf32, #tpu.memory_space<vmem>>, vector<1x1x128xf32>
    %172 = vector.shape_cast %171 : vector<1x1x128xf32> to vector<1x128xf32>
    %173 = vector.shape_cast %170 : vector<1x128xf32> to vector<1x1x128xf32>
    tpu.vector_store %arg8[%c3_163, %c2_164, %c0_165], %173 {strides = array<i32>} : memref<8x8x128xf32, #tpu.memory_space<vmem>>, vector<1x1x128xf32>,
    %c2_166 = arith.constant 2 : index
    %c3_167 = arith.constant 3 : index
    %174 = memref.load %arg1[%c2_166, %c3_167] : memref<4x8xi32, #tpu.memory_space<smem>>
    %175 = arith.index_cast %174 : i32 to index
    %c0_168 = arith.constant 0 : index
    %176 = vector.load %arg2[%175, %c0_168] : memref<50x128xf32, #tpu.memory_space<vmem>>, vector<1x128xf32>
    %c3_169 = arith.constant 3 : index
    %c6_170 = arith.constant 6 : index
    %c0_171 = arith.constant 0 : index
    %177 = vector.load %arg8[%c3_169, %c6_170, %c0_171] : memref<8x8x128xf32, #tpu.memory_space<vmem>>, vector<1x1x128xf32>
    %178 = vector.shape_cast %177 : vector<1x1x128xf32> to vector<1x128xf32>
    %179 = vector.shape_cast %176 : vector<1x128xf32> to vector<1x1x128xf32>
    tpu.vector_store %arg8[%c3_169, %c6_170, %c0_171], %179 {strides = array<i32>} : memref<8x8x128xf32, #tpu.memory_space<vmem>>, vector<1x1x128xf32>,
    %c3_172 = arith.constant 3 : index
    %c3_173 = arith.constant 3 : index
    %180 = memref.load %arg0[%c3_172, %c3_173] : memref<4x8xi32, #tpu.memory_space<smem>>
    %181 = arith.index_cast %180 : i32 to index
    %c0_174 = arith.constant 0 : index
    %182 = vector.load %arg2[%181, %c0_174] : memref<50x128xf32, #tpu.memory_space<vmem>>, vector<1x128xf32>
    %c3_175 = arith.constant 3 : index
    %c3_176 = arith.constant 3 : index
    %c0_177 = arith.constant 0 : index
    %183 = vector.load %arg8[%c3_175, %c3_176, %c0_177] : memref<8x8x128xf32, #tpu.memory_space<vmem>>, vector<1x1x128xf32>
    %184 = vector.shape_cast %183 : vector<1x1x128xf32> to vector<1x128xf32>
    %185 = vector.shape_cast %182 : vector<1x128xf32> to vector<1x1x128xf32>
    tpu.vector_store %arg8[%c3_175, %c3_176, %c0_177], %185 {strides = array<i32>} : memref<8x8x128xf32, #tpu.memory_space<vmem>>, vector<1x1x128xf32>,
    %c3_178 = arith.constant 3 : index
    %c3_179 = arith.constant 3 : index
    %186 = memref.load %arg1[%c3_178, %c3_179] : memref<4x8xi32, #tpu.memory_space<smem>>
    %187 = arith.index_cast %186 : i32 to index
    %c0_180 = arith.constant 0 : index
    %188 = vector.load %arg2[%187, %c0_180] : memref<50x128xf32, #tpu.memory_space<vmem>>, vector<1x128xf32>
    %c3_181 = arith.constant 3 : index
    %c7_182 = arith.constant 7 : index
    %c0_183 = arith.constant 0 : index
    %189 = vector.load %arg8[%c3_181, %c7_182, %c0_183] : memref<8x8x128xf32, #tpu.memory_space<vmem>>, vector<1x1x128xf32>
    %190 = vector.shape_cast %189 : vector<1x1x128xf32> to vector<1x128xf32>
    %191 = vector.shape_cast %188 : vector<1x128xf32> to vector<1x1x128xf32>
    tpu.vector_store %arg8[%c3_181, %c7_182, %c0_183], %191 {strides = array<i32>} : memref<8x8x128xf32, #tpu.memory_space<vmem>>, vector<1x1x128xf32>,
    %c0_184 = arith.constant 0 : index
    %c4_185 = arith.constant 4 : index
    %192 = memref.load %arg0[%c0_184, %c4_185] : memref<4x8xi32, #tpu.memory_space<smem>>
    %193 = arith.index_cast %192 : i32 to index
    %c0_186 = arith.constant 0 : index
    %194 = vector.load %arg2[%193, %c0_186] : memref<50x128xf32, #tpu.memory_space<vmem>>, vector<1x128xf32>
    %c4_187 = arith.constant 4 : index
    %c0_188 = arith.constant 0 : index
    %c0_189 = arith.constant 0 : index
    %195 = vector.load %arg8[%c4_187, %c0_188, %c0_189] : memref<8x8x128xf32, #tpu.memory_space<vmem>>, vector<1x1x128xf32>
    %196 = vector.shape_cast %195 : vector<1x1x128xf32> to vector<1x128xf32>
    %197 = vector.shape_cast %194 : vector<1x128xf32> to vector<1x1x128xf32>
    tpu.vector_store %arg8[%c4_187, %c0_188, %c0_189], %197 {strides = array<i32>} : memref<8x8x128xf32, #tpu.memory_space<vmem>>, vector<1x1x128xf32>,
    %c0_190 = arith.constant 0 : index
    %c4_191 = arith.constant 4 : index
    %198 = memref.load %arg1[%c0_190, %c4_191] : memref<4x8xi32, #tpu.memory_space<smem>>
    %199 = arith.index_cast %198 : i32 to index
    %c0_192 = arith.constant 0 : index
    %200 = vector.load %arg2[%199, %c0_192] : memref<50x128xf32, #tpu.memory_space<vmem>>, vector<1x128xf32>
    %c4_193 = arith.constant 4 : index
    %c4_194 = arith.constant 4 : index
    %c0_195 = arith.constant 0 : index
    %201 = vector.load %arg8[%c4_193, %c4_194, %c0_195] : memref<8x8x128xf32, #tpu.memory_space<vmem>>, vector<1x1x128xf32>
    %202 = vector.shape_cast %201 : vector<1x1x128xf32> to vector<1x128xf32>
    %203 = vector.shape_cast %200 : vector<1x128xf32> to vector<1x1x128xf32>
    tpu.vector_store %arg8[%c4_193, %c4_194, %c0_195], %203 {strides = array<i32>} : memref<8x8x128xf32, #tpu.memory_space<vmem>>, vector<1x1x128xf32>,
    %c1_196 = arith.constant 1 : index
    %c4_197 = arith.constant 4 : index
    %204 = memref.load %arg0[%c1_196, %c4_197] : memref<4x8xi32, #tpu.memory_space<smem>>
    %205 = arith.index_cast %204 : i32 to index
    %c0_198 = arith.constant 0 : index
    %206 = vector.load %arg2[%205, %c0_198] : memref<50x128xf32, #tpu.memory_space<vmem>>, vector<1x128xf32>
    %c4_199 = arith.constant 4 : index
    %c1_200 = arith.constant 1 : index
    %c0_201 = arith.constant 0 : index
    %207 = vector.load %arg8[%c4_199, %c1_200, %c0_201] : memref<8x8x128xf32, #tpu.memory_space<vmem>>, vector<1x1x128xf32>
    %208 = vector.shape_cast %207 : vector<1x1x128xf32> to vector<1x128xf32>
    %209 = vector.shape_cast %206 : vector<1x128xf32> to vector<1x1x128xf32>
    tpu.vector_store %arg8[%c4_199, %c1_200, %c0_201], %209 {strides = array<i32>} : memref<8x8x128xf32, #tpu.memory_space<vmem>>, vector<1x1x128xf32>,
    %c1_202 = arith.constant 1 : index
    %c4_203 = arith.constant 4 : index
    %210 = memref.load %arg1[%c1_202, %c4_203] : memref<4x8xi32, #tpu.memory_space<smem>>
    %211 = arith.index_cast %210 : i32 to index
    %c0_204 = arith.constant 0 : index
    %212 = vector.load %arg2[%211, %c0_204] : memref<50x128xf32, #tpu.memory_space<vmem>>, vector<1x128xf32>
    %c4_205 = arith.constant 4 : index
    %c5_206 = arith.constant 5 : index
    %c0_207 = arith.constant 0 : index
    %213 = vector.load %arg8[%c4_205, %c5_206, %c0_207] : memref<8x8x128xf32, #tpu.memory_space<vmem>>, vector<1x1x128xf32>
    %214 = vector.shape_cast %213 : vector<1x1x128xf32> to vector<1x128xf32>
    %215 = vector.shape_cast %212 : vector<1x128xf32> to vector<1x1x128xf32>
    tpu.vector_store %arg8[%c4_205, %c5_206, %c0_207], %215 {strides = array<i32>} : memref<8x8x128xf32, #tpu.memory_space<vmem>>, vector<1x1x128xf32>,
    %c2_208 = arith.constant 2 : index
    %c4_209 = arith.constant 4 : index
    %216 = memref.load %arg0[%c2_208, %c4_209] : memref<4x8xi32, #tpu.memory_space<smem>>
    %217 = arith.index_cast %216 : i32 to index
    %c0_210 = arith.constant 0 : index
    %218 = vector.load %arg2[%217, %c0_210] : memref<50x128xf32, #tpu.memory_space<vmem>>, vector<1x128xf32>
    %c4_211 = arith.constant 4 : index
    %c2_212 = arith.constant 2 : index
    %c0_213 = arith.constant 0 : index
    %219 = vector.load %arg8[%c4_211, %c2_212, %c0_213] : memref<8x8x128xf32, #tpu.memory_space<vmem>>, vector<1x1x128xf32>
    %220 = vector.shape_cast %219 : vector<1x1x128xf32> to vector<1x128xf32>
    %221 = vector.shape_cast %218 : vector<1x128xf32> to vector<1x1x128xf32>
    tpu.vector_store %arg8[%c4_211, %c2_212, %c0_213], %221 {strides = array<i32>} : memref<8x8x128xf32, #tpu.memory_space<vmem>>, vector<1x1x128xf32>,
    %c2_214 = arith.constant 2 : index
    %c4_215 = arith.constant 4 : index
    %222 = memref.load %arg1[%c2_214, %c4_215] : memref<4x8xi32, #tpu.memory_space<smem>>
    %223 = arith.index_cast %222 : i32 to index
    %c0_216 = arith.constant 0 : index
    %224 = vector.load %arg2[%223, %c0_216] : memref<50x128xf32, #tpu.memory_space<vmem>>, vector<1x128xf32>
    %c4_217 = arith.constant 4 : index
    %c6_218 = arith.constant 6 : index
    %c0_219 = arith.constant 0 : index
    %225 = vector.load %arg8[%c4_217, %c6_218, %c0_219] : memref<8x8x128xf32, #tpu.memory_space<vmem>>, vector<1x1x128xf32>
    %226 = vector.shape_cast %225 : vector<1x1x128xf32> to vector<1x128xf32>
    %227 = vector.shape_cast %224 : vector<1x128xf32> to vector<1x1x128xf32>
    tpu.vector_store %arg8[%c4_217, %c6_218, %c0_219], %227 {strides = array<i32>} : memref<8x8x128xf32, #tpu.memory_space<vmem>>, vector<1x1x128xf32>,
    %c3_220 = arith.constant 3 : index
    %c4_221 = arith.constant 4 : index
    %228 = memref.load %arg0[%c3_220, %c4_221] : memref<4x8xi32, #tpu.memory_space<smem>>
    %229 = arith.index_cast %228 : i32 to index
    %c0_222 = arith.constant 0 : index
    %230 = vector.load %arg2[%229, %c0_222] : memref<50x128xf32, #tpu.memory_space<vmem>>, vector<1x128xf32>
    %c4_223 = arith.constant 4 : index
    %c3_224 = arith.constant 3 : index
    %c0_225 = arith.constant 0 : index
    %231 = vector.load %arg8[%c4_223, %c3_224, %c0_225] : memref<8x8x128xf32, #tpu.memory_space<vmem>>, vector<1x1x128xf32>
    %232 = vector.shape_cast %231 : vector<1x1x128xf32> to vector<1x128xf32>
    %233 = vector.shape_cast %230 : vector<1x128xf32> to vector<1x1x128xf32>
    tpu.vector_store %arg8[%c4_223, %c3_224, %c0_225], %233 {strides = array<i32>} : memref<8x8x128xf32, #tpu.memory_space<vmem>>, vector<1x1x128xf32>,
    %c3_226 = arith.constant 3 : index
    %c4_227 = arith.constant 4 : index
    %234 = memref.load %arg1[%c3_226, %c4_227] : memref<4x8xi32, #tpu.memory_space<smem>>
    %235 = arith.index_cast %234 : i32 to index
    %c0_228 = arith.constant 0 : index
    %236 = vector.load %arg2[%235, %c0_228] : memref<50x128xf32, #tpu.memory_space<vmem>>, vector<1x128xf32>
    %c4_229 = arith.constant 4 : index
    %c7_230 = arith.constant 7 : index
    %c0_231 = arith.constant 0 : index
    %237 = vector.load %arg8[%c4_229, %c7_230, %c0_231] : memref<8x8x128xf32, #tpu.memory_space<vmem>>, vector<1x1x128xf32>
    %238 = vector.shape_cast %237 : vector<1x1x128xf32> to vector<1x128xf32>
    %239 = vector.shape_cast %236 : vector<1x128xf32> to vector<1x1x128xf32>
    tpu.vector_store %arg8[%c4_229, %c7_230, %c0_231], %239 {strides = array<i32>} : memref<8x8x128xf32, #tpu.memory_space<vmem>>, vector<1x1x128xf32>,
    %c0_232 = arith.constant 0 : index
    %c5_233 = arith.constant 5 : index
    %240 = memref.load %arg0[%c0_232, %c5_233] : memref<4x8xi32, #tpu.memory_space<smem>>
    %241 = arith.index_cast %240 : i32 to index
    %c0_234 = arith.constant 0 : index
    %242 = vector.load %arg2[%241, %c0_234] : memref<50x128xf32, #tpu.memory_space<vmem>>, vector<1x128xf32>
    %c5_235 = arith.constant 5 : index
    %c0_236 = arith.constant 0 : index
    %c0_237 = arith.constant 0 : index
    %243 = vector.load %arg8[%c5_235, %c0_236, %c0_237] : memref<8x8x128xf32, #tpu.memory_space<vmem>>, vector<1x1x128xf32>
    %244 = vector.shape_cast %243 : vector<1x1x128xf32> to vector<1x128xf32>
    %245 = vector.shape_cast %242 : vector<1x128xf32> to vector<1x1x128xf32>
    tpu.vector_store %arg8[%c5_235, %c0_236, %c0_237], %245 {strides = array<i32>} : memref<8x8x128xf32, #tpu.memory_space<vmem>>, vector<1x1x128xf32>,
    %c0_238 = arith.constant 0 : index
    %c5_239 = arith.constant 5 : index
    %246 = memref.load %arg1[%c0_238, %c5_239] : memref<4x8xi32, #tpu.memory_space<smem>>
    %247 = arith.index_cast %246 : i32 to index
    %c0_240 = arith.constant 0 : index
    %248 = vector.load %arg2[%247, %c0_240] : memref<50x128xf32, #tpu.memory_space<vmem>>, vector<1x128xf32>
    %c5_241 = arith.constant 5 : index
    %c4_242 = arith.constant 4 : index
    %c0_243 = arith.constant 0 : index
    %249 = vector.load %arg8[%c5_241, %c4_242, %c0_243] : memref<8x8x128xf32, #tpu.memory_space<vmem>>, vector<1x1x128xf32>
    %250 = vector.shape_cast %249 : vector<1x1x128xf32> to vector<1x128xf32>
    %251 = vector.shape_cast %248 : vector<1x128xf32> to vector<1x1x128xf32>
    tpu.vector_store %arg8[%c5_241, %c4_242, %c0_243], %251 {strides = array<i32>} : memref<8x8x128xf32, #tpu.memory_space<vmem>>, vector<1x1x128xf32>,
    %c1_244 = arith.constant 1 : index
    %c5_245 = arith.constant 5 : index
    %252 = memref.load %arg0[%c1_244, %c5_245] : memref<4x8xi32, #tpu.memory_space<smem>>
    %253 = arith.index_cast %252 : i32 to index
    %c0_246 = arith.constant 0 : index
    %254 = vector.load %arg2[%253, %c0_246] : memref<50x128xf32, #tpu.memory_space<vmem>>, vector<1x128xf32>
    %c5_247 = arith.constant 5 : index
    %c1_248 = arith.constant 1 : index
    %c0_249 = arith.constant 0 : index
    %255 = vector.load %arg8[%c5_247, %c1_248, %c0_249] : memref<8x8x128xf32, #tpu.memory_space<vmem>>, vector<1x1x128xf32>
    %256 = vector.shape_cast %255 : vector<1x1x128xf32> to vector<1x128xf32>
    %257 = vector.shape_cast %254 : vector<1x128xf32> to vector<1x1x128xf32>
    tpu.vector_store %arg8[%c5_247, %c1_248, %c0_249], %257 {strides = array<i32>} : memref<8x8x128xf32, #tpu.memory_space<vmem>>, vector<1x1x128xf32>,
    %c1_250 = arith.constant 1 : index
    %c5_251 = arith.constant 5 : index
    %258 = memref.load %arg1[%c1_250, %c5_251] : memref<4x8xi32, #tpu.memory_space<smem>>
    %259 = arith.index_cast %258 : i32 to index
    %c0_252 = arith.constant 0 : index
    %260 = vector.load %arg2[%259, %c0_252] : memref<50x128xf32, #tpu.memory_space<vmem>>, vector<1x128xf32>
    %c5_253 = arith.constant 5 : index
    %c5_254 = arith.constant 5 : index
    %c0_255 = arith.constant 0 : index
    %261 = vector.load %arg8[%c5_253, %c5_254, %c0_255] : memref<8x8x128xf32, #tpu.memory_space<vmem>>, vector<1x1x128xf32>
    %262 = vector.shape_cast %261 : vector<1x1x128xf32> to vector<1x128xf32>
    %263 = vector.shape_cast %260 : vector<1x128xf32> to vector<1x1x128xf32>
    tpu.vector_store %arg8[%c5_253, %c5_254, %c0_255], %263 {strides = array<i32>} : memref<8x8x128xf32, #tpu.memory_space<vmem>>, vector<1x1x128xf32>,
    %c2_256 = arith.constant 2 : index
    %c5_257 = arith.constant 5 : index
    %264 = memref.load %arg0[%c2_256, %c5_257] : memref<4x8xi32, #tpu.memory_space<smem>>
    %265 = arith.index_cast %264 : i32 to index
    %c0_258 = arith.constant 0 : index
    %266 = vector.load %arg2[%265, %c0_258] : memref<50x128xf32, #tpu.memory_space<vmem>>, vector<1x128xf32>
    %c5_259 = arith.constant 5 : index
    %c2_260 = arith.constant 2 : index
    %c0_261 = arith.constant 0 : index
    %267 = vector.load %arg8[%c5_259, %c2_260, %c0_261] : memref<8x8x128xf32, #tpu.memory_space<vmem>>, vector<1x1x128xf32>
    %268 = vector.shape_cast %267 : vector<1x1x128xf32> to vector<1x128xf32>
    %269 = vector.shape_cast %266 : vector<1x128xf32> to vector<1x1x128xf32>
    tpu.vector_store %arg8[%c5_259, %c2_260, %c0_261], %269 {strides = array<i32>} : memref<8x8x128xf32, #tpu.memory_space<vmem>>, vector<1x1x128xf32>,
    %c2_262 = arith.constant 2 : index
    %c5_263 = arith.constant 5 : index
    %270 = memref.load %arg1[%c2_262, %c5_263] : memref<4x8xi32, #tpu.memory_space<smem>>
    %271 = arith.index_cast %270 : i32 to index
    %c0_264 = arith.constant 0 : index
    %272 = vector.load %arg2[%271, %c0_264] : memref<50x128xf32, #tpu.memory_space<vmem>>, vector<1x128xf32>
    %c5_265 = arith.constant 5 : index
    %c6_266 = arith.constant 6 : index
    %c0_267 = arith.constant 0 : index
    %273 = vector.load %arg8[%c5_265, %c6_266, %c0_267] : memref<8x8x128xf32, #tpu.memory_space<vmem>>, vector<1x1x128xf32>
    %274 = vector.shape_cast %273 : vector<1x1x128xf32> to vector<1x128xf32>
    %275 = vector.shape_cast %272 : vector<1x128xf32> to vector<1x1x128xf32>
    tpu.vector_store %arg8[%c5_265, %c6_266, %c0_267], %275 {strides = array<i32>} : memref<8x8x128xf32, #tpu.memory_space<vmem>>, vector<1x1x128xf32>,
    %c3_268 = arith.constant 3 : index
    %c5_269 = arith.constant 5 : index
    %276 = memref.load %arg0[%c3_268, %c5_269] : memref<4x8xi32, #tpu.memory_space<smem>>
    %277 = arith.index_cast %276 : i32 to index
    %c0_270 = arith.constant 0 : index
    %278 = vector.load %arg2[%277, %c0_270] : memref<50x128xf32, #tpu.memory_space<vmem>>, vector<1x128xf32>
    %c5_271 = arith.constant 5 : index
    %c3_272 = arith.constant 3 : index
    %c0_273 = arith.constant 0 : index
    %279 = vector.load %arg8[%c5_271, %c3_272, %c0_273] : memref<8x8x128xf32, #tpu.memory_space<vmem>>, vector<1x1x128xf32>
    %280 = vector.shape_cast %279 : vector<1x1x128xf32> to vector<1x128xf32>
    %281 = vector.shape_cast %278 : vector<1x128xf32> to vector<1x1x128xf32>
    tpu.vector_store %arg8[%c5_271, %c3_272, %c0_273], %281 {strides = array<i32>} : memref<8x8x128xf32, #tpu.memory_space<vmem>>, vector<1x1x128xf32>,
    %c3_274 = arith.constant 3 : index
    %c5_275 = arith.constant 5 : index
    %282 = memref.load %arg1[%c3_274, %c5_275] : memref<4x8xi32, #tpu.memory_space<smem>>
    %283 = arith.index_cast %282 : i32 to index
    %c0_276 = arith.constant 0 : index
    %284 = vector.load %arg2[%283, %c0_276] : memref<50x128xf32, #tpu.memory_space<vmem>>, vector<1x128xf32>
    %c5_277 = arith.constant 5 : index
    %c7_278 = arith.constant 7 : index
    %c0_279 = arith.constant 0 : index
    %285 = vector.load %arg8[%c5_277, %c7_278, %c0_279] : memref<8x8x128xf32, #tpu.memory_space<vmem>>, vector<1x1x128xf32>
    %286 = vector.shape_cast %285 : vector<1x1x128xf32> to vector<1x128xf32>
    %287 = vector.shape_cast %284 : vector<1x128xf32> to vector<1x1x128xf32>
    tpu.vector_store %arg8[%c5_277, %c7_278, %c0_279], %287 {strides = array<i32>} : memref<8x8x128xf32, #tpu.memory_space<vmem>>, vector<1x1x128xf32>,
    %c0_280 = arith.constant 0 : index
    %c6_281 = arith.constant 6 : index
    %288 = memref.load %arg0[%c0_280, %c6_281] : memref<4x8xi32, #tpu.memory_space<smem>>
    %289 = arith.index_cast %288 : i32 to index
    %c0_282 = arith.constant 0 : index
    %290 = vector.load %arg2[%289, %c0_282] : memref<50x128xf32, #tpu.memory_space<vmem>>, vector<1x128xf32>
    %c6_283 = arith.constant 6 : index
    %c0_284 = arith.constant 0 : index
    %c0_285 = arith.constant 0 : index
    %291 = vector.load %arg8[%c6_283, %c0_284, %c0_285] : memref<8x8x128xf32, #tpu.memory_space<vmem>>, vector<1x1x128xf32>
    %292 = vector.shape_cast %291 : vector<1x1x128xf32> to vector<1x128xf32>
    %293 = vector.shape_cast %290 : vector<1x128xf32> to vector<1x1x128xf32>
    tpu.vector_store %arg8[%c6_283, %c0_284, %c0_285], %293 {strides = array<i32>} : memref<8x8x128xf32, #tpu.memory_space<vmem>>, vector<1x1x128xf32>,
    %c0_286 = arith.constant 0 : index
    %c6_287 = arith.constant 6 : index
    %294 = memref.load %arg1[%c0_286, %c6_287] : memref<4x8xi32, #tpu.memory_space<smem>>
    %295 = arith.index_cast %294 : i32 to index
    %c0_288 = arith.constant 0 : index
    %296 = vector.load %arg2[%295, %c0_288] : memref<50x128xf32, #tpu.memory_space<vmem>>, vector<1x128xf32>
    %c6_289 = arith.constant 6 : index
    %c4_290 = arith.constant 4 : index
    %c0_291 = arith.constant 0 : index
    %297 = vector.load %arg8[%c6_289, %c4_290, %c0_291] : memref<8x8x128xf32, #tpu.memory_space<vmem>>, vector<1x1x128xf32>
    %298 = vector.shape_cast %297 : vector<1x1x128xf32> to vector<1x128xf32>
    %299 = vector.shape_cast %296 : vector<1x128xf32> to vector<1x1x128xf32>
    tpu.vector_store %arg8[%c6_289, %c4_290, %c0_291], %299 {strides = array<i32>} : memref<8x8x128xf32, #tpu.memory_space<vmem>>, vector<1x1x128xf32>,
    %c1_292 = arith.constant 1 : index
    %c6_293 = arith.constant 6 : index
    %300 = memref.load %arg0[%c1_292, %c6_293] : memref<4x8xi32, #tpu.memory_space<smem>>
    %301 = arith.index_cast %300 : i32 to index
    %c0_294 = arith.constant 0 : index
    %302 = vector.load %arg2[%301, %c0_294] : memref<50x128xf32, #tpu.memory_space<vmem>>, vector<1x128xf32>
    %c6_295 = arith.constant 6 : index
    %c1_296 = arith.constant 1 : index
    %c0_297 = arith.constant 0 : index
    %303 = vector.load %arg8[%c6_295, %c1_296, %c0_297] : memref<8x8x128xf32, #tpu.memory_space<vmem>>, vector<1x1x128xf32>
    %304 = vector.shape_cast %303 : vector<1x1x128xf32> to vector<1x128xf32>
    %305 = vector.shape_cast %302 : vector<1x128xf32> to vector<1x1x128xf32>
    tpu.vector_store %arg8[%c6_295, %c1_296, %c0_297], %305 {strides = array<i32>} : memref<8x8x128xf32, #tpu.memory_space<vmem>>, vector<1x1x128xf32>,
    %c1_298 = arith.constant 1 : index
    %c6_299 = arith.constant 6 : index
    %306 = memref.load %arg1[%c1_298, %c6_299] : memref<4x8xi32, #tpu.memory_space<smem>>
    %307 = arith.index_cast %306 : i32 to index
    %c0_300 = arith.constant 0 : index
    %308 = vector.load %arg2[%307, %c0_300] : memref<50x128xf32, #tpu.memory_space<vmem>>, vector<1x128xf32>
    %c6_301 = arith.constant 6 : index
    %c5_302 = arith.constant 5 : index
    %c0_303 = arith.constant 0 : index
    %309 = vector.load %arg8[%c6_301, %c5_302, %c0_303] : memref<8x8x128xf32, #tpu.memory_space<vmem>>, vector<1x1x128xf32>
    %310 = vector.shape_cast %309 : vector<1x1x128xf32> to vector<1x128xf32>
    %311 = vector.shape_cast %308 : vector<1x128xf32> to vector<1x1x128xf32>
    tpu.vector_store %arg8[%c6_301, %c5_302, %c0_303], %311 {strides = array<i32>} : memref<8x8x128xf32, #tpu.memory_space<vmem>>, vector<1x1x128xf32>,
    %c2_304 = arith.constant 2 : index
    %c6_305 = arith.constant 6 : index
    %312 = memref.load %arg0[%c2_304, %c6_305] : memref<4x8xi32, #tpu.memory_space<smem>>
    %313 = arith.index_cast %312 : i32 to index
    %c0_306 = arith.constant 0 : index
    %314 = vector.load %arg2[%313, %c0_306] : memref<50x128xf32, #tpu.memory_space<vmem>>, vector<1x128xf32>
    %c6_307 = arith.constant 6 : index
    %c2_308 = arith.constant 2 : index
    %c0_309 = arith.constant 0 : index
    %315 = vector.load %arg8[%c6_307, %c2_308, %c0_309] : memref<8x8x128xf32, #tpu.memory_space<vmem>>, vector<1x1x128xf32>
    %316 = vector.shape_cast %315 : vector<1x1x128xf32> to vector<1x128xf32>
    %317 = vector.shape_cast %314 : vector<1x128xf32> to vector<1x1x128xf32>
    tpu.vector_store %arg8[%c6_307, %c2_308, %c0_309], %317 {strides = array<i32>} : memref<8x8x128xf32, #tpu.memory_space<vmem>>, vector<1x1x128xf32>,
    %c2_310 = arith.constant 2 : index
    %c6_311 = arith.constant 6 : index
    %318 = memref.load %arg1[%c2_310, %c6_311] : memref<4x8xi32, #tpu.memory_space<smem>>
    %319 = arith.index_cast %318 : i32 to index
    %c0_312 = arith.constant 0 : index
    %320 = vector.load %arg2[%319, %c0_312] : memref<50x128xf32, #tpu.memory_space<vmem>>, vector<1x128xf32>
    %c6_313 = arith.constant 6 : index
    %c6_314 = arith.constant 6 : index
    %c0_315 = arith.constant 0 : index
    %321 = vector.load %arg8[%c6_313, %c6_314, %c0_315] : memref<8x8x128xf32, #tpu.memory_space<vmem>>, vector<1x1x128xf32>
    %322 = vector.shape_cast %321 : vector<1x1x128xf32> to vector<1x128xf32>
    %323 = vector.shape_cast %320 : vector<1x128xf32> to vector<1x1x128xf32>
    tpu.vector_store %arg8[%c6_313, %c6_314, %c0_315], %323 {strides = array<i32>} : memref<8x8x128xf32, #tpu.memory_space<vmem>>, vector<1x1x128xf32>,
    %c3_316 = arith.constant 3 : index
    %c6_317 = arith.constant 6 : index
    %324 = memref.load %arg0[%c3_316, %c6_317] : memref<4x8xi32, #tpu.memory_space<smem>>
    %325 = arith.index_cast %324 : i32 to index
    %c0_318 = arith.constant 0 : index
    %326 = vector.load %arg2[%325, %c0_318] : memref<50x128xf32, #tpu.memory_space<vmem>>, vector<1x128xf32>
    %c6_319 = arith.constant 6 : index
    %c3_320 = arith.constant 3 : index
    %c0_321 = arith.constant 0 : index
    %327 = vector.load %arg8[%c6_319, %c3_320, %c0_321] : memref<8x8x128xf32, #tpu.memory_space<vmem>>, vector<1x1x128xf32>
    %328 = vector.shape_cast %327 : vector<1x1x128xf32> to vector<1x128xf32>
    %329 = vector.shape_cast %326 : vector<1x128xf32> to vector<1x1x128xf32>
    tpu.vector_store %arg8[%c6_319, %c3_320, %c0_321], %329 {strides = array<i32>} : memref<8x8x128xf32, #tpu.memory_space<vmem>>, vector<1x1x128xf32>,
    %c3_322 = arith.constant 3 : index
    %c6_323 = arith.constant 6 : index
    %330 = memref.load %arg1[%c3_322, %c6_323] : memref<4x8xi32, #tpu.memory_space<smem>>
    %331 = arith.index_cast %330 : i32 to index
    %c0_324 = arith.constant 0 : index
    %332 = vector.load %arg2[%331, %c0_324] : memref<50x128xf32, #tpu.memory_space<vmem>>, vector<1x128xf32>
    %c6_325 = arith.constant 6 : index
    %c7_326 = arith.constant 7 : index
    %c0_327 = arith.constant 0 : index
    %333 = vector.load %arg8[%c6_325, %c7_326, %c0_327] : memref<8x8x128xf32, #tpu.memory_space<vmem>>, vector<1x1x128xf32>
    %334 = vector.shape_cast %333 : vector<1x1x128xf32> to vector<1x128xf32>
    %335 = vector.shape_cast %332 : vector<1x128xf32> to vector<1x1x128xf32>
    tpu.vector_store %arg8[%c6_325, %c7_326, %c0_327], %335 {strides = array<i32>} : memref<8x8x128xf32, #tpu.memory_space<vmem>>, vector<1x1x128xf32>,
    %c0_328 = arith.constant 0 : index
    %c7_329 = arith.constant 7 : index
    %336 = memref.load %arg0[%c0_328, %c7_329] : memref<4x8xi32, #tpu.memory_space<smem>>
    %337 = arith.index_cast %336 : i32 to index
    %c0_330 = arith.constant 0 : index
    %338 = vector.load %arg2[%337, %c0_330] : memref<50x128xf32, #tpu.memory_space<vmem>>, vector<1x128xf32>
    %c7_331 = arith.constant 7 : index
    %c0_332 = arith.constant 0 : index
    %c0_333 = arith.constant 0 : index
    %339 = vector.load %arg8[%c7_331, %c0_332, %c0_333] : memref<8x8x128xf32, #tpu.memory_space<vmem>>, vector<1x1x128xf32>
    %340 = vector.shape_cast %339 : vector<1x1x128xf32> to vector<1x128xf32>
    %341 = vector.shape_cast %338 : vector<1x128xf32> to vector<1x1x128xf32>
    tpu.vector_store %arg8[%c7_331, %c0_332, %c0_333], %341 {strides = array<i32>} : memref<8x8x128xf32, #tpu.memory_space<vmem>>, vector<1x1x128xf32>,
    %c0_334 = arith.constant 0 : index
    %c7_335 = arith.constant 7 : index
    %342 = memref.load %arg1[%c0_334, %c7_335] : memref<4x8xi32, #tpu.memory_space<smem>>
    %343 = arith.index_cast %342 : i32 to index
    %c0_336 = arith.constant 0 : index
    %344 = vector.load %arg2[%343, %c0_336] : memref<50x128xf32, #tpu.memory_space<vmem>>, vector<1x128xf32>
    %c7_337 = arith.constant 7 : index
    %c4_338 = arith.constant 4 : index
    %c0_339 = arith.constant 0 : index
    %345 = vector.load %arg8[%c7_337, %c4_338, %c0_339] : memref<8x8x128xf32, #tpu.memory_space<vmem>>, vector<1x1x128xf32>
    %346 = vector.shape_cast %345 : vector<1x1x128xf32> to vector<1x128xf32>
    %347 = vector.shape_cast %344 : vector<1x128xf32> to vector<1x1x128xf32>
    tpu.vector_store %arg8[%c7_337, %c4_338, %c0_339], %347 {strides = array<i32>} : memref<8x8x128xf32, #tpu.memory_space<vmem>>, vector<1x1x128xf32>,
    %c1_340 = arith.constant 1 : index
    %c7_341 = arith.constant 7 : index
    %348 = memref.load %arg0[%c1_340, %c7_341] : memref<4x8xi32, #tpu.memory_space<smem>>
    %349 = arith.index_cast %348 : i32 to index
    %c0_342 = arith.constant 0 : index
    %350 = vector.load %arg2[%349, %c0_342] : memref<50x128xf32, #tpu.memory_space<vmem>>, vector<1x128xf32>
    %c7_343 = arith.constant 7 : index
    %c1_344 = arith.constant 1 : index
    %c0_345 = arith.constant 0 : index
    %351 = vector.load %arg8[%c7_343, %c1_344, %c0_345] : memref<8x8x128xf32, #tpu.memory_space<vmem>>, vector<1x1x128xf32>
    %352 = vector.shape_cast %351 : vector<1x1x128xf32> to vector<1x128xf32>
    %353 = vector.shape_cast %350 : vector<1x128xf32> to vector<1x1x128xf32>
    tpu.vector_store %arg8[%c7_343, %c1_344, %c0_345], %353 {strides = array<i32>} : memref<8x8x128xf32, #tpu.memory_space<vmem>>, vector<1x1x128xf32>,
    %c1_346 = arith.constant 1 : index
    %c7_347 = arith.constant 7 : index
    %354 = memref.load %arg1[%c1_346, %c7_347] : memref<4x8xi32, #tpu.memory_space<smem>>
    %355 = arith.index_cast %354 : i32 to index
    %c0_348 = arith.constant 0 : index
    %356 = vector.load %arg2[%355, %c0_348] : memref<50x128xf32, #tpu.memory_space<vmem>>, vector<1x128xf32>
    %c7_349 = arith.constant 7 : index
    %c5_350 = arith.constant 5 : index
    %c0_351 = arith.constant 0 : index
    %357 = vector.load %arg8[%c7_349, %c5_350, %c0_351] : memref<8x8x128xf32, #tpu.memory_space<vmem>>, vector<1x1x128xf32>
    %358 = vector.shape_cast %357 : vector<1x1x128xf32> to vector<1x128xf32>
    %359 = vector.shape_cast %356 : vector<1x128xf32> to vector<1x1x128xf32>
    tpu.vector_store %arg8[%c7_349, %c5_350, %c0_351], %359 {strides = array<i32>} : memref<8x8x128xf32, #tpu.memory_space<vmem>>, vector<1x1x128xf32>,
    %c2_352 = arith.constant 2 : index
    %c7_353 = arith.constant 7 : index
    %360 = memref.load %arg0[%c2_352, %c7_353] : memref<4x8xi32, #tpu.memory_space<smem>>
    %361 = arith.index_cast %360 : i32 to index
    %c0_354 = arith.constant 0 : index
    %362 = vector.load %arg2[%361, %c0_354] : memref<50x128xf32, #tpu.memory_space<vmem>>, vector<1x128xf32>
    %c7_355 = arith.constant 7 : index
    %c2_356 = arith.constant 2 : index
    %c0_357 = arith.constant 0 : index
    %363 = vector.load %arg8[%c7_355, %c2_356, %c0_357] : memref<8x8x128xf32, #tpu.memory_space<vmem>>, vector<1x1x128xf32>
    %364 = vector.shape_cast %363 : vector<1x1x128xf32> to vector<1x128xf32>
    %365 = vector.shape_cast %362 : vector<1x128xf32> to vector<1x1x128xf32>
    tpu.vector_store %arg8[%c7_355, %c2_356, %c0_357], %365 {strides = array<i32>} : memref<8x8x128xf32, #tpu.memory_space<vmem>>, vector<1x1x128xf32>,
    %c2_358 = arith.constant 2 : index
    %c7_359 = arith.constant 7 : index
    %366 = memref.load %arg1[%c2_358, %c7_359] : memref<4x8xi32, #tpu.memory_space<smem>>
    %367 = arith.index_cast %366 : i32 to index
    %c0_360 = arith.constant 0 : index
    %368 = vector.load %arg2[%367, %c0_360] : memref<50x128xf32, #tpu.memory_space<vmem>>, vector<1x128xf32>
    %c7_361 = arith.constant 7 : index
    %c6_362 = arith.constant 6 : index
    %c0_363 = arith.constant 0 : index
    %369 = vector.load %arg8[%c7_361, %c6_362, %c0_363] : memref<8x8x128xf32, #tpu.memory_space<vmem>>, vector<1x1x128xf32>
    %370 = vector.shape_cast %369 : vector<1x1x128xf32> to vector<1x128xf32>
    %371 = vector.shape_cast %368 : vector<1x128xf32> to vector<1x1x128xf32>
    tpu.vector_store %arg8[%c7_361, %c6_362, %c0_363], %371 {strides = array<i32>} : memref<8x8x128xf32, #tpu.memory_space<vmem>>, vector<1x1x128xf32>,
    %c3_364 = arith.constant 3 : index
    %c7_365 = arith.constant 7 : index
    %372 = memref.load %arg0[%c3_364, %c7_365] : memref<4x8xi32, #tpu.memory_space<smem>>
    %373 = arith.index_cast %372 : i32 to index
    %c0_366 = arith.constant 0 : index
    %374 = vector.load %arg2[%373, %c0_366] : memref<50x128xf32, #tpu.memory_space<vmem>>, vector<1x128xf32>
    %c7_367 = arith.constant 7 : index
    %c3_368 = arith.constant 3 : index
    %c0_369 = arith.constant 0 : index
    %375 = vector.load %arg8[%c7_367, %c3_368, %c0_369] : memref<8x8x128xf32, #tpu.memory_space<vmem>>, vector<1x1x128xf32>
    %376 = vector.shape_cast %375 : vector<1x1x128xf32> to vector<1x128xf32>
    %377 = vector.shape_cast %374 : vector<1x128xf32> to vector<1x1x128xf32>
    tpu.vector_store %arg8[%c7_367, %c3_368, %c0_369], %377 {strides = array<i32>} : memref<8x8x128xf32, #tpu.memory_space<vmem>>, vector<1x1x128xf32>,
    %c3_370 = arith.constant 3 : index
    %c7_371 = arith.constant 7 : index
    %378 = memref.load %arg1[%c3_370, %c7_371] : memref<4x8xi32, #tpu.memory_space<smem>>
    %379 = arith.index_cast %378 : i32 to index
    %c0_372 = arith.constant 0 : index
    %380 = vector.load %arg2[%379, %c0_372] : memref<50x128xf32, #tpu.memory_space<vmem>>, vector<1x128xf32>
    %c7_373 = arith.constant 7 : index
    %c7_374 = arith.constant 7 : index
    %c0_375 = arith.constant 0 : index
    %381 = vector.load %arg8[%c7_373, %c7_374, %c0_375] : memref<8x8x128xf32, #tpu.memory_space<vmem>>, vector<1x1x128xf32>
    %382 = vector.shape_cast %381 : vector<1x1x128xf32> to vector<1x128xf32>
    %383 = vector.shape_cast %380 : vector<1x128xf32> to vector<1x1x128xf32>
    tpu.vector_store %arg8[%c7_373, %c7_374, %c0_375], %383 {strides = array<i32>} : memref<8x8x128xf32, #tpu.memory_space<vmem>>, vector<1x1x128xf32>,
    %c0_376 = arith.constant 0 : index
    %c0_377 = arith.constant 0 : index
    %384 = vector.load %arg3[%c0_376, %c0_377] : memref<32x128xf32, #tpu.memory_space<vmem>>, vector<32x128xf32>
    %c0_378 = arith.constant 0 : index
    %c0_379 = arith.constant 0 : index
    %385 = vector.load %arg4[%c0_378, %c0_379] : memref<1x32xf32, #tpu.memory_space<vmem>>, vector<1x32xf32>
    %386 = vector.shape_cast %385 : vector<1x32xf32> to vector<1x32xf32>
    %387 = vector.broadcast %386 : vector<1x32xf32> to vector<8x32xf32>
    %cst = arith.constant 0.000000e+00 : f32
    %388 = vector.broadcast %cst : f32 to vector<8x32xf32>
    %c0_i32 = arith.constant 0 : i32
    %389 = arith.index_cast %c0_i32 : i32 to index
    %c0_380 = arith.constant 0 : index
    %c0_381 = arith.constant 0 : index
    %390 = vector.load %arg8[%389, %c0_380, %c0_381] : memref<8x8x128xf32, #tpu.memory_space<vmem>>, vector<1x8x128xf32>
    %391 = vector.shape_cast %390 : vector<1x8x128xf32> to vector<8x128xf32>
    %cst_382 = arith.constant dense<0.000000e+00> : vector<8x128xf32>
    %392 = tpu.matmul %388, %384, %cst_382 {dimension_numbers = #tpu.dot_dimension_numbers<[1], [0], [0], [1], [0, 0, 1, 1], [], []>} : vector<8x32xf32>, vector<32x128xf32>, vector<8x128xf32> -> vector<8x128xf32>
    %393 = vector.extract_strided_slice %391 {offsets = [0, 0], sizes = [8, 64], strides = [1, 1]} : vector<8x128xf32> to vector<8x64xf32>
    %394 = vector.extract_strided_slice %392 {offsets = [0, 0], sizes = [8, 64], strides = [1, 1]} : vector<8x128xf32> to vector<8x64xf32>
    %395 = arith.addf %393, %394 : vector<8x64xf32>
    %396 = arith.negf %395 : vector<8x64xf32>
    %397 = math.exp %396 : vector<8x64xf32>
    %cst_383 = arith.constant 1.000000e+00 : f32
    %398 = vector.broadcast %cst_383 : f32 to vector<8x64xf32>
    %399 = arith.addf %398, %397 : vector<8x64xf32>
    %400 = arith.divf %398, %399 : vector<8x64xf32>
    %401 = vector.extract_strided_slice %400 {offsets = [0, 0], sizes = [8, 32], strides = [1, 1]} : vector<8x64xf32> to vector<8x32xf32>
    %402 = vector.extract_strided_slice %400 {offsets = [0, 32], sizes = [8, 32], strides = [1, 1]} : vector<8x64xf32> to vector<8x32xf32>
    %403 = vector.extract_strided_slice %391 {offsets = [0, 64], sizes = [8, 32], strides = [1, 1]} : vector<8x128xf32> to vector<8x32xf32>
    %404 = vector.extract_strided_slice %392 {offsets = [0, 64], sizes = [8, 32], strides = [1, 1]} : vector<8x128xf32> to vector<8x32xf32>
    %405 = arith.addf %404, %387 : vector<8x32xf32>
    %406 = arith.mulf %401, %405 : vector<8x32xf32>
    %407 = arith.addf %403, %406 : vector<8x32xf32>
    %408 = math.tanh %407 : vector<8x32xf32>
    %409 = arith.subf %388, %408 : vector<8x32xf32>
    %410 = arith.mulf %402, %409 : vector<8x32xf32>
    %411 = arith.addf %408, %410 : vector<8x32xf32>
    %c1_i32 = arith.constant 1 : i32
    %412 = arith.index_cast %c1_i32 : i32 to index
    %c0_384 = arith.constant 0 : index
    %c0_385 = arith.constant 0 : index
    %413 = vector.load %arg8[%412, %c0_384, %c0_385] : memref<8x8x128xf32, #tpu.memory_space<vmem>>, vector<1x8x128xf32>
    %414 = vector.shape_cast %413 : vector<1x8x128xf32> to vector<8x128xf32>
    %cst_386 = arith.constant dense<0.000000e+00> : vector<8x128xf32>
    %415 = tpu.matmul %411, %384, %cst_386 {dimension_numbers = #tpu.dot_dimension_numbers<[1], [0], [0], [1], [0, 0, 1, 1], [], []>} : vector<8x32xf32>, vector<32x128xf32>, vector<8x128xf32> -> vector<8x128xf32>
    %416 = vector.extract_strided_slice %414 {offsets = [0, 0], sizes = [8, 64], strides = [1, 1]} : vector<8x128xf32> to vector<8x64xf32>
    %417 = vector.extract_strided_slice %415 {offsets = [0, 0], sizes = [8, 64], strides = [1, 1]} : vector<8x128xf32> to vector<8x64xf32>
    %418 = arith.addf %416, %417 : vector<8x64xf32>
    %419 = arith.negf %418 : vector<8x64xf32>
    %420 = math.exp %419 : vector<8x64xf32>
    %cst_387 = arith.constant 1.000000e+00 : f32
    %421 = vector.broadcast %cst_387 : f32 to vector<8x64xf32>
    %422 = arith.addf %421, %420 : vector<8x64xf32>
    %423 = arith.divf %421, %422 : vector<8x64xf32>
    %424 = vector.extract_strided_slice %423 {offsets = [0, 0], sizes = [8, 32], strides = [1, 1]} : vector<8x64xf32> to vector<8x32xf32>
    %425 = vector.extract_strided_slice %423 {offsets = [0, 32], sizes = [8, 32], strides = [1, 1]} : vector<8x64xf32> to vector<8x32xf32>
    %426 = vector.extract_strided_slice %414 {offsets = [0, 64], sizes = [8, 32], strides = [1, 1]} : vector<8x128xf32> to vector<8x32xf32>
    %427 = vector.extract_strided_slice %415 {offsets = [0, 64], sizes = [8, 32], strides = [1, 1]} : vector<8x128xf32> to vector<8x32xf32>
    %428 = arith.addf %427, %387 : vector<8x32xf32>
    %429 = arith.mulf %424, %428 : vector<8x32xf32>
    %430 = arith.addf %426, %429 : vector<8x32xf32>
    %431 = math.tanh %430 : vector<8x32xf32>
    %432 = arith.subf %411, %431 : vector<8x32xf32>
    %433 = arith.mulf %425, %432 : vector<8x32xf32>
    %434 = arith.addf %431, %433 : vector<8x32xf32>
    %c2_i32 = arith.constant 2 : i32
    %435 = arith.index_cast %c2_i32 : i32 to index
    %c0_388 = arith.constant 0 : index
    %c0_389 = arith.constant 0 : index
    %436 = vector.load %arg8[%435, %c0_388, %c0_389] : memref<8x8x128xf32, #tpu.memory_space<vmem>>, vector<1x8x128xf32>
    %437 = vector.shape_cast %436 : vector<1x8x128xf32> to vector<8x128xf32>
    %cst_390 = arith.constant dense<0.000000e+00> : vector<8x128xf32>
    %438 = tpu.matmul %434, %384, %cst_390 {dimension_numbers = #tpu.dot_dimension_numbers<[1], [0], [0], [1], [0, 0, 1, 1], [], []>} : vector<8x32xf32>, vector<32x128xf32>, vector<8x128xf32> -> vector<8x128xf32>
    %439 = vector.extract_strided_slice %437 {offsets = [0, 0], sizes = [8, 64], strides = [1, 1]} : vector<8x128xf32> to vector<8x64xf32>
    %440 = vector.extract_strided_slice %438 {offsets = [0, 0], sizes = [8, 64], strides = [1, 1]} : vector<8x128xf32> to vector<8x64xf32>
    %441 = arith.addf %439, %440 : vector<8x64xf32>
    %442 = arith.negf %441 : vector<8x64xf32>
    %443 = math.exp %442 : vector<8x64xf32>
    %cst_391 = arith.constant 1.000000e+00 : f32
    %444 = vector.broadcast %cst_391 : f32 to vector<8x64xf32>
    %445 = arith.addf %444, %443 : vector<8x64xf32>
    %446 = arith.divf %444, %445 : vector<8x64xf32>
    %447 = vector.extract_strided_slice %446 {offsets = [0, 0], sizes = [8, 32], strides = [1, 1]} : vector<8x64xf32> to vector<8x32xf32>
    %448 = vector.extract_strided_slice %446 {offsets = [0, 32], sizes = [8, 32], strides = [1, 1]} : vector<8x64xf32> to vector<8x32xf32>
    %449 = vector.extract_strided_slice %437 {offsets = [0, 64], sizes = [8, 32], strides = [1, 1]} : vector<8x128xf32> to vector<8x32xf32>
    %450 = vector.extract_strided_slice %438 {offsets = [0, 64], sizes = [8, 32], strides = [1, 1]} : vector<8x128xf32> to vector<8x32xf32>
    %451 = arith.addf %450, %387 : vector<8x32xf32>
    %452 = arith.mulf %447, %451 : vector<8x32xf32>
    %453 = arith.addf %449, %452 : vector<8x32xf32>
    %454 = math.tanh %453 : vector<8x32xf32>
    %455 = arith.subf %434, %454 : vector<8x32xf32>
    %456 = arith.mulf %448, %455 : vector<8x32xf32>
    %457 = arith.addf %454, %456 : vector<8x32xf32>
    %c3_i32 = arith.constant 3 : i32
    %458 = arith.index_cast %c3_i32 : i32 to index
    %c0_392 = arith.constant 0 : index
    %c0_393 = arith.constant 0 : index
    %459 = vector.load %arg8[%458, %c0_392, %c0_393] : memref<8x8x128xf32, #tpu.memory_space<vmem>>, vector<1x8x128xf32>
    %460 = vector.shape_cast %459 : vector<1x8x128xf32> to vector<8x128xf32>
    %cst_394 = arith.constant dense<0.000000e+00> : vector<8x128xf32>
    %461 = tpu.matmul %457, %384, %cst_394 {dimension_numbers = #tpu.dot_dimension_numbers<[1], [0], [0], [1], [0, 0, 1, 1], [], []>} : vector<8x32xf32>, vector<32x128xf32>, vector<8x128xf32> -> vector<8x128xf32>
    %462 = vector.extract_strided_slice %460 {offsets = [0, 0], sizes = [8, 64], strides = [1, 1]} : vector<8x128xf32> to vector<8x64xf32>
    %463 = vector.extract_strided_slice %461 {offsets = [0, 0], sizes = [8, 64], strides = [1, 1]} : vector<8x128xf32> to vector<8x64xf32>
    %464 = arith.addf %462, %463 : vector<8x64xf32>
    %465 = arith.negf %464 : vector<8x64xf32>
    %466 = math.exp %465 : vector<8x64xf32>
    %cst_395 = arith.constant 1.000000e+00 : f32
    %467 = vector.broadcast %cst_395 : f32 to vector<8x64xf32>
    %468 = arith.addf %467, %466 : vector<8x64xf32>
    %469 = arith.divf %467, %468 : vector<8x64xf32>
    %470 = vector.extract_strided_slice %469 {offsets = [0, 0], sizes = [8, 32], strides = [1, 1]} : vector<8x64xf32> to vector<8x32xf32>
    %471 = vector.extract_strided_slice %469 {offsets = [0, 32], sizes = [8, 32], strides = [1, 1]} : vector<8x64xf32> to vector<8x32xf32>
    %472 = vector.extract_strided_slice %460 {offsets = [0, 64], sizes = [8, 32], strides = [1, 1]} : vector<8x128xf32> to vector<8x32xf32>
    %473 = vector.extract_strided_slice %461 {offsets = [0, 64], sizes = [8, 32], strides = [1, 1]} : vector<8x128xf32> to vector<8x32xf32>
    %474 = arith.addf %473, %387 : vector<8x32xf32>
    %475 = arith.mulf %470, %474 : vector<8x32xf32>
    %476 = arith.addf %472, %475 : vector<8x32xf32>
    %477 = math.tanh %476 : vector<8x32xf32>
    %478 = arith.subf %457, %477 : vector<8x32xf32>
    %479 = arith.mulf %471, %478 : vector<8x32xf32>
    %480 = arith.addf %477, %479 : vector<8x32xf32>
    %c4_i32 = arith.constant 4 : i32
    %481 = arith.index_cast %c4_i32 : i32 to index
    %c0_396 = arith.constant 0 : index
    %c0_397 = arith.constant 0 : index
    %482 = vector.load %arg8[%481, %c0_396, %c0_397] : memref<8x8x128xf32, #tpu.memory_space<vmem>>, vector<1x8x128xf32>
    %483 = vector.shape_cast %482 : vector<1x8x128xf32> to vector<8x128xf32>
    %cst_398 = arith.constant dense<0.000000e+00> : vector<8x128xf32>
    %484 = tpu.matmul %480, %384, %cst_398 {dimension_numbers = #tpu.dot_dimension_numbers<[1], [0], [0], [1], [0, 0, 1, 1], [], []>} : vector<8x32xf32>, vector<32x128xf32>, vector<8x128xf32> -> vector<8x128xf32>
    %485 = vector.extract_strided_slice %483 {offsets = [0, 0], sizes = [8, 64], strides = [1, 1]} : vector<8x128xf32> to vector<8x64xf32>
    %486 = vector.extract_strided_slice %484 {offsets = [0, 0], sizes = [8, 64], strides = [1, 1]} : vector<8x128xf32> to vector<8x64xf32>
    %487 = arith.addf %485, %486 : vector<8x64xf32>
    %488 = arith.negf %487 : vector<8x64xf32>
    %489 = math.exp %488 : vector<8x64xf32>
    %cst_399 = arith.constant 1.000000e+00 : f32
    %490 = vector.broadcast %cst_399 : f32 to vector<8x64xf32>
    %491 = arith.addf %490, %489 : vector<8x64xf32>
    %492 = arith.divf %490, %491 : vector<8x64xf32>
    %493 = vector.extract_strided_slice %492 {offsets = [0, 0], sizes = [8, 32], strides = [1, 1]} : vector<8x64xf32> to vector<8x32xf32>
    %494 = vector.extract_strided_slice %492 {offsets = [0, 32], sizes = [8, 32], strides = [1, 1]} : vector<8x64xf32> to vector<8x32xf32>
    %495 = vector.extract_strided_slice %483 {offsets = [0, 64], sizes = [8, 32], strides = [1, 1]} : vector<8x128xf32> to vector<8x32xf32>
    %496 = vector.extract_strided_slice %484 {offsets = [0, 64], sizes = [8, 32], strides = [1, 1]} : vector<8x128xf32> to vector<8x32xf32>
    %497 = arith.addf %496, %387 : vector<8x32xf32>
    %498 = arith.mulf %493, %497 : vector<8x32xf32>
    %499 = arith.addf %495, %498 : vector<8x32xf32>
    %500 = math.tanh %499 : vector<8x32xf32>
    %501 = arith.subf %480, %500 : vector<8x32xf32>
    %502 = arith.mulf %494, %501 : vector<8x32xf32>
    %503 = arith.addf %500, %502 : vector<8x32xf32>
    %c5_i32 = arith.constant 5 : i32
    %504 = arith.index_cast %c5_i32 : i32 to index
    %c0_400 = arith.constant 0 : index
    %c0_401 = arith.constant 0 : index
    %505 = vector.load %arg8[%504, %c0_400, %c0_401] : memref<8x8x128xf32, #tpu.memory_space<vmem>>, vector<1x8x128xf32>
    %506 = vector.shape_cast %505 : vector<1x8x128xf32> to vector<8x128xf32>
    %cst_402 = arith.constant dense<0.000000e+00> : vector<8x128xf32>
    %507 = tpu.matmul %503, %384, %cst_402 {dimension_numbers = #tpu.dot_dimension_numbers<[1], [0], [0], [1], [0, 0, 1, 1], [], []>} : vector<8x32xf32>, vector<32x128xf32>, vector<8x128xf32> -> vector<8x128xf32>
    %508 = vector.extract_strided_slice %506 {offsets = [0, 0], sizes = [8, 64], strides = [1, 1]} : vector<8x128xf32> to vector<8x64xf32>
    %509 = vector.extract_strided_slice %507 {offsets = [0, 0], sizes = [8, 64], strides = [1, 1]} : vector<8x128xf32> to vector<8x64xf32>
    %510 = arith.addf %508, %509 : vector<8x64xf32>
    %511 = arith.negf %510 : vector<8x64xf32>
    %512 = math.exp %511 : vector<8x64xf32>
    %cst_403 = arith.constant 1.000000e+00 : f32
    %513 = vector.broadcast %cst_403 : f32 to vector<8x64xf32>
    %514 = arith.addf %513, %512 : vector<8x64xf32>
    %515 = arith.divf %513, %514 : vector<8x64xf32>
    %516 = vector.extract_strided_slice %515 {offsets = [0, 0], sizes = [8, 32], strides = [1, 1]} : vector<8x64xf32> to vector<8x32xf32>
    %517 = vector.extract_strided_slice %515 {offsets = [0, 32], sizes = [8, 32], strides = [1, 1]} : vector<8x64xf32> to vector<8x32xf32>
    %518 = vector.extract_strided_slice %506 {offsets = [0, 64], sizes = [8, 32], strides = [1, 1]} : vector<8x128xf32> to vector<8x32xf32>
    %519 = vector.extract_strided_slice %507 {offsets = [0, 64], sizes = [8, 32], strides = [1, 1]} : vector<8x128xf32> to vector<8x32xf32>
    %520 = arith.addf %519, %387 : vector<8x32xf32>
    %521 = arith.mulf %516, %520 : vector<8x32xf32>
    %522 = arith.addf %518, %521 : vector<8x32xf32>
    %523 = math.tanh %522 : vector<8x32xf32>
    %524 = arith.subf %503, %523 : vector<8x32xf32>
    %525 = arith.mulf %517, %524 : vector<8x32xf32>
    %526 = arith.addf %523, %525 : vector<8x32xf32>
    %c6_i32 = arith.constant 6 : i32
    %527 = arith.index_cast %c6_i32 : i32 to index
    %c0_404 = arith.constant 0 : index
    %c0_405 = arith.constant 0 : index
    %528 = vector.load %arg8[%527, %c0_404, %c0_405] : memref<8x8x128xf32, #tpu.memory_space<vmem>>, vector<1x8x128xf32>
    %529 = vector.shape_cast %528 : vector<1x8x128xf32> to vector<8x128xf32>
    %cst_406 = arith.constant dense<0.000000e+00> : vector<8x128xf32>
    %530 = tpu.matmul %526, %384, %cst_406 {dimension_numbers = #tpu.dot_dimension_numbers<[1], [0], [0], [1], [0, 0, 1, 1], [], []>} : vector<8x32xf32>, vector<32x128xf32>, vector<8x128xf32> -> vector<8x128xf32>
    %531 = vector.extract_strided_slice %529 {offsets = [0, 0], sizes = [8, 64], strides = [1, 1]} : vector<8x128xf32> to vector<8x64xf32>
    %532 = vector.extract_strided_slice %530 {offsets = [0, 0], sizes = [8, 64], strides = [1, 1]} : vector<8x128xf32> to vector<8x64xf32>
    %533 = arith.addf %531, %532 : vector<8x64xf32>
    %534 = arith.negf %533 : vector<8x64xf32>
    %535 = math.exp %534 : vector<8x64xf32>
    %cst_407 = arith.constant 1.000000e+00 : f32
    %536 = vector.broadcast %cst_407 : f32 to vector<8x64xf32>
    %537 = arith.addf %536, %535 : vector<8x64xf32>
    %538 = arith.divf %536, %537 : vector<8x64xf32>
    %539 = vector.extract_strided_slice %538 {offsets = [0, 0], sizes = [8, 32], strides = [1, 1]} : vector<8x64xf32> to vector<8x32xf32>
    %540 = vector.extract_strided_slice %538 {offsets = [0, 32], sizes = [8, 32], strides = [1, 1]} : vector<8x64xf32> to vector<8x32xf32>
    %541 = vector.extract_strided_slice %529 {offsets = [0, 64], sizes = [8, 32], strides = [1, 1]} : vector<8x128xf32> to vector<8x32xf32>
    %542 = vector.extract_strided_slice %530 {offsets = [0, 64], sizes = [8, 32], strides = [1, 1]} : vector<8x128xf32> to vector<8x32xf32>
    %543 = arith.addf %542, %387 : vector<8x32xf32>
    %544 = arith.mulf %539, %543 : vector<8x32xf32>
    %545 = arith.addf %541, %544 : vector<8x32xf32>
    %546 = math.tanh %545 : vector<8x32xf32>
    %547 = arith.subf %526, %546 : vector<8x32xf32>
    %548 = arith.mulf %540, %547 : vector<8x32xf32>
    %549 = arith.addf %546, %548 : vector<8x32xf32>
    %c7_i32 = arith.constant 7 : i32
    %550 = arith.index_cast %c7_i32 : i32 to index
    %c0_408 = arith.constant 0 : index
    %c0_409 = arith.constant 0 : index
    %551 = vector.load %arg8[%550, %c0_408, %c0_409] : memref<8x8x128xf32, #tpu.memory_space<vmem>>, vector<1x8x128xf32>
    %552 = vector.shape_cast %551 : vector<1x8x128xf32> to vector<8x128xf32>
    %cst_410 = arith.constant dense<0.000000e+00> : vector<8x128xf32>
    %553 = tpu.matmul %549, %384, %cst_410 {dimension_numbers = #tpu.dot_dimension_numbers<[1], [0], [0], [1], [0, 0, 1, 1], [], []>} : vector<8x32xf32>, vector<32x128xf32>, vector<8x128xf32> -> vector<8x128xf32>
    %554 = vector.extract_strided_slice %552 {offsets = [0, 0], sizes = [8, 64], strides = [1, 1]} : vector<8x128xf32> to vector<8x64xf32>
    %555 = vector.extract_strided_slice %553 {offsets = [0, 0], sizes = [8, 64], strides = [1, 1]} : vector<8x128xf32> to vector<8x64xf32>
    %556 = arith.addf %554, %555 : vector<8x64xf32>
    %557 = arith.negf %556 : vector<8x64xf32>
    %558 = math.exp %557 : vector<8x64xf32>
    %cst_411 = arith.constant 1.000000e+00 : f32
    %559 = vector.broadcast %cst_411 : f32 to vector<8x64xf32>
    %560 = arith.addf %559, %558 : vector<8x64xf32>
    %561 = arith.divf %559, %560 : vector<8x64xf32>
    %562 = vector.extract_strided_slice %561 {offsets = [0, 0], sizes = [8, 32], strides = [1, 1]} : vector<8x64xf32> to vector<8x32xf32>
    %563 = vector.extract_strided_slice %561 {offsets = [0, 32], sizes = [8, 32], strides = [1, 1]} : vector<8x64xf32> to vector<8x32xf32>
    %564 = vector.extract_strided_slice %552 {offsets = [0, 64], sizes = [8, 32], strides = [1, 1]} : vector<8x128xf32> to vector<8x32xf32>
    %565 = vector.extract_strided_slice %553 {offsets = [0, 64], sizes = [8, 32], strides = [1, 1]} : vector<8x128xf32> to vector<8x32xf32>
    %566 = arith.addf %565, %387 : vector<8x32xf32>
    %567 = arith.mulf %562, %566 : vector<8x32xf32>
    %568 = arith.addf %564, %567 : vector<8x32xf32>
    %569 = math.tanh %568 : vector<8x32xf32>
    %570 = arith.subf %549, %569 : vector<8x32xf32>
    %571 = arith.mulf %563, %570 : vector<8x32xf32>
    %572 = arith.addf %569, %571 : vector<8x32xf32>
    %c8_i32 = arith.constant 8 : i32
    %c4_i32_412 = arith.constant 4 : i32
    %573 = tpu.dynamic_rotate %572 by %c4_i32_412 dim 0 : vector<8x32xf32>, i32 -> vector<8x32xf32>
    %c0_i32_413 = arith.constant 0 : i32
    %574 = arith.index_cast %c0_i32_413 : i32 to index
    %c0_414 = arith.constant 0 : index
    %c0_415 = arith.constant 0 : index
    %575 = vector.load %arg8[%574, %c0_414, %c0_415] : memref<8x8x128xf32, #tpu.memory_space<vmem>>, vector<1x8x128xf32>
    %576 = vector.shape_cast %575 : vector<1x8x128xf32> to vector<8x128xf32>
    %cst_416 = arith.constant dense<0.000000e+00> : vector<8x128xf32>
    %577 = tpu.matmul %573, %384, %cst_416 {dimension_numbers = #tpu.dot_dimension_numbers<[1], [0], [0], [1], [0, 0, 1, 1], [], []>} : vector<8x32xf32>, vector<32x128xf32>, vector<8x128xf32> -> vector<8x128xf32>
    %578 = vector.extract_strided_slice %576 {offsets = [0, 0], sizes = [8, 64], strides = [1, 1]} : vector<8x128xf32> to vector<8x64xf32>
    %579 = vector.extract_strided_slice %577 {offsets = [0, 0], sizes = [8, 64], strides = [1, 1]} : vector<8x128xf32> to vector<8x64xf32>
    %580 = arith.addf %578, %579 : vector<8x64xf32>
    %581 = arith.negf %580 : vector<8x64xf32>
    %582 = math.exp %581 : vector<8x64xf32>
    %cst_417 = arith.constant 1.000000e+00 : f32
    %583 = vector.broadcast %cst_417 : f32 to vector<8x64xf32>
    %584 = arith.addf %583, %582 : vector<8x64xf32>
    %585 = arith.divf %583, %584 : vector<8x64xf32>
    %586 = vector.extract_strided_slice %585 {offsets = [0, 0], sizes = [8, 32], strides = [1, 1]} : vector<8x64xf32> to vector<8x32xf32>
    %587 = vector.extract_strided_slice %585 {offsets = [0, 32], sizes = [8, 32], strides = [1, 1]} : vector<8x64xf32> to vector<8x32xf32>
    %588 = vector.extract_strided_slice %576 {offsets = [0, 64], sizes = [8, 32], strides = [1, 1]} : vector<8x128xf32> to vector<8x32xf32>
    %589 = vector.extract_strided_slice %577 {offsets = [0, 64], sizes = [8, 32], strides = [1, 1]} : vector<8x128xf32> to vector<8x32xf32>
    %590 = arith.addf %589, %387 : vector<8x32xf32>
    %591 = arith.mulf %586, %590 : vector<8x32xf32>
    %592 = arith.addf %588, %591 : vector<8x32xf32>
    %593 = math.tanh %592 : vector<8x32xf32>
    %594 = arith.subf %573, %593 : vector<8x32xf32>
    %595 = arith.mulf %587, %594 : vector<8x32xf32>
    %596 = arith.addf %593, %595 : vector<8x32xf32>
    %c1_i32_418 = arith.constant 1 : i32
    %597 = arith.index_cast %c1_i32_418 : i32 to index
    %c0_419 = arith.constant 0 : index
    %c0_420 = arith.constant 0 : index
    %598 = vector.load %arg8[%597, %c0_419, %c0_420] : memref<8x8x128xf32, #tpu.memory_space<vmem>>, vector<1x8x128xf32>
    %599 = vector.shape_cast %598 : vector<1x8x128xf32> to vector<8x128xf32>
    %cst_421 = arith.constant dense<0.000000e+00> : vector<8x128xf32>
    %600 = tpu.matmul %596, %384, %cst_421 {dimension_numbers = #tpu.dot_dimension_numbers<[1], [0], [0], [1], [0, 0, 1, 1], [], []>} : vector<8x32xf32>, vector<32x128xf32>, vector<8x128xf32> -> vector<8x128xf32>
    %601 = vector.extract_strided_slice %599 {offsets = [0, 0], sizes = [8, 64], strides = [1, 1]} : vector<8x128xf32> to vector<8x64xf32>
    %602 = vector.extract_strided_slice %600 {offsets = [0, 0], sizes = [8, 64], strides = [1, 1]} : vector<8x128xf32> to vector<8x64xf32>
    %603 = arith.addf %601, %602 : vector<8x64xf32>
    %604 = arith.negf %603 : vector<8x64xf32>
    %605 = math.exp %604 : vector<8x64xf32>
    %cst_422 = arith.constant 1.000000e+00 : f32
    %606 = vector.broadcast %cst_422 : f32 to vector<8x64xf32>
    %607 = arith.addf %606, %605 : vector<8x64xf32>
    %608 = arith.divf %606, %607 : vector<8x64xf32>
    %609 = vector.extract_strided_slice %608 {offsets = [0, 0], sizes = [8, 32], strides = [1, 1]} : vector<8x64xf32> to vector<8x32xf32>
    %610 = vector.extract_strided_slice %608 {offsets = [0, 32], sizes = [8, 32], strides = [1, 1]} : vector<8x64xf32> to vector<8x32xf32>
    %611 = vector.extract_strided_slice %599 {offsets = [0, 64], sizes = [8, 32], strides = [1, 1]} : vector<8x128xf32> to vector<8x32xf32>
    %612 = vector.extract_strided_slice %600 {offsets = [0, 64], sizes = [8, 32], strides = [1, 1]} : vector<8x128xf32> to vector<8x32xf32>
    %613 = arith.addf %612, %387 : vector<8x32xf32>
    %614 = arith.mulf %609, %613 : vector<8x32xf32>
    %615 = arith.addf %611, %614 : vector<8x32xf32>
    %616 = math.tanh %615 : vector<8x32xf32>
    %617 = arith.subf %596, %616 : vector<8x32xf32>
    %618 = arith.mulf %610, %617 : vector<8x32xf32>
    %619 = arith.addf %616, %618 : vector<8x32xf32>
    %c2_i32_423 = arith.constant 2 : i32
    %620 = arith.index_cast %c2_i32_423 : i32 to index
    %c0_424 = arith.constant 0 : index
    %c0_425 = arith.constant 0 : index
    %621 = vector.load %arg8[%620, %c0_424, %c0_425] : memref<8x8x128xf32, #tpu.memory_space<vmem>>, vector<1x8x128xf32>
    %622 = vector.shape_cast %621 : vector<1x8x128xf32> to vector<8x128xf32>
    %cst_426 = arith.constant dense<0.000000e+00> : vector<8x128xf32>
    %623 = tpu.matmul %619, %384, %cst_426 {dimension_numbers = #tpu.dot_dimension_numbers<[1], [0], [0], [1], [0, 0, 1, 1], [], []>} : vector<8x32xf32>, vector<32x128xf32>, vector<8x128xf32> -> vector<8x128xf32>
    %624 = vector.extract_strided_slice %622 {offsets = [0, 0], sizes = [8, 64], strides = [1, 1]} : vector<8x128xf32> to vector<8x64xf32>
    %625 = vector.extract_strided_slice %623 {offsets = [0, 0], sizes = [8, 64], strides = [1, 1]} : vector<8x128xf32> to vector<8x64xf32>
    %626 = arith.addf %624, %625 : vector<8x64xf32>
    %627 = arith.negf %626 : vector<8x64xf32>
    %628 = math.exp %627 : vector<8x64xf32>
    %cst_427 = arith.constant 1.000000e+00 : f32
    %629 = vector.broadcast %cst_427 : f32 to vector<8x64xf32>
    %630 = arith.addf %629, %628 : vector<8x64xf32>
    %631 = arith.divf %629, %630 : vector<8x64xf32>
    %632 = vector.extract_strided_slice %631 {offsets = [0, 0], sizes = [8, 32], strides = [1, 1]} : vector<8x64xf32> to vector<8x32xf32>
    %633 = vector.extract_strided_slice %631 {offsets = [0, 32], sizes = [8, 32], strides = [1, 1]} : vector<8x64xf32> to vector<8x32xf32>
    %634 = vector.extract_strided_slice %622 {offsets = [0, 64], sizes = [8, 32], strides = [1, 1]} : vector<8x128xf32> to vector<8x32xf32>
    %635 = vector.extract_strided_slice %623 {offsets = [0, 64], sizes = [8, 32], strides = [1, 1]} : vector<8x128xf32> to vector<8x32xf32>
    %636 = arith.addf %635, %387 : vector<8x32xf32>
    %637 = arith.mulf %632, %636 : vector<8x32xf32>
    %638 = arith.addf %634, %637 : vector<8x32xf32>
    %639 = math.tanh %638 : vector<8x32xf32>
    %640 = arith.subf %619, %639 : vector<8x32xf32>
    %641 = arith.mulf %633, %640 : vector<8x32xf32>
    %642 = arith.addf %639, %641 : vector<8x32xf32>
    %c3_i32_428 = arith.constant 3 : i32
    %643 = arith.index_cast %c3_i32_428 : i32 to index
    %c0_429 = arith.constant 0 : index
    %c0_430 = arith.constant 0 : index
    %644 = vector.load %arg8[%643, %c0_429, %c0_430] : memref<8x8x128xf32, #tpu.memory_space<vmem>>, vector<1x8x128xf32>
    %645 = vector.shape_cast %644 : vector<1x8x128xf32> to vector<8x128xf32>
    %cst_431 = arith.constant dense<0.000000e+00> : vector<8x128xf32>
    %646 = tpu.matmul %642, %384, %cst_431 {dimension_numbers = #tpu.dot_dimension_numbers<[1], [0], [0], [1], [0, 0, 1, 1], [], []>} : vector<8x32xf32>, vector<32x128xf32>, vector<8x128xf32> -> vector<8x128xf32>
    %647 = vector.extract_strided_slice %645 {offsets = [0, 0], sizes = [8, 64], strides = [1, 1]} : vector<8x128xf32> to vector<8x64xf32>
    %648 = vector.extract_strided_slice %646 {offsets = [0, 0], sizes = [8, 64], strides = [1, 1]} : vector<8x128xf32> to vector<8x64xf32>
    %649 = arith.addf %647, %648 : vector<8x64xf32>
    %650 = arith.negf %649 : vector<8x64xf32>
    %651 = math.exp %650 : vector<8x64xf32>
    %cst_432 = arith.constant 1.000000e+00 : f32
    %652 = vector.broadcast %cst_432 : f32 to vector<8x64xf32>
    %653 = arith.addf %652, %651 : vector<8x64xf32>
    %654 = arith.divf %652, %653 : vector<8x64xf32>
    %655 = vector.extract_strided_slice %654 {offsets = [0, 0], sizes = [8, 32], strides = [1, 1]} : vector<8x64xf32> to vector<8x32xf32>
    %656 = vector.extract_strided_slice %654 {offsets = [0, 32], sizes = [8, 32], strides = [1, 1]} : vector<8x64xf32> to vector<8x32xf32>
    %657 = vector.extract_strided_slice %645 {offsets = [0, 64], sizes = [8, 32], strides = [1, 1]} : vector<8x128xf32> to vector<8x32xf32>
    %658 = vector.extract_strided_slice %646 {offsets = [0, 64], sizes = [8, 32], strides = [1, 1]} : vector<8x128xf32> to vector<8x32xf32>
    %659 = arith.addf %658, %387 : vector<8x32xf32>
    %660 = arith.mulf %655, %659 : vector<8x32xf32>
    %661 = arith.addf %657, %660 : vector<8x32xf32>
    %662 = math.tanh %661 : vector<8x32xf32>
    %663 = arith.subf %642, %662 : vector<8x32xf32>
    %664 = arith.mulf %656, %663 : vector<8x32xf32>
    %665 = arith.addf %662, %664 : vector<8x32xf32>
    %c4_i32_433 = arith.constant 4 : i32
    %666 = arith.index_cast %c4_i32_433 : i32 to index
    %c0_434 = arith.constant 0 : index
    %c0_435 = arith.constant 0 : index
    %667 = vector.load %arg8[%666, %c0_434, %c0_435] : memref<8x8x128xf32, #tpu.memory_space<vmem>>, vector<1x8x128xf32>
    %668 = vector.shape_cast %667 : vector<1x8x128xf32> to vector<8x128xf32>
    %cst_436 = arith.constant dense<0.000000e+00> : vector<8x128xf32>
    %669 = tpu.matmul %665, %384, %cst_436 {dimension_numbers = #tpu.dot_dimension_numbers<[1], [0], [0], [1], [0, 0, 1, 1], [], []>} : vector<8x32xf32>, vector<32x128xf32>, vector<8x128xf32> -> vector<8x128xf32>
    %670 = vector.extract_strided_slice %668 {offsets = [0, 0], sizes = [8, 64], strides = [1, 1]} : vector<8x128xf32> to vector<8x64xf32>
    %671 = vector.extract_strided_slice %669 {offsets = [0, 0], sizes = [8, 64], strides = [1, 1]} : vector<8x128xf32> to vector<8x64xf32>
    %672 = arith.addf %670, %671 : vector<8x64xf32>
    %673 = arith.negf %672 : vector<8x64xf32>
    %674 = math.exp %673 : vector<8x64xf32>
    %cst_437 = arith.constant 1.000000e+00 : f32
    %675 = vector.broadcast %cst_437 : f32 to vector<8x64xf32>
    %676 = arith.addf %675, %674 : vector<8x64xf32>
    %677 = arith.divf %675, %676 : vector<8x64xf32>
    %678 = vector.extract_strided_slice %677 {offsets = [0, 0], sizes = [8, 32], strides = [1, 1]} : vector<8x64xf32> to vector<8x32xf32>
    %679 = vector.extract_strided_slice %677 {offsets = [0, 32], sizes = [8, 32], strides = [1, 1]} : vector<8x64xf32> to vector<8x32xf32>
    %680 = vector.extract_strided_slice %668 {offsets = [0, 64], sizes = [8, 32], strides = [1, 1]} : vector<8x128xf32> to vector<8x32xf32>
    %681 = vector.extract_strided_slice %669 {offsets = [0, 64], sizes = [8, 32], strides = [1, 1]} : vector<8x128xf32> to vector<8x32xf32>
    %682 = arith.addf %681, %387 : vector<8x32xf32>
    %683 = arith.mulf %678, %682 : vector<8x32xf32>
    %684 = arith.addf %680, %683 : vector<8x32xf32>
    %685 = math.tanh %684 : vector<8x32xf32>
    %686 = arith.subf %665, %685 : vector<8x32xf32>
    %687 = arith.mulf %679, %686 : vector<8x32xf32>
    %688 = arith.addf %685, %687 : vector<8x32xf32>
    %c5_i32_438 = arith.constant 5 : i32
    %689 = arith.index_cast %c5_i32_438 : i32 to index
    %c0_439 = arith.constant 0 : index
    %c0_440 = arith.constant 0 : index
    %690 = vector.load %arg8[%689, %c0_439, %c0_440] : memref<8x8x128xf32, #tpu.memory_space<vmem>>, vector<1x8x128xf32>
    %691 = vector.shape_cast %690 : vector<1x8x128xf32> to vector<8x128xf32>
    %cst_441 = arith.constant dense<0.000000e+00> : vector<8x128xf32>
    %692 = tpu.matmul %688, %384, %cst_441 {dimension_numbers = #tpu.dot_dimension_numbers<[1], [0], [0], [1], [0, 0, 1, 1], [], []>} : vector<8x32xf32>, vector<32x128xf32>, vector<8x128xf32> -> vector<8x128xf32>
    %693 = vector.extract_strided_slice %691 {offsets = [0, 0], sizes = [8, 64], strides = [1, 1]} : vector<8x128xf32> to vector<8x64xf32>
    %694 = vector.extract_strided_slice %692 {offsets = [0, 0], sizes = [8, 64], strides = [1, 1]} : vector<8x128xf32> to vector<8x64xf32>
    %695 = arith.addf %693, %694 : vector<8x64xf32>
    %696 = arith.negf %695 : vector<8x64xf32>
    %697 = math.exp %696 : vector<8x64xf32>
    %cst_442 = arith.constant 1.000000e+00 : f32
    %698 = vector.broadcast %cst_442 : f32 to vector<8x64xf32>
    %699 = arith.addf %698, %697 : vector<8x64xf32>
    %700 = arith.divf %698, %699 : vector<8x64xf32>
    %701 = vector.extract_strided_slice %700 {offsets = [0, 0], sizes = [8, 32], strides = [1, 1]} : vector<8x64xf32> to vector<8x32xf32>
    %702 = vector.extract_strided_slice %700 {offsets = [0, 32], sizes = [8, 32], strides = [1, 1]} : vector<8x64xf32> to vector<8x32xf32>
    %703 = vector.extract_strided_slice %691 {offsets = [0, 64], sizes = [8, 32], strides = [1, 1]} : vector<8x128xf32> to vector<8x32xf32>
    %704 = vector.extract_strided_slice %692 {offsets = [0, 64], sizes = [8, 32], strides = [1, 1]} : vector<8x128xf32> to vector<8x32xf32>
    %705 = arith.addf %704, %387 : vector<8x32xf32>
    %706 = arith.mulf %701, %705 : vector<8x32xf32>
    %707 = arith.addf %703, %706 : vector<8x32xf32>
    %708 = math.tanh %707 : vector<8x32xf32>
    %709 = arith.subf %688, %708 : vector<8x32xf32>
    %710 = arith.mulf %702, %709 : vector<8x32xf32>
    %711 = arith.addf %708, %710 : vector<8x32xf32>
    %c6_i32_443 = arith.constant 6 : i32
    %712 = arith.index_cast %c6_i32_443 : i32 to index
    %c0_444 = arith.constant 0 : index
    %c0_445 = arith.constant 0 : index
    %713 = vector.load %arg8[%712, %c0_444, %c0_445] : memref<8x8x128xf32, #tpu.memory_space<vmem>>, vector<1x8x128xf32>
    %714 = vector.shape_cast %713 : vector<1x8x128xf32> to vector<8x128xf32>
    %cst_446 = arith.constant dense<0.000000e+00> : vector<8x128xf32>
    %715 = tpu.matmul %711, %384, %cst_446 {dimension_numbers = #tpu.dot_dimension_numbers<[1], [0], [0], [1], [0, 0, 1, 1], [], []>} : vector<8x32xf32>, vector<32x128xf32>, vector<8x128xf32> -> vector<8x128xf32>
    %716 = vector.extract_strided_slice %714 {offsets = [0, 0], sizes = [8, 64], strides = [1, 1]} : vector<8x128xf32> to vector<8x64xf32>
    %717 = vector.extract_strided_slice %715 {offsets = [0, 0], sizes = [8, 64], strides = [1, 1]} : vector<8x128xf32> to vector<8x64xf32>
    %718 = arith.addf %716, %717 : vector<8x64xf32>
    %719 = arith.negf %718 : vector<8x64xf32>
    %720 = math.exp %719 : vector<8x64xf32>
    %cst_447 = arith.constant 1.000000e+00 : f32
    %721 = vector.broadcast %cst_447 : f32 to vector<8x64xf32>
    %722 = arith.addf %721, %720 : vector<8x64xf32>
    %723 = arith.divf %721, %722 : vector<8x64xf32>
    %724 = vector.extract_strided_slice %723 {offsets = [0, 0], sizes = [8, 32], strides = [1, 1]} : vector<8x64xf32> to vector<8x32xf32>
    %725 = vector.extract_strided_slice %723 {offsets = [0, 32], sizes = [8, 32], strides = [1, 1]} : vector<8x64xf32> to vector<8x32xf32>
    %726 = vector.extract_strided_slice %714 {offsets = [0, 64], sizes = [8, 32], strides = [1, 1]} : vector<8x128xf32> to vector<8x32xf32>
    %727 = vector.extract_strided_slice %715 {offsets = [0, 64], sizes = [8, 32], strides = [1, 1]} : vector<8x128xf32> to vector<8x32xf32>
    %728 = arith.addf %727, %387 : vector<8x32xf32>
    %729 = arith.mulf %724, %728 : vector<8x32xf32>
    %730 = arith.addf %726, %729 : vector<8x32xf32>
    %731 = math.tanh %730 : vector<8x32xf32>
    %732 = arith.subf %711, %731 : vector<8x32xf32>
    %733 = arith.mulf %725, %732 : vector<8x32xf32>
    %734 = arith.addf %731, %733 : vector<8x32xf32>
    %c7_i32_448 = arith.constant 7 : i32
    %735 = arith.index_cast %c7_i32_448 : i32 to index
    %c0_449 = arith.constant 0 : index
    %c0_450 = arith.constant 0 : index
    %736 = vector.load %arg8[%735, %c0_449, %c0_450] : memref<8x8x128xf32, #tpu.memory_space<vmem>>, vector<1x8x128xf32>
    %737 = vector.shape_cast %736 : vector<1x8x128xf32> to vector<8x128xf32>
    %cst_451 = arith.constant dense<0.000000e+00> : vector<8x128xf32>
    %738 = tpu.matmul %734, %384, %cst_451 {dimension_numbers = #tpu.dot_dimension_numbers<[1], [0], [0], [1], [0, 0, 1, 1], [], []>} : vector<8x32xf32>, vector<32x128xf32>, vector<8x128xf32> -> vector<8x128xf32>
    %739 = vector.extract_strided_slice %737 {offsets = [0, 0], sizes = [8, 64], strides = [1, 1]} : vector<8x128xf32> to vector<8x64xf32>
    %740 = vector.extract_strided_slice %738 {offsets = [0, 0], sizes = [8, 64], strides = [1, 1]} : vector<8x128xf32> to vector<8x64xf32>
    %741 = arith.addf %739, %740 : vector<8x64xf32>
    %742 = arith.negf %741 : vector<8x64xf32>
    %743 = math.exp %742 : vector<8x64xf32>
    %cst_452 = arith.constant 1.000000e+00 : f32
    %744 = vector.broadcast %cst_452 : f32 to vector<8x64xf32>
    %745 = arith.addf %744, %743 : vector<8x64xf32>
    %746 = arith.divf %744, %745 : vector<8x64xf32>
    %747 = vector.extract_strided_slice %746 {offsets = [0, 0], sizes = [8, 32], strides = [1, 1]} : vector<8x64xf32> to vector<8x32xf32>
    %748 = vector.extract_strided_slice %746 {offsets = [0, 32], sizes = [8, 32], strides = [1, 1]} : vector<8x64xf32> to vector<8x32xf32>
    %749 = vector.extract_strided_slice %737 {offsets = [0, 64], sizes = [8, 32], strides = [1, 1]} : vector<8x128xf32> to vector<8x32xf32>
    %750 = vector.extract_strided_slice %738 {offsets = [0, 64], sizes = [8, 32], strides = [1, 1]} : vector<8x128xf32> to vector<8x32xf32>
    %751 = arith.addf %750, %387 : vector<8x32xf32>
    %752 = arith.mulf %747, %751 : vector<8x32xf32>
    %753 = arith.addf %749, %752 : vector<8x32xf32>
    %754 = math.tanh %753 : vector<8x32xf32>
    %755 = arith.subf %734, %754 : vector<8x32xf32>
    %756 = arith.mulf %748, %755 : vector<8x32xf32>
    %757 = arith.addf %754, %756 : vector<8x32xf32>
    %c8_i32_453 = arith.constant 8 : i32
    %c4_i32_454 = arith.constant 4 : i32
    %758 = tpu.dynamic_rotate %757 by %c4_i32_454 dim 0 : vector<8x32xf32>, i32 -> vector<8x32xf32>
    %c0_i32_455 = arith.constant 0 : i32
    %759 = arith.index_cast %c0_i32_455 : i32 to index
    %c0_456 = arith.constant 0 : index
    %c0_457 = arith.constant 0 : index
    %760 = vector.load %arg8[%759, %c0_456, %c0_457] : memref<8x8x128xf32, #tpu.memory_space<vmem>>, vector<1x8x128xf32>
    %761 = vector.shape_cast %760 : vector<1x8x128xf32> to vector<8x128xf32>
    %cst_458 = arith.constant dense<0.000000e+00> : vector<8x128xf32>
    %762 = tpu.matmul %758, %384, %cst_458 {dimension_numbers = #tpu.dot_dimension_numbers<[1], [0], [0], [1], [0, 0, 1, 1], [], []>} : vector<8x32xf32>, vector<32x128xf32>, vector<8x128xf32> -> vector<8x128xf32>
    %763 = vector.extract_strided_slice %761 {offsets = [0, 0], sizes = [8, 64], strides = [1, 1]} : vector<8x128xf32> to vector<8x64xf32>
    %764 = vector.extract_strided_slice %762 {offsets = [0, 0], sizes = [8, 64], strides = [1, 1]} : vector<8x128xf32> to vector<8x64xf32>
    %765 = arith.addf %763, %764 : vector<8x64xf32>
    %766 = arith.negf %765 : vector<8x64xf32>
    %767 = math.exp %766 : vector<8x64xf32>
    %cst_459 = arith.constant 1.000000e+00 : f32
    %768 = vector.broadcast %cst_459 : f32 to vector<8x64xf32>
    %769 = arith.addf %768, %767 : vector<8x64xf32>
    %770 = arith.divf %768, %769 : vector<8x64xf32>
    %771 = vector.extract_strided_slice %770 {offsets = [0, 0], sizes = [8, 32], strides = [1, 1]} : vector<8x64xf32> to vector<8x32xf32>
    %772 = vector.extract_strided_slice %770 {offsets = [0, 32], sizes = [8, 32], strides = [1, 1]} : vector<8x64xf32> to vector<8x32xf32>
    %773 = vector.extract_strided_slice %761 {offsets = [0, 64], sizes = [8, 32], strides = [1, 1]} : vector<8x128xf32> to vector<8x32xf32>
    %774 = vector.extract_strided_slice %762 {offsets = [0, 64], sizes = [8, 32], strides = [1, 1]} : vector<8x128xf32> to vector<8x32xf32>
    %775 = arith.addf %774, %387 : vector<8x32xf32>
    %776 = arith.mulf %771, %775 : vector<8x32xf32>
    %777 = arith.addf %773, %776 : vector<8x32xf32>
    %778 = math.tanh %777 : vector<8x32xf32>
    %779 = arith.subf %758, %778 : vector<8x32xf32>
    %780 = arith.mulf %772, %779 : vector<8x32xf32>
    %781 = arith.addf %778, %780 : vector<8x32xf32>
    %c1_i32_460 = arith.constant 1 : i32
    %782 = arith.index_cast %c1_i32_460 : i32 to index
    %c0_461 = arith.constant 0 : index
    %c0_462 = arith.constant 0 : index
    %783 = vector.load %arg8[%782, %c0_461, %c0_462] : memref<8x8x128xf32, #tpu.memory_space<vmem>>, vector<1x8x128xf32>
    %784 = vector.shape_cast %783 : vector<1x8x128xf32> to vector<8x128xf32>
    %cst_463 = arith.constant dense<0.000000e+00> : vector<8x128xf32>
    %785 = tpu.matmul %781, %384, %cst_463 {dimension_numbers = #tpu.dot_dimension_numbers<[1], [0], [0], [1], [0, 0, 1, 1], [], []>} : vector<8x32xf32>, vector<32x128xf32>, vector<8x128xf32> -> vector<8x128xf32>
    %786 = vector.extract_strided_slice %784 {offsets = [0, 0], sizes = [8, 64], strides = [1, 1]} : vector<8x128xf32> to vector<8x64xf32>
    %787 = vector.extract_strided_slice %785 {offsets = [0, 0], sizes = [8, 64], strides = [1, 1]} : vector<8x128xf32> to vector<8x64xf32>
    %788 = arith.addf %786, %787 : vector<8x64xf32>
    %789 = arith.negf %788 : vector<8x64xf32>
    %790 = math.exp %789 : vector<8x64xf32>
    %cst_464 = arith.constant 1.000000e+00 : f32
    %791 = vector.broadcast %cst_464 : f32 to vector<8x64xf32>
    %792 = arith.addf %791, %790 : vector<8x64xf32>
    %793 = arith.divf %791, %792 : vector<8x64xf32>
    %794 = vector.extract_strided_slice %793 {offsets = [0, 0], sizes = [8, 32], strides = [1, 1]} : vector<8x64xf32> to vector<8x32xf32>
    %795 = vector.extract_strided_slice %793 {offsets = [0, 32], sizes = [8, 32], strides = [1, 1]} : vector<8x64xf32> to vector<8x32xf32>
    %796 = vector.extract_strided_slice %784 {offsets = [0, 64], sizes = [8, 32], strides = [1, 1]} : vector<8x128xf32> to vector<8x32xf32>
    %797 = vector.extract_strided_slice %785 {offsets = [0, 64], sizes = [8, 32], strides = [1, 1]} : vector<8x128xf32> to vector<8x32xf32>
    %798 = arith.addf %797, %387 : vector<8x32xf32>
    %799 = arith.mulf %794, %798 : vector<8x32xf32>
    %800 = arith.addf %796, %799 : vector<8x32xf32>
    %801 = math.tanh %800 : vector<8x32xf32>
    %802 = arith.subf %781, %801 : vector<8x32xf32>
    %803 = arith.mulf %795, %802 : vector<8x32xf32>
    %804 = arith.addf %801, %803 : vector<8x32xf32>
    %c2_i32_465 = arith.constant 2 : i32
    %805 = arith.index_cast %c2_i32_465 : i32 to index
    %c0_466 = arith.constant 0 : index
    %c0_467 = arith.constant 0 : index
    %806 = vector.load %arg8[%805, %c0_466, %c0_467] : memref<8x8x128xf32, #tpu.memory_space<vmem>>, vector<1x8x128xf32>
    %807 = vector.shape_cast %806 : vector<1x8x128xf32> to vector<8x128xf32>
    %cst_468 = arith.constant dense<0.000000e+00> : vector<8x128xf32>
    %808 = tpu.matmul %804, %384, %cst_468 {dimension_numbers = #tpu.dot_dimension_numbers<[1], [0], [0], [1], [0, 0, 1, 1], [], []>} : vector<8x32xf32>, vector<32x128xf32>, vector<8x128xf32> -> vector<8x128xf32>
    %809 = vector.extract_strided_slice %807 {offsets = [0, 0], sizes = [8, 64], strides = [1, 1]} : vector<8x128xf32> to vector<8x64xf32>
    %810 = vector.extract_strided_slice %808 {offsets = [0, 0], sizes = [8, 64], strides = [1, 1]} : vector<8x128xf32> to vector<8x64xf32>
    %811 = arith.addf %809, %810 : vector<8x64xf32>
    %812 = arith.negf %811 : vector<8x64xf32>
    %813 = math.exp %812 : vector<8x64xf32>
    %cst_469 = arith.constant 1.000000e+00 : f32
    %814 = vector.broadcast %cst_469 : f32 to vector<8x64xf32>
    %815 = arith.addf %814, %813 : vector<8x64xf32>
    %816 = arith.divf %814, %815 : vector<8x64xf32>
    %817 = vector.extract_strided_slice %816 {offsets = [0, 0], sizes = [8, 32], strides = [1, 1]} : vector<8x64xf32> to vector<8x32xf32>
    %818 = vector.extract_strided_slice %816 {offsets = [0, 32], sizes = [8, 32], strides = [1, 1]} : vector<8x64xf32> to vector<8x32xf32>
    %819 = vector.extract_strided_slice %807 {offsets = [0, 64], sizes = [8, 32], strides = [1, 1]} : vector<8x128xf32> to vector<8x32xf32>
    %820 = vector.extract_strided_slice %808 {offsets = [0, 64], sizes = [8, 32], strides = [1, 1]} : vector<8x128xf32> to vector<8x32xf32>
    %821 = arith.addf %820, %387 : vector<8x32xf32>
    %822 = arith.mulf %817, %821 : vector<8x32xf32>
    %823 = arith.addf %819, %822 : vector<8x32xf32>
    %824 = math.tanh %823 : vector<8x32xf32>
    %825 = arith.subf %804, %824 : vector<8x32xf32>
    %826 = arith.mulf %818, %825 : vector<8x32xf32>
    %827 = arith.addf %824, %826 : vector<8x32xf32>
    %c3_i32_470 = arith.constant 3 : i32
    %828 = arith.index_cast %c3_i32_470 : i32 to index
    %c0_471 = arith.constant 0 : index
    %c0_472 = arith.constant 0 : index
    %829 = vector.load %arg8[%828, %c0_471, %c0_472] : memref<8x8x128xf32, #tpu.memory_space<vmem>>, vector<1x8x128xf32>
    %830 = vector.shape_cast %829 : vector<1x8x128xf32> to vector<8x128xf32>
    %cst_473 = arith.constant dense<0.000000e+00> : vector<8x128xf32>
    %831 = tpu.matmul %827, %384, %cst_473 {dimension_numbers = #tpu.dot_dimension_numbers<[1], [0], [0], [1], [0, 0, 1, 1], [], []>} : vector<8x32xf32>, vector<32x128xf32>, vector<8x128xf32> -> vector<8x128xf32>
    %832 = vector.extract_strided_slice %830 {offsets = [0, 0], sizes = [8, 64], strides = [1, 1]} : vector<8x128xf32> to vector<8x64xf32>
    %833 = vector.extract_strided_slice %831 {offsets = [0, 0], sizes = [8, 64], strides = [1, 1]} : vector<8x128xf32> to vector<8x64xf32>
    %834 = arith.addf %832, %833 : vector<8x64xf32>
    %835 = arith.negf %834 : vector<8x64xf32>
    %836 = math.exp %835 : vector<8x64xf32>
    %cst_474 = arith.constant 1.000000e+00 : f32
    %837 = vector.broadcast %cst_474 : f32 to vector<8x64xf32>
    %838 = arith.addf %837, %836 : vector<8x64xf32>
    %839 = arith.divf %837, %838 : vector<8x64xf32>
    %840 = vector.extract_strided_slice %839 {offsets = [0, 0], sizes = [8, 32], strides = [1, 1]} : vector<8x64xf32> to vector<8x32xf32>
    %841 = vector.extract_strided_slice %839 {offsets = [0, 32], sizes = [8, 32], strides = [1, 1]} : vector<8x64xf32> to vector<8x32xf32>
    %842 = vector.extract_strided_slice %830 {offsets = [0, 64], sizes = [8, 32], strides = [1, 1]} : vector<8x128xf32> to vector<8x32xf32>
    %843 = vector.extract_strided_slice %831 {offsets = [0, 64], sizes = [8, 32], strides = [1, 1]} : vector<8x128xf32> to vector<8x32xf32>
    %844 = arith.addf %843, %387 : vector<8x32xf32>
    %845 = arith.mulf %840, %844 : vector<8x32xf32>
    %846 = arith.addf %842, %845 : vector<8x32xf32>
    %847 = math.tanh %846 : vector<8x32xf32>
    %848 = arith.subf %827, %847 : vector<8x32xf32>
    %849 = arith.mulf %841, %848 : vector<8x32xf32>
    %850 = arith.addf %847, %849 : vector<8x32xf32>
    %c4_i32_475 = arith.constant 4 : i32
    %851 = arith.index_cast %c4_i32_475 : i32 to index
    %c0_476 = arith.constant 0 : index
    %c0_477 = arith.constant 0 : index
    %852 = vector.load %arg8[%851, %c0_476, %c0_477] : memref<8x8x128xf32, #tpu.memory_space<vmem>>, vector<1x8x128xf32>
    %853 = vector.shape_cast %852 : vector<1x8x128xf32> to vector<8x128xf32>
    %cst_478 = arith.constant dense<0.000000e+00> : vector<8x128xf32>
    %854 = tpu.matmul %850, %384, %cst_478 {dimension_numbers = #tpu.dot_dimension_numbers<[1], [0], [0], [1], [0, 0, 1, 1], [], []>} : vector<8x32xf32>, vector<32x128xf32>, vector<8x128xf32> -> vector<8x128xf32>
    %855 = vector.extract_strided_slice %853 {offsets = [0, 0], sizes = [8, 64], strides = [1, 1]} : vector<8x128xf32> to vector<8x64xf32>
    %856 = vector.extract_strided_slice %854 {offsets = [0, 0], sizes = [8, 64], strides = [1, 1]} : vector<8x128xf32> to vector<8x64xf32>
    %857 = arith.addf %855, %856 : vector<8x64xf32>
    %858 = arith.negf %857 : vector<8x64xf32>
    %859 = math.exp %858 : vector<8x64xf32>
    %cst_479 = arith.constant 1.000000e+00 : f32
    %860 = vector.broadcast %cst_479 : f32 to vector<8x64xf32>
    %861 = arith.addf %860, %859 : vector<8x64xf32>
    %862 = arith.divf %860, %861 : vector<8x64xf32>
    %863 = vector.extract_strided_slice %862 {offsets = [0, 0], sizes = [8, 32], strides = [1, 1]} : vector<8x64xf32> to vector<8x32xf32>
    %864 = vector.extract_strided_slice %862 {offsets = [0, 32], sizes = [8, 32], strides = [1, 1]} : vector<8x64xf32> to vector<8x32xf32>
    %865 = vector.extract_strided_slice %853 {offsets = [0, 64], sizes = [8, 32], strides = [1, 1]} : vector<8x128xf32> to vector<8x32xf32>
    %866 = vector.extract_strided_slice %854 {offsets = [0, 64], sizes = [8, 32], strides = [1, 1]} : vector<8x128xf32> to vector<8x32xf32>
    %867 = arith.addf %866, %387 : vector<8x32xf32>
    %868 = arith.mulf %863, %867 : vector<8x32xf32>
    %869 = arith.addf %865, %868 : vector<8x32xf32>
    %870 = math.tanh %869 : vector<8x32xf32>
    %871 = arith.subf %850, %870 : vector<8x32xf32>
    %872 = arith.mulf %864, %871 : vector<8x32xf32>
    %873 = arith.addf %870, %872 : vector<8x32xf32>
    %c5_i32_480 = arith.constant 5 : i32
    %874 = arith.index_cast %c5_i32_480 : i32 to index
    %c0_481 = arith.constant 0 : index
    %c0_482 = arith.constant 0 : index
    %875 = vector.load %arg8[%874, %c0_481, %c0_482] : memref<8x8x128xf32, #tpu.memory_space<vmem>>, vector<1x8x128xf32>
    %876 = vector.shape_cast %875 : vector<1x8x128xf32> to vector<8x128xf32>
    %cst_483 = arith.constant dense<0.000000e+00> : vector<8x128xf32>
    %877 = tpu.matmul %873, %384, %cst_483 {dimension_numbers = #tpu.dot_dimension_numbers<[1], [0], [0], [1], [0, 0, 1, 1], [], []>} : vector<8x32xf32>, vector<32x128xf32>, vector<8x128xf32> -> vector<8x128xf32>
    %878 = vector.extract_strided_slice %876 {offsets = [0, 0], sizes = [8, 64], strides = [1, 1]} : vector<8x128xf32> to vector<8x64xf32>
    %879 = vector.extract_strided_slice %877 {offsets = [0, 0], sizes = [8, 64], strides = [1, 1]} : vector<8x128xf32> to vector<8x64xf32>
    %880 = arith.addf %878, %879 : vector<8x64xf32>
    %881 = arith.negf %880 : vector<8x64xf32>
    %882 = math.exp %881 : vector<8x64xf32>
    %cst_484 = arith.constant 1.000000e+00 : f32
    %883 = vector.broadcast %cst_484 : f32 to vector<8x64xf32>
    %884 = arith.addf %883, %882 : vector<8x64xf32>
    %885 = arith.divf %883, %884 : vector<8x64xf32>
    %886 = vector.extract_strided_slice %885 {offsets = [0, 0], sizes = [8, 32], strides = [1, 1]} : vector<8x64xf32> to vector<8x32xf32>
    %887 = vector.extract_strided_slice %885 {offsets = [0, 32], sizes = [8, 32], strides = [1, 1]} : vector<8x64xf32> to vector<8x32xf32>
    %888 = vector.extract_strided_slice %876 {offsets = [0, 64], sizes = [8, 32], strides = [1, 1]} : vector<8x128xf32> to vector<8x32xf32>
    %889 = vector.extract_strided_slice %877 {offsets = [0, 64], sizes = [8, 32], strides = [1, 1]} : vector<8x128xf32> to vector<8x32xf32>
    %890 = arith.addf %889, %387 : vector<8x32xf32>
    %891 = arith.mulf %886, %890 : vector<8x32xf32>
    %892 = arith.addf %888, %891 : vector<8x32xf32>
    %893 = math.tanh %892 : vector<8x32xf32>
    %894 = arith.subf %873, %893 : vector<8x32xf32>
    %895 = arith.mulf %887, %894 : vector<8x32xf32>
    %896 = arith.addf %893, %895 : vector<8x32xf32>
    %c6_i32_485 = arith.constant 6 : i32
    %897 = arith.index_cast %c6_i32_485 : i32 to index
    %c0_486 = arith.constant 0 : index
    %c0_487 = arith.constant 0 : index
    %898 = vector.load %arg8[%897, %c0_486, %c0_487] : memref<8x8x128xf32, #tpu.memory_space<vmem>>, vector<1x8x128xf32>
    %899 = vector.shape_cast %898 : vector<1x8x128xf32> to vector<8x128xf32>
    %cst_488 = arith.constant dense<0.000000e+00> : vector<8x128xf32>
    %900 = tpu.matmul %896, %384, %cst_488 {dimension_numbers = #tpu.dot_dimension_numbers<[1], [0], [0], [1], [0, 0, 1, 1], [], []>} : vector<8x32xf32>, vector<32x128xf32>, vector<8x128xf32> -> vector<8x128xf32>
    %901 = vector.extract_strided_slice %899 {offsets = [0, 0], sizes = [8, 64], strides = [1, 1]} : vector<8x128xf32> to vector<8x64xf32>
    %902 = vector.extract_strided_slice %900 {offsets = [0, 0], sizes = [8, 64], strides = [1, 1]} : vector<8x128xf32> to vector<8x64xf32>
    %903 = arith.addf %901, %902 : vector<8x64xf32>
    %904 = arith.negf %903 : vector<8x64xf32>
    %905 = math.exp %904 : vector<8x64xf32>
    %cst_489 = arith.constant 1.000000e+00 : f32
    %906 = vector.broadcast %cst_489 : f32 to vector<8x64xf32>
    %907 = arith.addf %906, %905 : vector<8x64xf32>
    %908 = arith.divf %906, %907 : vector<8x64xf32>
    %909 = vector.extract_strided_slice %908 {offsets = [0, 0], sizes = [8, 32], strides = [1, 1]} : vector<8x64xf32> to vector<8x32xf32>
    %910 = vector.extract_strided_slice %908 {offsets = [0, 32], sizes = [8, 32], strides = [1, 1]} : vector<8x64xf32> to vector<8x32xf32>
    %911 = vector.extract_strided_slice %899 {offsets = [0, 64], sizes = [8, 32], strides = [1, 1]} : vector<8x128xf32> to vector<8x32xf32>
    %912 = vector.extract_strided_slice %900 {offsets = [0, 64], sizes = [8, 32], strides = [1, 1]} : vector<8x128xf32> to vector<8x32xf32>
    %913 = arith.addf %912, %387 : vector<8x32xf32>
    %914 = arith.mulf %909, %913 : vector<8x32xf32>
    %915 = arith.addf %911, %914 : vector<8x32xf32>
    %916 = math.tanh %915 : vector<8x32xf32>
    %917 = arith.subf %896, %916 : vector<8x32xf32>
    %918 = arith.mulf %910, %917 : vector<8x32xf32>
    %919 = arith.addf %916, %918 : vector<8x32xf32>
    %c7_i32_490 = arith.constant 7 : i32
    %920 = arith.index_cast %c7_i32_490 : i32 to index
    %c0_491 = arith.constant 0 : index
    %c0_492 = arith.constant 0 : index
    %921 = vector.load %arg8[%920, %c0_491, %c0_492] : memref<8x8x128xf32, #tpu.memory_space<vmem>>, vector<1x8x128xf32>
    %922 = vector.shape_cast %921 : vector<1x8x128xf32> to vector<8x128xf32>
    %cst_493 = arith.constant dense<0.000000e+00> : vector<8x128xf32>
    %923 = tpu.matmul %919, %384, %cst_493 {dimension_numbers = #tpu.dot_dimension_numbers<[1], [0], [0], [1], [0, 0, 1, 1], [], []>} : vector<8x32xf32>, vector<32x128xf32>, vector<8x128xf32> -> vector<8x128xf32>
    %924 = vector.extract_strided_slice %922 {offsets = [0, 0], sizes = [8, 64], strides = [1, 1]} : vector<8x128xf32> to vector<8x64xf32>
    %925 = vector.extract_strided_slice %923 {offsets = [0, 0], sizes = [8, 64], strides = [1, 1]} : vector<8x128xf32> to vector<8x64xf32>
    %926 = arith.addf %924, %925 : vector<8x64xf32>
    %927 = arith.negf %926 : vector<8x64xf32>
    %928 = math.exp %927 : vector<8x64xf32>
    %cst_494 = arith.constant 1.000000e+00 : f32
    %929 = vector.broadcast %cst_494 : f32 to vector<8x64xf32>
    %930 = arith.addf %929, %928 : vector<8x64xf32>
    %931 = arith.divf %929, %930 : vector<8x64xf32>
    %932 = vector.extract_strided_slice %931 {offsets = [0, 0], sizes = [8, 32], strides = [1, 1]} : vector<8x64xf32> to vector<8x32xf32>
    %933 = vector.extract_strided_slice %931 {offsets = [0, 32], sizes = [8, 32], strides = [1, 1]} : vector<8x64xf32> to vector<8x32xf32>
    %934 = vector.extract_strided_slice %922 {offsets = [0, 64], sizes = [8, 32], strides = [1, 1]} : vector<8x128xf32> to vector<8x32xf32>
    %935 = vector.extract_strided_slice %923 {offsets = [0, 64], sizes = [8, 32], strides = [1, 1]} : vector<8x128xf32> to vector<8x32xf32>
    %936 = arith.addf %935, %387 : vector<8x32xf32>
    %937 = arith.mulf %932, %936 : vector<8x32xf32>
    %938 = arith.addf %934, %937 : vector<8x32xf32>
    %939 = math.tanh %938 : vector<8x32xf32>
    %940 = arith.subf %919, %939 : vector<8x32xf32>
    %941 = arith.mulf %933, %940 : vector<8x32xf32>
    %942 = arith.addf %939, %941 : vector<8x32xf32>
    %c8_i32_495 = arith.constant 8 : i32
    %c4_i32_496 = arith.constant 4 : i32
    %943 = tpu.dynamic_rotate %942 by %c4_i32_496 dim 0 : vector<8x32xf32>, i32 -> vector<8x32xf32>
    %944 = arith.subf %757, %943 : vector<8x32xf32>
    %945 = math.absf %944 : vector<8x32xf32>
    %c0_497 = arith.constant 0 : index
    %c0_498 = arith.constant 0 : index
    %946 = vector.load %arg5[%c0_497, %c0_498] : memref<32x2xf32, #tpu.memory_space<vmem>>, vector<32x2xf32>
    %cst_499 = arith.constant dense<0.000000e+00> : vector<8x2xf32>
    %947 = tpu.matmul %945, %946, %cst_499 {dimension_numbers = #tpu.dot_dimension_numbers<[1], [0], [0], [1], [0, 0, 1, 1], [], []>} : vector<8x32xf32>, vector<32x2xf32>, vector<8x2xf32> -> vector<8x2xf32>
    %c0_500 = arith.constant 0 : index
    %c0_501 = arith.constant 0 : index
    %948 = vector.load %arg6[%c0_500, %c0_501] : memref<1x2xf32, #tpu.memory_space<vmem>>, vector<1x2xf32>
    %949 = vector.broadcast %948 : vector<1x2xf32> to vector<8x2xf32>
    %950 = arith.addf %947, %949 : vector<8x2xf32>
    %951 = vector.extract_strided_slice %950 {offsets = [0, 1], sizes = [8, 1], strides = [1, 1]} : vector<8x2xf32> to vector<8x1xf32>
    %952 = vector.extract_strided_slice %950 {offsets = [0, 0], sizes = [8, 1], strides = [1, 1]} : vector<8x2xf32> to vector<8x1xf32>
    %953 = arith.subf %951, %952 : vector<8x1xf32>
    %954 = arith.negf %953 : vector<8x1xf32>
    %955 = math.exp %954 : vector<8x1xf32>
    %cst_502 = arith.constant 1.000000e+00 : f32
    %956 = vector.broadcast %cst_502 : f32 to vector<8x1xf32>
    %957 = arith.addf %956, %955 : vector<8x1xf32>
    %958 = arith.divf %956, %957 : vector<8x1xf32>
    %cst_503 = arith.constant 1.000000e+00 : f32
    %959 = vector.broadcast %cst_503 : f32 to vector<8x1xf32>
    %960 = arith.subf %959, %958 : vector<8x1xf32>
    %961 = tpu.concatenate %960, %958 in 1 : vector<8x1xf32>, vector<8x1xf32> -> vector<8x2xf32>
    %962 = vector.extract_strided_slice %961 {offsets = [0, 0], sizes = [4, 2], strides = [1, 1]} : vector<8x2xf32> to vector<4x2xf32>
    %c0_504 = arith.constant 0 : index
    %c0_505 = arith.constant 0 : index
    %963 = vector.load %arg7[%c0_504, %c0_505] : memref<4x2xf32, #tpu.memory_space<vmem>>, vector<4x2xf32>
    tpu.vector_store %arg7[%c0_504, %c0_505], %962 {strides = array<i32>} : memref<4x2xf32, #tpu.memory_space<vmem>>, vector<4x2xf32>,
    return
  }
}

</mosaic_0001>

<llo_original>
// kernel: matcher_forward.1
$region0: #{matcher_forward.1}
  #allocation0 [shape = 'u32[]', space=smem, size = 0x4, offset = 0x4, fixed_abs, tag = 'smem constant byte address 0x4 - core index']
  #allocation1 [shape = 'u32[144,128]{1,0:T(1,128)}', space=vmem, size = 0x12000, scoped, tag = 'internal scratch']
  #allocation2 [shape = 'f32[8,8,128]{2,1,0:T(8,128)}', space=vmem, size = 0x8000, scoped, tag = 'scratch operand']
  %s0 = inlined_call_operand.vmem [shape: s32[4,8], index: 0, kind: input, shape index: {}]
  %s1 = inlined_call_operand.vmem [shape: s32[4,8], index: 1, kind: input, shape index: {}]
  %s2 = inlined_call_operand.hbm [shape: f32[50,128], index: 2, kind: input, shape index: {}]
  %s3 = inlined_call_operand.vmem [shape: f32[32,128], index: 3, kind: input, shape index: {}]
  %s4 = inlined_call_operand.vmem [shape: f32[1,32], index: 4, kind: input, shape index: {}]
  %s5 = inlined_call_operand.vmem [shape: f32[32,2], index: 5, kind: input, shape index: {}]
  %s6 = inlined_call_operand.vmem [shape: f32[1,2], index: 6, kind: input, shape index: {}]
  %s7 = inlined_call_operand.vmem [shape: f32[4,2], index: 7, kind: output, shape index: {}]
  %s8 = sld [smem:[#allocation0]]
  $region50: #{matcher_forward.1} parent=0
    _
  %s10 = ssub.s32 1, %s8
  %s11 = scalar_select 0, %s10, %s8
  $region1: #{matcher_forward.1} parent=0
    #allocation3 [shape = 'u8[2048]{0}', space=smem, size = 0x800, scoped, tag = 'input window, operand 0, single buffered']
    #allocation4 [shape = 's32[1]{0}', space=sflag, size = 0x4, scoped, tag = 'scoped memory for matcher_forward.1']
    #allocation5 [shape = 's32[1]{0}', space=sflag, size = 0x4, scoped, tag = 'scoped memory for matcher_forward.1']
    #allocation6 [shape = 'u8[2048]{0}', space=smem, size = 0x800, scoped, tag = 'input window, operand 1, single buffered']
    #allocation7 [shape = 's32[1]{0}', space=sflag, size = 0x4, scoped, tag = 'scoped memory for matcher_forward.1']
    #allocation8 [shape = 'u8[28672]{0}', space=vmem, size = 0x7000, scoped, tag = 'input window, operand 2, single buffered']
    %12 = vsyncpa [#allocation5], 0
    %13 = vsyncpa [#allocation7], 0
    %14 = vsyncpa [#allocation4], 0
    // Predicated region
    $region2: #{matcher_forward.1} parent=1 // pred_check
      _
    $region3: #{matcher_forward.1} parent=1 // pred_check_branch
      %16 = sbr.rel (0) target = $region5
    $region4: #{matcher_forward.1} parent=1 // pred_region
      %s18 = ssub.s32 64, 64
      %19 = vsyncadd [#allocation5], %s18
      %s21 = sshll.u32 %s0, 4
      %s22 = int_to_ptr.vmem [resolvable:$true] %s21
      %24 = dma.vmem_to_smem %s22, 64, [#allocation3], [#allocation5]
    $region5: #{matcher_forward.1} parent=1 // pred_fallthru
      _
    // Predicated region
    $region6: #{matcher_forward.1} parent=1 // pred_check
      _
    $region7: #{matcher_forward.1} parent=1 // pred_check_branch
      %26 = sbr.rel (0) target = $region9
    $region8: #{matcher_forward.1} parent=1 // pred_region
      %s28 = ssub.s32 64, 64
      %29 = vsyncadd [#allocation7], %s28
      %s31 = sshll.u32 %s1, 4
      %s32 = int_to_ptr.vmem [resolvable:$true] %s31
      %34 = dma.vmem_to_smem %s32, 64, [#allocation6], [#allocation7]
    $region9: #{matcher_forward.1} parent=1 // pred_fallthru
      _
    // Predicated region
    $region10: #{matcher_forward.1} parent=1 // pred_check
      _
    $region11: #{matcher_forward.1} parent=1 // pred_check_branch
      %36 = sbr.rel (0) target = $region13
    $region12: #{matcher_forward.1} parent=1 // pred_region
      %s38 = ssub.s32 896, 896
      %39 = vsyncadd [#allocation4], %s38
      %s40 = sshll.u32 [#allocation8], 4
      %s41 = int_to_ptr.vmem [resolvable:$true] %s40
      %46 = dma.hbm_to_vmem [thread:$0]  %s2, 896, %s41, [#allocation4], 128, 128, 8
    $region13: #{matcher_forward.1} parent=1 // pred_fallthru
      _
    // Predicated region
    $region14: #{matcher_forward.1} parent=1 // pred_check
      _
    $region15: #{matcher_forward.1} parent=1 // pred_check_branch
      %48 = sbr.rel (0) target = $region17
    $region16: #{matcher_forward.1} parent=1 // pred_region
      _
    $region17: #{matcher_forward.1} parent=1 // pred_fallthru
      _
    // Predicated region
    $region18: #{matcher_forward.1} parent=1 // pred_check
      _
    $region19: #{matcher_forward.1} parent=1 // pred_check_branch
      %50 = sbr.rel (0) target = $region21
    $region20: #{matcher_forward.1} parent=1 // pred_region
      _
    $region21: #{matcher_forward.1} parent=1 // pred_fallthru
      _
    // Predicated region
    $region22: #{matcher_forward.1} parent=1 // pred_check
      _
    $region23: #{matcher_forward.1} parent=1 // pred_check_branch
      %52 = sbr.rel (0) target = $region25
    $region24: #{matcher_forward.1} parent=1 // pred_region
      _
    $region25: #{matcher_forward.1} parent=1 // pred_fallthru
      _
    // Predicated region
    $region26: #{matcher_forward.1} parent=1 // pred_check
      _
    $region27: #{matcher_forward.1} parent=1 // pred_check_branch
      %54 = sbr.rel (0) target = $region29
    $region28: #{matcher_forward.1} parent=1 // pred_region
      _
    $region29: #{matcher_forward.1} parent=1 // pred_fallthru
      _
    // Predicated region
    $region30: #{matcher_forward.1} parent=1 // pred_check
      _
    $region31: #{matcher_forward.1} parent=1 // pred_check_branch
      %56 = sbr.rel (0) target = $region33
    $region32: #{matcher_forward.1} parent=1 // pred_region
      %57 = dma.done [#allocation5], 64
    $region33: #{matcher_forward.1} parent=1 // pred_fallthru
      _
    // Predicated region
    $region34: #{matcher_forward.1} parent=1 // pred_check
      _
    $region35: #{matcher_forward.1} parent=1 // pred_check_branch
      %59 = sbr.rel (0) target = $region37
    $region36: #{matcher_forward.1} parent=1 // pred_region
      %60 = dma.done [#allocation7], 64
    $region37: #{matcher_forward.1} parent=1 // pred_fallthru
      _
    // Predicated region
    $region38: #{matcher_forward.1} parent=1 // pred_check
      _
    $region39: #{matcher_forward.1} parent=1 // pred_check_branch
      %62 = sbr.rel (0) target = $region41
    $region40: #{matcher_forward.1} parent=1 // pred_region
      %63 = dma.done [#allocation4], 896
    $region41: #{matcher_forward.1} parent=1 // pred_fallthru
      _
    %64 = sfence
    %s65 = sld [smem:[#allocation3]]
    %s66 = scalar_lea.vmem [#allocation8], %s65
    %v67 = vld [vmem:[%s66] sm:$0x1]
    %68 = vst [vmem:[#allocation2] sm:$0x1] %v67
    %s69 = sld [smem:[#allocation6]]
    %s70 = scalar_lea.vmem [#allocation8], %s69
    %v71 = vld [vmem:[%s70] sm:$0x1]
    %72 = vst [vmem:[#allocation2 + $0x4] sm:$0x1] %v71
    %s73 = sld [smem:[#allocation3 + $0x80]]
    %s74 = scalar_lea.vmem [#allocation8], %s73
    %v75 = vld [vmem:[%s74] sm:$0x1]
    %76 = vst [vmem:[#allocation2 + $0x1] sm:$0x1] %v75
    %s77 = sld [smem:[#allocation6 + $0x80]]
    %s78 = scalar_lea.vmem [#allocation8], %s77
    %v79 = vld [vmem:[%s78] sm:$0x1]
    %80 = vst [vmem:[#allocation2 + $0x5] sm:$0x1] %v79
    %s81 = sld [smem:[#allocation3 + $0x100]]
    %s82 = scalar_lea.vmem [#allocation8], %s81
    %v83 = vld [vmem:[%s82] sm:$0x1]
    %84 = vst [vmem:[#allocation2 + $0x2] sm:$0x1] %v83
    %s85 = sld [smem:[#allocation6 + $0x100]]
    %s86 = scalar_lea.vmem [#allocation8], %s85
    %v87 = vld [vmem:[%s86] sm:$0x1]
    %88 = vst [vmem:[#allocation2 + $0x6] sm:$0x1] %v87
    %s89 = sld [smem:[#allocation3 + $0x180]]
    %s90 = scalar_lea.vmem [#allocation8], %s89
    %v91 = vld [vmem:[%s90] sm:$0x1]
    %92 = vst [vmem:[#allocation2 + $0x3] sm:$0x1] %v91
    %s93 = sld [smem:[#allocation6 + $0x180]]
    %s94 = scalar_lea.vmem [#allocation8], %s93
    %v95 = vld [vmem:[%s94] sm:$0x1]
    %96 = vst [vmem:[#allocation2 + $0x7] sm:$0x1] %v95
    %s97 = sld [smem:[#allocation3 + $0x1]]
    %s98 = scalar_lea.vmem [#allocation8], %s97
    %v99 = vld [vmem:[%s98] sm:$0x1]
    %s100 = scalar_lea.vmem [#allocation2], 8
    %101 = vst [vmem:[%s100] sm:$0x1] %v99
    %s102 = sld [smem:[#allocation6 + $0x1]]
    %s103 = scalar_lea.vmem [#allocation8], %s102
    %v104 = vld [vmem:[%s103] sm:$0x1]
    %105 = vst [vmem:[%s100 + $0x4] sm:$0x1] %v104
    %s106 = sld [smem:[#allocation3 + $0x81]]
    %s107 = scalar_lea.vmem [#allocation8], %s106
    %v108 = vld [vmem:[%s107] sm:$0x1]
    %109 = vst [vmem:[%s100 + $0x1] sm:$0x1] %v108
    %s110 = sld [smem:[#allocation6 + $0x81]]
    %s111 = scalar_lea.vmem [#allocation8], %s110
    %v112 = vld [vmem:[%s111] sm:$0x1]
    %113 = vst [vmem:[%s100 + $0x5] sm:$0x1] %v112
    %s114 = sld [smem:[#allocation3 + $0x101]]
    %s115 = scalar_lea.vmem [#allocation8], %s114
    %v116 = vld [vmem:[%s115] sm:$0x1]
    %117 = vst [vmem:[%s100 + $0x2] sm:$0x1] %v116
    %s118 = sld [smem:[#allocation6 + $0x101]]
    %s119 = scalar_lea.vmem [#allocation8], %s118
    %v120 = vld [vmem:[%s119] sm:$0x1]
    %121 = vst [vmem:[%s100 + $0x6] sm:$0x1] %v120
    %s122 = sld [smem:[#allocation3 + $0x181]]
    %s123 = scalar_lea.vmem [#allocation8], %s122
    %v124 = vld [vmem:[%s123] sm:$0x1]
    %125 = vst [vmem:[%s100 + $0x3] sm:$0x1] %v124
    %s126 = sld [smem:[#allocation6 + $0x181]]
    %s127 = scalar_lea.vmem [#allocation8], %s126
    %v128 = vld [vmem:[%s127] sm:$0x1]
    %129 = vst [vmem:[%s100 + $0x7] sm:$0x1] %v128
    %s130 = sld [smem:[#allocation3 + $0x2]]
    %s131 = scalar_lea.vmem [#allocation8], %s130
    %v132 = vld [vmem:[%s131] sm:$0x1]
    %s133 = scalar_lea.vmem [#allocation2], 16
    %134 = vst [vmem:[%s133] sm:$0x1] %v132
    %s135 = sld [smem:[#allocation6 + $0x2]]
    %s136 = scalar_lea.vmem [#allocation8], %s135
    %v137 = vld [vmem:[%s136] sm:$0x1]
    %138 = vst [vmem:[%s133 + $0x4] sm:$0x1] %v137
    %s139 = sld [smem:[#allocation3 + $0x82]]
    %s140 = scalar_lea.vmem [#allocation8], %s139
    %v141 = vld [vmem:[%s140] sm:$0x1]
    %142 = vst [vmem:[%s133 + $0x1] sm:$0x1] %v141
    %s143 = sld [smem:[#allocation6 + $0x82]]
    %s144 = scalar_lea.vmem [#allocation8], %s143
    %v145 = vld [vmem:[%s144] sm:$0x1]
    %146 = vst [vmem:[%s133 + $0x5] sm:$0x1] %v145
    %s147 = sld [smem:[#allocation3 + $0x102]]
    %s148 = scalar_lea.vmem [#allocation8], %s147
    %v149 = vld [vmem:[%s148] sm:$0x1]
    %150 = vst [vmem:[%s133 + $0x2] sm:$0x1] %v149
    %s151 = sld [smem:[#allocation6 + $0x102]]
    %s152 = scalar_lea.vmem [#allocation8], %s151
    %v153 = vld [vmem:[%s152] sm:$0x1]
    %154 = vst [vmem:[%s133 + $0x6] sm:$0x1] %v153
    %s155 = sld [smem:[#allocation3 + $0x182]]
    %s156 = scalar_lea.vmem [#allocation8], %s155
    %v157 = vld [vmem:[%s156] sm:$0x1]
    %158 = vst [vmem:[%s133 + $0x3] sm:$0x1] %v157
    %s159 = sld [smem:[#allocation6 + $0x182]]
    %s160 = scalar_lea.vmem [#allocation8], %s159
    %v161 = vld [vmem:[%s160] sm:$0x1]
    %162 = vst [vmem:[%s133 + $0x7] sm:$0x1] %v161
    %s163 = sld [smem:[#allocation3 + $0x3]]
    %s164 = scalar_lea.vmem [#allocation8], %s163
    %v165 = vld [vmem:[%s164] sm:$0x1]
    %s166 = scalar_lea.vmem [#allocation2], 24
    %167 = vst [vmem:[%s166] sm:$0x1] %v165
    %s168 = sld [smem:[#allocation6 + $0x3]]
    %s169 = scalar_lea.vmem [#allocation8], %s168
    %v170 = vld [vmem:[%s169] sm:$0x1]
    %171 = vst [vmem:[%s166 + $0x4] sm:$0x1] %v170
    %s172 = sld [smem:[#allocation3 + $0x83]]
    %s173 = scalar_lea.vmem [#allocation8], %s172
    %v174 = vld [vmem:[%s173] sm:$0x1]
    %175 = vst [vmem:[%s166 + $0x1] sm:$0x1] %v174
    %s176 = sld [smem:[#allocation6 + $0x83]]
    %s177 = scalar_lea.vmem [#allocation8], %s176
    %v178 = vld [vmem:[%s177] sm:$0x1]
    %179 = vst [vmem:[%s166 + $0x5] sm:$0x1] %v178
    %s180 = sld [smem:[#allocation3 + $0x103]]
    %s181 = scalar_lea.vmem [#allocation8], %s180
    %v182 = vld [vmem:[%s181] sm:$0x1]
    %183 = vst [vmem:[%s166 + $0x2] sm:$0x1] %v182
    %s184 = sld [smem:[#allocation6 + $0x103]]
    %s185 = scalar_lea.vmem [#allocation8], %s184
    %v186 = vld [vmem:[%s185] sm:$0x1]
    %187 = vst [vmem:[%s166 + $0x6] sm:$0x1] %v186
    %s188 = sld [smem:[#allocation3 + $0x183]]
    %s189 = scalar_lea.vmem [#allocation8], %s188
    %v190 = vld [vmem:[%s189] sm:$0x1]
    %191 = vst [vmem:[%s166 + $0x3] sm:$0x1] %v190
    %s192 = sld [smem:[#allocation6 + $0x183]]
    %s193 = scalar_lea.vmem [#allocation8], %s192
    %v194 = vld [vmem:[%s193] sm:$0x1]
    %195 = vst [vmem:[%s166 + $0x7] sm:$0x1] %v194
    %s196 = sld [smem:[#allocation3 + $0x4]]
    %s197 = scalar_lea.vmem [#allocation8], %s196
    %v198 = vld [vmem:[%s197] sm:$0x1]
    %s199 = scalar_lea.vmem [#allocation2], 32
    %200 = vst [vmem:[%s199] sm:$0x1] %v198
    %s201 = sld [smem:[#allocation6 + $0x4]]
    %s202 = scalar_lea.vmem [#allocation8], %s201
    %v203 = vld [vmem:[%s202] sm:$0x1]
    %204 = vst [vmem:[%s199 + $0x4] sm:$0x1] %v203
    %s205 = sld [smem:[#allocation3 + $0x84]]
    %s206 = scalar_lea.vmem [#allocation8], %s205
    %v207 = vld [vmem:[%s206] sm:$0x1]
    %208 = vst [vmem:[%s199 + $0x1] sm:$0x1] %v207
    %s209 = sld [smem:[#allocation6 + $0x84]]
    %s210 = scalar_lea.vmem [#allocation8], %s209
    %v211 = vld [vmem:[%s210] sm:$0x1]
    %212 = vst [vmem:[%s199 + $0x5] sm:$0x1] %v211
    %s213 = sld [smem:[#allocation3 + $0x104]]
    %s214 = scalar_lea.vmem [#allocation8], %s213
    %v215 = vld [vmem:[%s214] sm:$0x1]
    %216 = vst [vmem:[%s199 + $0x2] sm:$0x1] %v215
    %s217 = sld [smem:[#allocation6 + $0x104]]
    %s218 = scalar_lea.vmem [#allocation8], %s217
    %v219 = vld [vmem:[%s218] sm:$0x1]
    %220 = vst [vmem:[%s199 + $0x6] sm:$0x1] %v219
    %s221 = sld [smem:[#allocation3 + $0x184]]
    %s222 = scalar_lea.vmem [#allocation8], %s221
    %v223 = vld [vmem:[%s222] sm:$0x1]
    %224 = vst [vmem:[%s199 + $0x3] sm:$0x1] %v223
    %s225 = sld [smem:[#allocation6 + $0x184]]
    %s226 = scalar_lea.vmem [#allocation8], %s225
    %v227 = vld [vmem:[%s226] sm:$0x1]
    %228 = vst [vmem:[%s199 + $0x7] sm:$0x1] %v227
    %s229 = sld [smem:[#allocation3 + $0x5]]
    %s230 = scalar_lea.vmem [#allocation8], %s229
    %v231 = vld [vmem:[%s230] sm:$0x1]
    %s232 = scalar_lea.vmem [#allocation2], 40
    %233 = vst [vmem:[%s232] sm:$0x1] %v231
    %s234 = sld [smem:[#allocation6 + $0x5]]
    %s235 = scalar_lea.vmem [#allocation8], %s234
    %v236 = vld [vmem:[%s235] sm:$0x1]
    %237 = vst [vmem:[%s232 + $0x4] sm:$0x1] %v236
    %s238 = sld [smem:[#allocation3 + $0x85]]
    %s239 = scalar_lea.vmem [#allocation8], %s238
    %v240 = vld [vmem:[%s239] sm:$0x1]
    %241 = vst [vmem:[%s232 + $0x1] sm:$0x1] %v240
    %s242 = sld [smem:[#allocation6 + $0x85]]
    %s243 = scalar_lea.vmem [#allocation8], %s242
    %v244 = vld [vmem:[%s243] sm:$0x1]
    %245 = vst [vmem:[%s232 + $0x5] sm:$0x1] %v244
    %s246 = sld [smem:[#allocation3 + $0x105]]
    %s247 = scalar_lea.vmem [#allocation8], %s246
    %v248 = vld [vmem:[%s247] sm:$0x1]
    %249 = vst [vmem:[%s232 + $0x2] sm:$0x1] %v248
    %s250 = sld [smem:[#allocation6 + $0x105]]
    %s251 = scalar_lea.vmem [#allocation8], %s250
    %v252 = vld [vmem:[%s251] sm:$0x1]
    %253 = vst [vmem:[%s232 + $0x6] sm:$0x1] %v252
    %s254 = sld [smem:[#allocation3 + $0x185]]
    %s255 = scalar_lea.vmem [#allocation8], %s254
    %v256 = vld [vmem:[%s255] sm:$0x1]
    %257 = vst [vmem:[%s232 + $0x3] sm:$0x1] %v256
    %s258 = sld [smem:[#allocation6 + $0x185]]
    %s259 = scalar_lea.vmem [#allocation8], %s258
    %v260 = vld [vmem:[%s259] sm:$0x1]
    %261 = vst [vmem:[%s232 + $0x7] sm:$0x1] %v260
    %s262 = sld [smem:[#allocation3 + $0x6]]
    %s263 = scalar_lea.vmem [#allocation8], %s262
    %v264 = vld [vmem:[%s263] sm:$0x1]
    %s265 = scalar_lea.vmem [#allocation2], 48
    %266 = vst [vmem:[%s265] sm:$0x1] %v264
    %s267 = sld [smem:[#allocation6 + $0x6]]
    %s268 = scalar_lea.vmem [#allocation8], %s267
    %v269 = vld [vmem:[%s268] sm:$0x1]
    %270 = vst [vmem:[%s265 + $0x4] sm:$0x1] %v269
    %s271 = sld [smem:[#allocation3 + $0x86]]
    %s272 = scalar_lea.vmem [#allocation8], %s271
    %v273 = vld [vmem:[%s272] sm:$0x1]
    %274 = vst [vmem:[%s265 + $0x1] sm:$0x1] %v273
    %s275 = sld [smem:[#allocation6 + $0x86]]
    %s276 = scalar_lea.vmem [#allocation8], %s275
    %v277 = vld [vmem:[%s276] sm:$0x1]
    %278 = vst [vmem:[%s265 + $0x5] sm:$0x1] %v277
    %s279 = sld [smem:[#allocation3 + $0x106]]
    %s280 = scalar_lea.vmem [#allocation8], %s279
    %v281 = vld [vmem:[%s280] sm:$0x1]
    %282 = vst [vmem:[%s265 + $0x2] sm:$0x1] %v281
    %s283 = sld [smem:[#allocation6 + $0x106]]
    %s284 = scalar_lea.vmem [#allocation8], %s283
    %v285 = vld [vmem:[%s284] sm:$0x1]
    %286 = vst [vmem:[%s265 + $0x6] sm:$0x1] %v285
    %s287 = sld [smem:[#allocation3 + $0x186]]
    %s288 = scalar_lea.vmem [#allocation8], %s287
    %v289 = vld [vmem:[%s288] sm:$0x1]
    %290 = vst [vmem:[%s265 + $0x3] sm:$0x1] %v289
    %s291 = sld [smem:[#allocation6 + $0x186]]
    %s292 = scalar_lea.vmem [#allocation8], %s291
    %v293 = vld [vmem:[%s292] sm:$0x1]
    %294 = vst [vmem:[%s265 + $0x7] sm:$0x1] %v293
    %s295 = sld [smem:[#allocation3 + $0x7]]
    %s296 = scalar_lea.vmem [#allocation8], %s295
    %v297 = vld [vmem:[%s296] sm:$0x1]
    %s298 = scalar_lea.vmem [#allocation2], 56
    %299 = vst [vmem:[%s298] sm:$0x1] %v297
    %s300 = sld [smem:[#allocation6 + $0x7]]
    %s301 = scalar_lea.vmem [#allocation8], %s300
    %v302 = vld [vmem:[%s301] sm:$0x1]
    %303 = vst [vmem:[%s298 + $0x4] sm:$0x1] %v302
    %s304 = sld [smem:[#allocation3 + $0x87]]
    %s305 = scalar_lea.vmem [#allocation8], %s304
    %v306 = vld [vmem:[%s305] sm:$0x1]
    %307 = vst [vmem:[%s298 + $0x1] sm:$0x1] %v306
    %s308 = sld [smem:[#allocation6 + $0x87]]
    %s309 = scalar_lea.vmem [#allocation8], %s308
    %v310 = vld [vmem:[%s309] sm:$0x1]
    %311 = vst [vmem:[%s298 + $0x5] sm:$0x1] %v310
    %s312 = sld [smem:[#allocation3 + $0x107]]
    %s313 = scalar_lea.vmem [#allocation8], %s312
    %v314 = vld [vmem:[%s313] sm:$0x1]
    %315 = vst [vmem:[%s298 + $0x2] sm:$0x1] %v314
    %s316 = sld [smem:[#allocation6 + $0x107]]
    %s317 = scalar_lea.vmem [#allocation8], %s316
    %v318 = vld [vmem:[%s317] sm:$0x1]
    %319 = vst [vmem:[%s298 + $0x6] sm:$0x1] %v318
    %s320 = sld [smem:[#allocation3 + $0x187]]
    %s321 = scalar_lea.vmem [#allocation8], %s320
    %v322 = vld [vmem:[%s321] sm:$0x1]
    %323 = vst [vmem:[%s298 + $0x3] sm:$0x1] %v322
    %s324 = sld [smem:[#allocation6 + $0x187]]
    %s325 = scalar_lea.vmem [#allocation8], %s324
    %v326 = vld [vmem:[%s325] sm:$0x1]
    %327 = vst [vmem:[%s298 + $0x7] sm:$0x1] %v326
    %v328 = vld [vmem:[%s3] sm:$0xff]
    %v329 = vld [vmem:[%s3 + $0x8] sm:$0xff]
    %v330 = vld [vmem:[%s3 + $0x10] sm:$0xff]
    %v331 = vld [vmem:[%s3 + $0x18] sm:$0xff]
    %v332 = vld [vmem:[%s4] sm:$0x1]
    %v334 = vlaneseq
    %v335 = vshrl.u32 %v334, 7
    %v336 = vsub.s32 0, %v335
    %v337 = vrot.slane %v332, %v336
    %v338 = vld [vmem:[#allocation2] sm:$0xff]
    %vm339 = vcmask 261120
    %v341 = vsel %vm339, 0.0, 0
    %343 = vmatprep.subr.mxu0 0.0
    %344 = vmatpush1.msra.mxu0 0.0
    %345 = vmatprep.subr.mxu0 0.0
    %346 = vmatpush1.msra.mxu0 0.0
    %347 = vmatprep.subr.mxu0 0.0
    %348 = vmatpush1.msra.mxu0 0.0
    %349 = vmatprep.subr.mxu0 0.0
    %350 = vmatpush1.msra.mxu0 0.0
    %351 = vmatprep.subr.mxu0 0.0
    %352 = vmatpush1.msra.mxu0 0.0
    %353 = vmatprep.subr.mxu0 0.0
    %354 = vmatpush1.msra.mxu0 0.0
    %355 = vmatprep.subr.mxu0 0.0
    %356 = vmatpush1.msra.mxu0 0.0
    %357 = vmatprep.subr.mxu0 0.0
    %358 = vmatpush1.msra.mxu0 0.0
    %359 = vmatprep.subr.mxu0 0.0
    %360 = vmatpush1.msra.mxu0 0.0
    %361 = vmatprep.subr.mxu0 0.0
    %362 = vmatpush1.msra.mxu0 0.0
    %363 = vmatprep.subr.mxu0 0.0
    %364 = vmatpush1.msra.mxu0 0.0
    %365 = vmatprep.subr.mxu0 0.0
    %366 = vmatpush1.msra.mxu0 0.0
    %367 = vmatprep.subr.mxu0 0.0
    %368 = vmatpush1.msra.mxu0 %v331
    %369 = vmatprep.subr.mxu0 0.0
    %370 = vmatpush1.msra.mxu0 %v330
    %371 = vmatprep.subr.mxu0 0.0
    %372 = vmatpush1.msra.mxu0 %v329
    %373 = vmatprep.subr.mxu0 0.0
    %374 = vmatpush1.msra.mxu0 %v328
    %375 = vmatprep.subr.mxu0 0.0
    %376 = vmatpush2.msra.mxu0 0.0
    %377 = vmatprep.subr.mxu0 0.0
    %378 = vmatpush2.msra.mxu0 0.0
    %379 = vmatprep.subr.mxu0 0.0
    %380 = vmatpush2.msra.mxu0 0.0
    %381 = vmatprep.subr.mxu0 0.0
    %382 = vmatpush2.msra.mxu0 0.0
    %383 = vmatprep.subr.mxu0 0.0
    %384 = vmatpush2.msra.mxu0 0.0
    %385 = vmatprep.subr.mxu0 0.0
    %386 = vmatpush2.msra.mxu0 0.0
    %387 = vmatprep.subr.mxu0 0.0
    %388 = vmatpush2.msra.mxu0 0.0
    %389 = vmatprep.subr.mxu0 0.0
    %390 = vmatpush2.msra.mxu0 0.0
    %391 = vmatprep.subr.mxu0 0.0
    %392 = vmatpush2.msra.mxu0 0.0
    %393 = vmatprep.subr.mxu0 0.0
    %394 = vmatpush2.msra.mxu0 0.0
    %395 = vmatprep.subr.mxu0 0.0
    %396 = vmatpush2.msra.mxu0 0.0
    %397 = vmatprep.subr.mxu0 0.0
    %398 = vmatpush2.msra.mxu0 0.0
    %399 = vmatprep.subr.mxu0 0.0
    %400 = vmatpush2.msra.mxu0 0.0
    %401 = vmatprep.subr.mxu0 0.0
    %402 = vmatpush2.msra.mxu0 0.0
    %403 = vmatprep.subr.mxu0 0.0
    %404 = vmatpush2.msra.mxu0 0.0
    %405 = vmatprep.subr.mxu0 0.0
    %406 = vmatpush2.msra.mxu0 0.0
    %407 = vmatprep.mubr.f32.mxu0 0.0
    %408 = vmatmul.mubr.f32.gmra.mxu0 %v341
    %v409 = vpop.f32.mrf.mxu0
    %v410 = vadd.f32 0.0, %v409
    %v411 = vpop.f32.mrf.mxu0
    %412 = vdwg.mxu0
    %v413 = vadd.f32 %v338, %v410
    %v414 = vxor.u32 %v413, 2147483648
    %v415 = vmul.f32 %v414, 1.442695
    %v416 = vpow.pop %v415
    %v417 = vadd.f32 %v416, 1.0
    %v418 = vrcp.pop %v417
    %v419 = vmul.f32 1.0, %v418
    %420 = vrot.lane.b32.xlu0 %v337, 64
    %v421 = vpop.permute.xlu0 %420
    %v423 = vadd.f32 %v410, %v421
    %425 = vrot.lane.b32.xlu0 %v423, 64
    %v426 = vpop.permute.xlu0 %425
    %v428 = vmul.f32 %v419, %v426
    %430 = vrot.lane.b32.xlu0 %v428, 64
    %v431 = vpop.permute.xlu0 %430
    %v433 = vadd.f32 %v338, %v431
    %v434 = vtanh.pop %v433
    %v435 = vsub.f32 0.0, %v434
    %437 = vrot.lane.b32.xlu0 %v435, 96
    %v438 = vpop.permute.xlu0 %437
    %v440 = vmul.f32 %v419, %v438
    %442 = vrot.lane.b32.xlu0 %v440, 32
    %v443 = vpop.permute.xlu0 %442
    %v445 = vadd.f32 %v434, %v443
    %v446 = vld [vmem:[%s100] sm:$0xff]
    %448 = vrot.lane.b32.xlu0 %v445, 64
    %v449 = vpop.permute.xlu0 %448
    %v450 = vsel %vm339, %v449, 0
    %452 = vmatprep.subr.mxu0 0.0
    %453 = vmatpush1.msra.mxu0 0.0
    %454 = vmatprep.subr.mxu0 0.0
    %455 = vmatpush1.msra.mxu0 0.0
    %456 = vmatprep.subr.mxu0 0.0
    %457 = vmatpush1.msra.mxu0 0.0
    %458 = vmatprep.subr.mxu0 0.0
    %459 = vmatpush1.msra.mxu0 0.0
    %460 = vmatprep.subr.mxu0 0.0
    %461 = vmatpush1.msra.mxu0 0.0
    %462 = vmatprep.subr.mxu0 0.0
    %463 = vmatpush1.msra.mxu0 0.0
    %464 = vmatprep.subr.mxu0 0.0
    %465 = vmatpush1.msra.mxu0 0.0
    %466 = vmatprep.subr.mxu0 0.0
    %467 = vmatpush1.msra.mxu0 0.0
    %468 = vmatprep.subr.mxu0 0.0
    %469 = vmatpush1.msra.mxu0 0.0
    %470 = vmatprep.subr.mxu0 0.0
    %471 = vmatpush1.msra.mxu0 0.0
    %472 = vmatprep.subr.mxu0 0.0
    %473 = vmatpush1.msra.mxu0 0.0
    %474 = vmatprep.subr.mxu0 0.0
    %475 = vmatpush1.msra.mxu0 0.0
    %476 = vmatprep.subr.mxu0 0.0
    %477 = vmatpush1.msra.mxu0 %v331
    %478 = vmatprep.subr.mxu0 0.0
    %479 = vmatpush1.msra.mxu0 %v330
    %480 = vmatprep.subr.mxu0 0.0
    %481 = vmatpush1.msra.mxu0 %v329
    %482 = vmatprep.subr.mxu0 0.0
    %483 = vmatpush1.msra.mxu0 %v328
    %484 = vmatprep.subr.mxu0 0.0
    %485 = vmatpush2.msra.mxu0 0.0
    %486 = vmatprep.subr.mxu0 0.0
    %487 = vmatpush2.msra.mxu0 0.0
    %488 = vmatprep.subr.mxu0 0.0
    %489 = vmatpush2.msra.mxu0 0.0
    %490 = vmatprep.subr.mxu0 0.0
    %491 = vmatpush2.msra.mxu0 0.0
    %492 = vmatprep.subr.mxu0 0.0
    %493 = vmatpush2.msra.mxu0 0.0
    %494 = vmatprep.subr.mxu0 0.0
    %495 = vmatpush2.msra.mxu0 0.0
    %496 = vmatprep.subr.mxu0 0.0
    %497 = vmatpush2.msra.mxu0 0.0
    %498 = vmatprep.subr.mxu0 0.0
    %499 = vmatpush2.msra.mxu0 0.0
    %500 = vmatprep.subr.mxu0 0.0
    %501 = vmatpush2.msra.mxu0 0.0
    %502 = vmatprep.subr.mxu0 0.0
    %503 = vmatpush2.msra.mxu0 0.0
    %504 = vmatprep.subr.mxu0 0.0
    %505 = vmatpush2.msra.mxu0 0.0
    %506 = vmatprep.subr.mxu0 0.0
    %507 = vmatpush2.msra.mxu0 0.0
    %508 = vmatprep.subr.mxu0 0.0
    %509 = vmatpush2.msra.mxu0 0.0
    %510 = vmatprep.subr.mxu0 0.0
    %511 = vmatpush2.msra.mxu0 0.0
    %512 = vmatprep.subr.mxu0 0.0
    %513 = vmatpush2.msra.mxu0 0.0
    %514 = vmatprep.subr.mxu0 0.0
    %515 = vmatpush2.msra.mxu0 0.0
    %516 = vmatprep.mubr.f32.mxu0 0.0
    %517 = vmatmul.mubr.f32.gmra.mxu0 %v450
    %v518 = vpop.f32.mrf.mxu0
    %v519 = vadd.f32 0.0, %v518
    %v520 = vpop.f32.mrf.mxu0
    %521 = vdwg.mxu0
    %v522 = vadd.f32 %v446, %v519
    %v523 = vxor.u32 %v522, 2147483648
    %v524 = vmul.f32 %v523, 1.442695
    %v525 = vpow.pop %v524
    %v526 = vadd.f32 %v525, 1.0
    %v527 = vrcp.pop %v526
    %v528 = vmul.f32 1.0, %v527
    %v529 = vadd.f32 %v519, %v421
    %531 = vrot.lane.b32.xlu0 %v529, 64
    %v532 = vpop.permute.xlu0 %531
    %v534 = vmul.f32 %v528, %v532
    %536 = vrot.lane.b32.xlu0 %v534, 64
    %v537 = vpop.permute.xlu0 %536
    %v539 = vadd.f32 %v446, %v537
    %v540 = vtanh.pop %v539
    %v541 = vsub.f32 %v445, %v540
    %543 = vrot.lane.b32.xlu0 %v541, 96
    %v544 = vpop.permute.xlu0 %543
    %v546 = vmul.f32 %v528, %v544
    %548 = vrot.lane.b32.xlu0 %v546, 32
    %v549 = vpop.permute.xlu0 %548
    %v551 = vadd.f32 %v540, %v549
    %v552 = vld [vmem:[%s133] sm:$0xff]
    %554 = vrot.lane.b32.xlu0 %v551, 64
    %v555 = vpop.permute.xlu0 %554
    %v556 = vsel %vm339, %v555, 0
    %558 = vmatprep.subr.mxu0 0.0
    %559 = vmatpush1.msra.mxu0 0.0
    %560 = vmatprep.subr.mxu0 0.0
    %561 = vmatpush1.msra.mxu0 0.0
    %562 = vmatprep.subr.mxu0 0.0
    %563 = vmatpush1.msra.mxu0 0.0
    %564 = vmatprep.subr.mxu0 0.0
    %565 = vmatpush1.msra.mxu0 0.0
    %566 = vmatprep.subr.mxu0 0.0
    %567 = vmatpush1.msra.mxu0 0.0
    %568 = vmatprep.subr.mxu0 0.0
    %569 = vmatpush1.msra.mxu0 0.0
    %570 = vmatprep.subr.mxu0 0.0
    %571 = vmatpush1.msra.mxu0 0.0
    %572 = vmatprep.subr.mxu0 0.0
    %573 = vmatpush1.msra.mxu0 0.0
    %574 = vmatprep.subr.mxu0 0.0
    %575 = vmatpush1.msra.mxu0 0.0
    %576 = vmatprep.subr.mxu0 0.0
    %577 = vmatpush1.msra.mxu0 0.0
    %578 = vmatprep.subr.mxu0 0.0
    %579 = vmatpush1.msra.mxu0 0.0
    %580 = vmatprep.subr.mxu0 0.0
    %581 = vmatpush1.msra.mxu0 0.0
    %582 = vmatprep.subr.mxu0 0.0
    %583 = vmatpush1.msra.mxu0 %v331
    %584 = vmatprep.subr.mxu0 0.0
    %585 = vmatpush1.msra.mxu0 %v330
    %586 = vmatprep.subr.mxu0 0.0
    %587 = vmatpush1.msra.mxu0 %v329
    %588 = vmatprep.subr.mxu0 0.0
    %589 = vmatpush1.msra.mxu0 %v328
    %590 = vmatprep.subr.mxu0 0.0
    %591 = vmatpush2.msra.mxu0 0.0
    %592 = vmatprep.subr.mxu0 0.0
    %593 = vmatpush2.msra.mxu0 0.0
    %594 = vmatprep.subr.mxu0 0.0
    %595 = vmatpush2.msra.mxu0 0.0
    %596 = vmatprep.subr.mxu0 0.0
    %597 = vmatpush2.msra.mxu0 0.0
    %598 = vmatprep.subr.mxu0 0.0
    %599 = vmatpush2.msra.mxu0 0.0
    %600 = vmatprep.subr.mxu0 0.0
    %601 = vmatpush2.msra.mxu0 0.0
    %602 = vmatprep.subr.mxu0 0.0
    %603 = vmatpush2.msra.mxu0 0.0
    %604 = vmatprep.subr.mxu0 0.0
    %605 = vmatpush2.msra.mxu0 0.0
    %606 = vmatprep.subr.mxu0 0.0
    %607 = vmatpush2.msra.mxu0 0.0
    %608 = vmatprep.subr.mxu0 0.0
    %609 = vmatpush2.msra.mxu0 0.0
    %610 = vmatprep.subr.mxu0 0.0
    %611 = vmatpush2.msra.mxu0 0.0
    %612 = vmatprep.subr.mxu0 0.0
    %613 = vmatpush2.msra.mxu0 0.0
    %614 = vmatprep.subr.mxu0 0.0
    %615 = vmatpush2.msra.mxu0 0.0
    %616 = vmatprep.subr.mxu0 0.0
    %617 = vmatpush2.msra.mxu0 0.0
    %618 = vmatprep.subr.mxu0 0.0
    %619 = vmatpush2.msra.mxu0 0.0
    %620 = vmatprep.subr.mxu0 0.0
    %621 = vmatpush2.msra.mxu0 0.0
    %622 = vmatprep.mubr.f32.mxu0 0.0
    %623 = vmatmul.mubr.f32.gmra.mxu0 %v556
    %v624 = vpop.f32.mrf.mxu0
    %v625 = vadd.f32 0.0, %v624
    %v626 = vpop.f32.mrf.mxu0
    %627 = vdwg.mxu0
    %v628 = vadd.f32 %v552, %v625
    %v629 = vxor.u32 %v628, 2147483648
    %v630 = vmul.f32 %v629, 1.442695
    %v631 = vpow.pop %v630
    %v632 = vadd.f32 %v631, 1.0
    %v633 = vrcp.pop %v632
    %v634 = vmul.f32 1.0, %v633
    %v635 = vadd.f32 %v625, %v421
    %637 = vrot.lane.b32.xlu0 %v635, 64
    %v638 = vpop.permute.xlu0 %637
    %v640 = vmul.f32 %v634, %v638
    %642 = vrot.lane.b32.xlu0 %v640, 64
    %v643 = vpop.permute.xlu0 %642
    %v645 = vadd.f32 %v552, %v643
    %v646 = vtanh.pop %v645
    %v647 = vsub.f32 %v551, %v646
    %649 = vrot.lane.b32.xlu0 %v647, 96
    %v650 = vpop.permute.xlu0 %649
    %v652 = vmul.f32 %v634, %v650
    %654 = vrot.lane.b32.xlu0 %v652, 32
    %v655 = vpop.permute.xlu0 %654
    %v657 = vadd.f32 %v646, %v655
    %v658 = vld [vmem:[%s166] sm:$0xff]
    %660 = vrot.lane.b32.xlu0 %v657, 64
    %v661 = vpop.permute.xlu0 %660
    %v662 = vsel %vm339, %v661, 0
    %664 = vmatprep.subr.mxu0 0.0
    %665 = vmatpush1.msra.mxu0 0.0
    %666 = vmatprep.subr.mxu0 0.0
    %667 = vmatpush1.msra.mxu0 0.0
    %668 = vmatprep.subr.mxu0 0.0
    %669 = vmatpush1.msra.mxu0 0.0
    %670 = vmatprep.subr.mxu0 0.0
    %671 = vmatpush1.msra.mxu0 0.0
    %672 = vmatprep.subr.mxu0 0.0
    %673 = vmatpush1.msra.mxu0 0.0
    %674 = vmatprep.subr.mxu0 0.0
    %675 = vmatpush1.msra.mxu0 0.0
    %676 = vmatprep.subr.mxu0 0.0
    %677 = vmatpush1.msra.mxu0 0.0
    %678 = vmatprep.subr.mxu0 0.0
    %679 = vmatpush1.msra.mxu0 0.0
    %680 = vmatprep.subr.mxu0 0.0
    %681 = vmatpush1.msra.mxu0 0.0
    %682 = vmatprep.subr.mxu0 0.0
    %683 = vmatpush1.msra.mxu0 0.0
    %684 = vmatprep.subr.mxu0 0.0
    %685 = vmatpush1.msra.mxu0 0.0
    %686 = vmatprep.subr.mxu0 0.0
    %687 = vmatpush1.msra.mxu0 0.0
    %688 = vmatprep.subr.mxu0 0.0
    %689 = vmatpush1.msra.mxu0 %v331
    %690 = vmatprep.subr.mxu0 0.0
    %691 = vmatpush1.msra.mxu0 %v330
    %692 = vmatprep.subr.mxu0 0.0
    %693 = vmatpush1.msra.mxu0 %v329
    %694 = vmatprep.subr.mxu0 0.0
    %695 = vmatpush1.msra.mxu0 %v328
    %696 = vmatprep.subr.mxu0 0.0
    %697 = vmatpush2.msra.mxu0 0.0
    %698 = vmatprep.subr.mxu0 0.0
    %699 = vmatpush2.msra.mxu0 0.0
    %700 = vmatprep.subr.mxu0 0.0
    %701 = vmatpush2.msra.mxu0 0.0
    %702 = vmatprep.subr.mxu0 0.0
    %703 = vmatpush2.msra.mxu0 0.0
    %704 = vmatprep.subr.mxu0 0.0
    %705 = vmatpush2.msra.mxu0 0.0
    %706 = vmatprep.subr.mxu0 0.0
    %707 = vmatpush2.msra.mxu0 0.0
    %708 = vmatprep.subr.mxu0 0.0
    %709 = vmatpush2.msra.mxu0 0.0
    %710 = vmatprep.subr.mxu0 0.0
    %711 = vmatpush2.msra.mxu0 0.0
    %712 = vmatprep.subr.mxu0 0.0
    %713 = vmatpush2.msra.mxu0 0.0
    %714 = vmatprep.subr.mxu0 0.0
    %715 = vmatpush2.msra.mxu0 0.0
    %716 = vmatprep.subr.mxu0 0.0
    %717 = vmatpush2.msra.mxu0 0.0
    %718 = vmatprep.subr.mxu0 0.0
    %719 = vmatpush2.msra.mxu0 0.0
    %720 = vmatprep.subr.mxu0 0.0
    %721 = vmatpush2.msra.mxu0 0.0
    %722 = vmatprep.subr.mxu0 0.0
    %723 = vmatpush2.msra.mxu0 0.0
    %724 = vmatprep.subr.mxu0 0.0
    %725 = vmatpush2.msra.mxu0 0.0
    %726 = vmatprep.subr.mxu0 0.0
    %727 = vmatpush2.msra.mxu0 0.0
    %728 = vmatprep.mubr.f32.mxu0 0.0
    %729 = vmatmul.mubr.f32.gmra.mxu0 %v662
    %v730 = vpop.f32.mrf.mxu0
    %v731 = vadd.f32 0.0, %v730
    %v732 = vpop.f32.mrf.mxu0
    %733 = vdwg.mxu0
    %v734 = vadd.f32 %v658, %v731
    %v735 = vxor.u32 %v734, 2147483648
    %v736 = vmul.f32 %v735, 1.442695
    %v737 = vpow.pop %v736
    %v738 = vadd.f32 %v737, 1.0
    %v739 = vrcp.pop %v738
    %v740 = vmul.f32 1.0, %v739
    %v741 = vadd.f32 %v731, %v421
    %743 = vrot.lane.b32.xlu0 %v741, 64
    %v744 = vpop.permute.xlu0 %743
    %v746 = vmul.f32 %v740, %v744
    %748 = vrot.lane.b32.xlu0 %v746, 64
    %v749 = vpop.permute.xlu0 %748
    %v751 = vadd.f32 %v658, %v749
    %v752 = vtanh.pop %v751
    %v753 = vsub.f32 %v657, %v752
    %755 = vrot.lane.b32.xlu0 %v753, 96
    %v756 = vpop.permute.xlu0 %755
    %v758 = vmul.f32 %v740, %v756
    %760 = vrot.lane.b32.xlu0 %v758, 32
    %v761 = vpop.permute.xlu0 %760
    %v763 = vadd.f32 %v752, %v761
    %v764 = vld [vmem:[%s199] sm:$0xff]
    %766 = vrot.lane.b32.xlu0 %v763, 64
    %v767 = vpop.permute.xlu0 %766
    %v768 = vsel %vm339, %v767, 0
    %770 = vmatprep.subr.mxu0 0.0
    %771 = vmatpush1.msra.mxu0 0.0
    %772 = vmatprep.subr.mxu0 0.0
    %773 = vmatpush1.msra.mxu0 0.0
    %774 = vmatprep.subr.mxu0 0.0
    %775 = vmatpush1.msra.mxu0 0.0
    %776 = vmatprep.subr.mxu0 0.0
    %777 = vmatpush1.msra.mxu0 0.0
    %778 = vmatprep.subr.mxu0 0.0
    %779 = vmatpush1.msra.mxu0 0.0
    %780 = vmatprep.subr.mxu0 0.0
    %781 = vmatpush1.msra.mxu0 0.0
    %782 = vmatprep.subr.mxu0 0.0
    %783 = vmatpush1.msra.mxu0 0.0
    %784 = vmatprep.subr.mxu0 0.0
    %785 = vmatpush1.msra.mxu0 0.0
    %786 = vmatprep.subr.mxu0 0.0
    %787 = vmatpush1.msra.mxu0 0.0
    %788 = vmatprep.subr.mxu0 0.0
    %789 = vmatpush1.msra.mxu0 0.0
    %790 = vmatprep.subr.mxu0 0.0
    %791 = vmatpush1.msra.mxu0 0.0
    %792 = vmatprep.subr.mxu0 0.0
    %793 = vmatpush1.msra.mxu0 0.0
    %794 = vmatprep.subr.mxu0 0.0
    %795 = vmatpush1.msra.mxu0 %v331
    %796 = vmatprep.subr.mxu0 0.0
    %797 = vmatpush1.msra.mxu0 %v330
    %798 = vmatprep.subr.mxu0 0.0
    %799 = vmatpush1.msra.mxu0 %v329
    %800 = vmatprep.subr.mxu0 0.0
    %801 = vmatpush1.msra.mxu0 %v328
    %802 = vmatprep.subr.mxu0 0.0
    %803 = vmatpush2.msra.mxu0 0.0
    %804 = vmatprep.subr.mxu0 0.0
    %805 = vmatpush2.msra.mxu0 0.0
    %806 = vmatprep.subr.mxu0 0.0
    %807 = vmatpush2.msra.mxu0 0.0
    %808 = vmatprep.subr.mxu0 0.0
    %809 = vmatpush2.msra.mxu0 0.0
    %810 = vmatprep.subr.mxu0 0.0
    %811 = vmatpush2.msra.mxu0 0.0
    %812 = vmatprep.subr.mxu0 0.0
    %813 = vmatpush2.msra.mxu0 0.0
    %814 = vmatprep.subr.mxu0 0.0
    %815 = vmatpush2.msra.mxu0 0.0
    %816 = vmatprep.subr.mxu0 0.0
    %817 = vmatpush2.msra.mxu0 0.0
    %818 = vmatprep.subr.mxu0 0.0
    %819 = vmatpush2.msra.mxu0 0.0
    %820 = vmatprep.subr.mxu0 0.0
    %821 = vmatpush2.msra.mxu0 0.0
    %822 = vmatprep.subr.mxu0 0.0
    %823 = vmatpush2.msra.mxu0 0.0
    %824 = vmatprep.subr.mxu0 0.0
    %825 = vmatpush2.msra.mxu0 0.0
    %826 = vmatprep.subr.mxu0 0.0
    %827 = vmatpush2.msra.mxu0 0.0
    %828 = vmatprep.subr.mxu0 0.0
    %829 = vmatpush2.msra.mxu0 0.0
    %830 = vmatprep.subr.mxu0 0.0
    %831 = vmatpush2.msra.mxu0 0.0
    %832 = vmatprep.subr.mxu0 0.0
    %833 = vmatpush2.msra.mxu0 0.0
    %834 = vmatprep.mubr.f32.mxu0 0.0
    %835 = vmatmul.mubr.f32.gmra.mxu0 %v768
    %v836 = vpop.f32.mrf.mxu0
    %v837 = vadd.f32 0.0, %v836
    %v838 = vpop.f32.mrf.mxu0
    %839 = vdwg.mxu0
    %v840 = vadd.f32 %v764, %v837
    %v841 = vxor.u32 %v840, 2147483648
    %v842 = vmul.f32 %v841, 1.442695
    %v843 = vpow.pop %v842
    %v844 = vadd.f32 %v843, 1.0
    %v845 = vrcp.pop %v844
    %v846 = vmul.f32 1.0, %v845
    %v847 = vadd.f32 %v837, %v421
    %849 = vrot.lane.b32.xlu0 %v847, 64
    %v850 = vpop.permute.xlu0 %849
    %v852 = vmul.f32 %v846, %v850
    %854 = vrot.lane.b32.xlu0 %v852, 64
    %v855 = vpop.permute.xlu0 %854
    %v857 = vadd.f32 %v764, %v855
    %v858 = vtanh.pop %v857
    %v859 = vsub.f32 %v763, %v858
    %861 = vrot.lane.b32.xlu0 %v859, 96
    %v862 = vpop.permute.xlu0 %861
    %v864 = vmul.f32 %v846, %v862
    %866 = vrot.lane.b32.xlu0 %v864, 32
    %v867 = vpop.permute.xlu0 %866
    %v869 = vadd.f32 %v858, %v867
    %v870 = vld [vmem:[%s232] sm:$0xff]
    %872 = vrot.lane.b32.xlu0 %v869, 64
    %v873 = vpop.permute.xlu0 %872
    %v874 = vsel %vm339, %v873, 0
    %876 = vmatprep.subr.mxu0 0.0
    %877 = vmatpush1.msra.mxu0 0.0
    %878 = vmatprep.subr.mxu0 0.0
    %879 = vmatpush1.msra.mxu0 0.0
    %880 = vmatprep.subr.mxu0 0.0
    %881 = vmatpush1.msra.mxu0 0.0
    %882 = vmatprep.subr.mxu0 0.0
    %883 = vmatpush1.msra.mxu0 0.0
    %884 = vmatprep.subr.mxu0 0.0
    %885 = vmatpush1.msra.mxu0 0.0
    %886 = vmatprep.subr.mxu0 0.0
    %887 = vmatpush1.msra.mxu0 0.0
    %888 = vmatprep.subr.mxu0 0.0
    %889 = vmatpush1.msra.mxu0 0.0
    %890 = vmatprep.subr.mxu0 0.0
    %891 = vmatpush1.msra.mxu0 0.0
    %892 = vmatprep.subr.mxu0 0.0
    %893 = vmatpush1.msra.mxu0 0.0
    %894 = vmatprep.subr.mxu0 0.0
    %895 = vmatpush1.msra.mxu0 0.0
    %896 = vmatprep.subr.mxu0 0.0
    %897 = vmatpush1.msra.mxu0 0.0
    %898 = vmatprep.subr.mxu0 0.0
    %899 = vmatpush1.msra.mxu0 0.0
    %900 = vmatprep.subr.mxu0 0.0
    %901 = vmatpush1.msra.mxu0 %v331
    %902 = vmatprep.subr.mxu0 0.0
    %903 = vmatpush1.msra.mxu0 %v330
    %904 = vmatprep.subr.mxu0 0.0
    %905 = vmatpush1.msra.mxu0 %v329
    %906 = vmatprep.subr.mxu0 0.0
    %907 = vmatpush1.msra.mxu0 %v328
    %908 = vmatprep.subr.mxu0 0.0
    %909 = vmatpush2.msra.mxu0 0.0
    %910 = vmatprep.subr.mxu0 0.0
    %911 = vmatpush2.msra.mxu0 0.0
    %912 = vmatprep.subr.mxu0 0.0
    %913 = vmatpush2.msra.mxu0 0.0
    %914 = vmatprep.subr.mxu0 0.0
    %915 = vmatpush2.msra.mxu0 0.0
    %916 = vmatprep.subr.mxu0 0.0
    %917 = vmatpush2.msra.mxu0 0.0
    %918 = vmatprep.subr.mxu0 0.0
    %919 = vmatpush2.msra.mxu0 0.0
    %920 = vmatprep.subr.mxu0 0.0
    %921 = vmatpush2.msra.mxu0 0.0
    %922 = vmatprep.subr.mxu0 0.0
    %923 = vmatpush2.msra.mxu0 0.0
    %924 = vmatprep.subr.mxu0 0.0
    %925 = vmatpush2.msra.mxu0 0.0
    %926 = vmatprep.subr.mxu0 0.0
    %927 = vmatpush2.msra.mxu0 0.0
    %928 = vmatprep.subr.mxu0 0.0
    %929 = vmatpush2.msra.mxu0 0.0
    %930 = vmatprep.subr.mxu0 0.0
    %931 = vmatpush2.msra.mxu0 0.0
    %932 = vmatprep.subr.mxu0 0.0
    %933 = vmatpush2.msra.mxu0 0.0
    %934 = vmatprep.subr.mxu0 0.0
    %935 = vmatpush2.msra.mxu0 0.0
    %936 = vmatprep.subr.mxu0 0.0
    %937 = vmatpush2.msra.mxu0 0.0
    %938 = vmatprep.subr.mxu0 0.0
    %939 = vmatpush2.msra.mxu0 0.0
    %940 = vmatprep.mubr.f32.mxu0 0.0
    %941 = vmatmul.mubr.f32.gmra.mxu0 %v874
    %v942 = vpop.f32.mrf.mxu0
    %v943 = vadd.f32 0.0, %v942
    %v944 = vpop.f32.mrf.mxu0
    %945 = vdwg.mxu0
    %v946 = vadd.f32 %v870, %v943
    %v947 = vxor.u32 %v946, 2147483648
    %v948 = vmul.f32 %v947, 1.442695
    %v949 = vpow.pop %v948
    %v950 = vadd.f32 %v949, 1.0
    %v951 = vrcp.pop %v950
    %v952 = vmul.f32 1.0, %v951
    %v953 = vadd.f32 %v943, %v421
    %955 = vrot.lane.b32.xlu0 %v953, 64
    %v956 = vpop.permute.xlu0 %955
    %v958 = vmul.f32 %v952, %v956
    %960 = vrot.lane.b32.xlu0 %v958, 64
    %v961 = vpop.permute.xlu0 %960
    %v963 = vadd.f32 %v870, %v961
    %v964 = vtanh.pop %v963
    %v965 = vsub.f32 %v869, %v964
    %967 = vrot.lane.b32.xlu0 %v965, 96
    %v968 = vpop.permute.xlu0 %967
    %v970 = vmul.f32 %v952, %v968
    %972 = vrot.lane.b32.xlu0 %v970, 32
    %v973 = vpop.permute.xlu0 %972
    %v975 = vadd.f32 %v964, %v973
    %v976 = vld [vmem:[%s265] sm:$0xff]
    %978 = vrot.lane.b32.xlu0 %v975, 64
    %v979 = vpop.permute.xlu0 %978
    %v980 = vsel %vm339, %v979, 0
    %982 = vmatprep.subr.mxu0 0.0
    %983 = vmatpush1.msra.mxu0 0.0
    %984 = vmatprep.subr.mxu0 0.0
    %985 = vmatpush1.msra.mxu0 0.0
    %986 = vmatprep.subr.mxu0 0.0
    %987 = vmatpush1.msra.mxu0 0.0
    %988 = vmatprep.subr.mxu0 0.0
    %989 = vmatpush1.msra.mxu0 0.0
    %990 = vmatprep.subr.mxu0 0.0
    %991 = vmatpush1.msra.mxu0 0.0
    %992 = vmatprep.subr.mxu0 0.0
    %993 = vmatpush1.msra.mxu0 0.0
    %994 = vmatprep.subr.mxu0 0.0
    %995 = vmatpush1.msra.mxu0 0.0
    %996 = vmatprep.subr.mxu0 0.0
    %997 = vmatpush1.msra.mxu0 0.0
    %998 = vmatprep.subr.mxu0 0.0
    %999 = vmatpush1.msra.mxu0 0.0
    %1000 = vmatprep.subr.mxu0 0.0
    %1001 = vmatpush1.msra.mxu0 0.0
    %1002 = vmatprep.subr.mxu0 0.0
    %1003 = vmatpush1.msra.mxu0 0.0
    %1004 = vmatprep.subr.mxu0 0.0
    %1005 = vmatpush1.msra.mxu0 0.0
    %1006 = vmatprep.subr.mxu0 0.0
    %1007 = vmatpush1.msra.mxu0 %v331
    %1008 = vmatprep.subr.mxu0 0.0
    %1009 = vmatpush1.msra.mxu0 %v330
    %1010 = vmatprep.subr.mxu0 0.0
    %1011 = vmatpush1.msra.mxu0 %v329
    %1012 = vmatprep.subr.mxu0 0.0
    %1013 = vmatpush1.msra.mxu0 %v328
    %1014 = vmatprep.subr.mxu0 0.0
    %1015 = vmatpush2.msra.mxu0 0.0
    %1016 = vmatprep.subr.mxu0 0.0
    %1017 = vmatpush2.msra.mxu0 0.0
    %1018 = vmatprep.subr.mxu0 0.0
    %1019 = vmatpush2.msra.mxu0 0.0
    %1020 = vmatprep.subr.mxu0 0.0
    %1021 = vmatpush2.msra.mxu0 0.0
    %1022 = vmatprep.subr.mxu0 0.0
    %1023 = vmatpush2.msra.mxu0 0.0
    %1024 = vmatprep.subr.mxu0 0.0
    %1025 = vmatpush2.msra.mxu0 0.0
    %1026 = vmatprep.subr.mxu0 0.0
    %1027 = vmatpush2.msra.mxu0 0.0
    %1028 = vmatprep.subr.mxu0 0.0
    %1029 = vmatpush2.msra.mxu0 0.0
    %1030 = vmatprep.subr.mxu0 0.0
    %1031 = vmatpush2.msra.mxu0 0.0
    %1032 = vmatprep.subr.mxu0 0.0
    %1033 = vmatpush2.msra.mxu0 0.0
    %1034 = vmatprep.subr.mxu0 0.0
    %1035 = vmatpush2.msra.mxu0 0.0
    %1036 = vmatprep.subr.mxu0 0.0
    %1037 = vmatpush2.msra.mxu0 0.0
    %1038 = vmatprep.subr.mxu0 0.0
    %1039 = vmatpush2.msra.mxu0 0.0
    %1040 = vmatprep.subr.mxu0 0.0
    %1041 = vmatpush2.msra.mxu0 0.0
    %1042 = vmatprep.subr.mxu0 0.0
    %1043 = vmatpush2.msra.mxu0 0.0
    %1044 = vmatprep.subr.mxu0 0.0
    %1045 = vmatpush2.msra.mxu0 0.0
    %1046 = vmatprep.mubr.f32.mxu0 0.0
    %1047 = vmatmul.mubr.f32.gmra.mxu0 %v980
    %v1048 = vpop.f32.mrf.mxu0
    %v1049 = vadd.f32 0.0, %v1048
    %v1050 = vpop.f32.mrf.mxu0
    %1051 = vdwg.mxu0
    %v1052 = vadd.f32 %v976, %v1049
    %v1053 = vxor.u32 %v1052, 2147483648
    %v1054 = vmul.f32 %v1053, 1.442695
    %v1055 = vpow.pop %v1054
    %v1056 = vadd.f32 %v1055, 1.0
    %v1057 = vrcp.pop %v1056
    %v1058 = vmul.f32 1.0, %v1057
    %v1059 = vadd.f32 %v1049, %v421
    %1061 = vrot.lane.b32.xlu0 %v1059, 64
    %v1062 = vpop.permute.xlu0 %1061
    %v1064 = vmul.f32 %v1058, %v1062
    %1066 = vrot.lane.b32.xlu0 %v1064, 64
    %v1067 = vpop.permute.xlu0 %1066
    %v1069 = vadd.f32 %v976, %v1067
    %v1070 = vtanh.pop %v1069
    %v1071 = vsub.f32 %v975, %v1070
    %1073 = vrot.lane.b32.xlu0 %v1071, 96
    %v1074 = vpop.permute.xlu0 %1073
    %v1076 = vmul.f32 %v1058, %v1074
    %1078 = vrot.lane.b32.xlu0 %v1076, 32
    %v1079 = vpop.permute.xlu0 %1078
    %v1081 = vadd.f32 %v1070, %v1079
    %v1082 = vld [vmem:[%s298] sm:$0xff]
    %1084 = vrot.lane.b32.xlu0 %v1081, 64
    %v1085 = vpop.permute.xlu0 %1084
    %v1086 = vsel %vm339, %v1085, 0
    %1088 = vmatprep.subr.mxu0 0.0
    %1089 = vmatpush1.msra.mxu0 0.0
    %1090 = vmatprep.subr.mxu0 0.0
    %1091 = vmatpush1.msra.mxu0 0.0
    %1092 = vmatprep.subr.mxu0 0.0
    %1093 = vmatpush1.msra.mxu0 0.0
    %1094 = vmatprep.subr.mxu0 0.0
    %1095 = vmatpush1.msra.mxu0 0.0
    %1096 = vmatprep.subr.mxu0 0.0
    %1097 = vmatpush1.msra.mxu0 0.0
    %1098 = vmatprep.subr.mxu0 0.0
    %1099 = vmatpush1.msra.mxu0 0.0
    %1100 = vmatprep.subr.mxu0 0.0
    %1101 = vmatpush1.msra.mxu0 0.0
    %1102 = vmatprep.subr.mxu0 0.0
    %1103 = vmatpush1.msra.mxu0 0.0
    %1104 = vmatprep.subr.mxu0 0.0
    %1105 = vmatpush1.msra.mxu0 0.0
    %1106 = vmatprep.subr.mxu0 0.0
    %1107 = vmatpush1.msra.mxu0 0.0
    %1108 = vmatprep.subr.mxu0 0.0
    %1109 = vmatpush1.msra.mxu0 0.0
    %1110 = vmatprep.subr.mxu0 0.0
    %1111 = vmatpush1.msra.mxu0 0.0
    %1112 = vmatprep.subr.mxu0 0.0
    %1113 = vmatpush1.msra.mxu0 %v331
    %1114 = vmatprep.subr.mxu0 0.0
    %1115 = vmatpush1.msra.mxu0 %v330
    %1116 = vmatprep.subr.mxu0 0.0
    %1117 = vmatpush1.msra.mxu0 %v329
    %1118 = vmatprep.subr.mxu0 0.0
    %1119 = vmatpush1.msra.mxu0 %v328
    %1120 = vmatprep.subr.mxu0 0.0
    %1121 = vmatpush2.msra.mxu0 0.0
    %1122 = vmatprep.subr.mxu0 0.0
    %1123 = vmatpush2.msra.mxu0 0.0
    %1124 = vmatprep.subr.mxu0 0.0
    %1125 = vmatpush2.msra.mxu0 0.0
    %1126 = vmatprep.subr.mxu0 0.0
    %1127 = vmatpush2.msra.mxu0 0.0
    %1128 = vmatprep.subr.mxu0 0.0
    %1129 = vmatpush2.msra.mxu0 0.0
    %1130 = vmatprep.subr.mxu0 0.0
    %1131 = vmatpush2.msra.mxu0 0.0
    %1132 = vmatprep.subr.mxu0 0.0
    %1133 = vmatpush2.msra.mxu0 0.0
    %1134 = vmatprep.subr.mxu0 0.0
    %1135 = vmatpush2.msra.mxu0 0.0
    %1136 = vmatprep.subr.mxu0 0.0
    %1137 = vmatpush2.msra.mxu0 0.0
    %1138 = vmatprep.subr.mxu0 0.0
    %1139 = vmatpush2.msra.mxu0 0.0
    %1140 = vmatprep.subr.mxu0 0.0
    %1141 = vmatpush2.msra.mxu0 0.0
    %1142 = vmatprep.subr.mxu0 0.0
    %1143 = vmatpush2.msra.mxu0 0.0
    %1144 = vmatprep.subr.mxu0 0.0
    %1145 = vmatpush2.msra.mxu0 0.0
    %1146 = vmatprep.subr.mxu0 0.0
    %1147 = vmatpush2.msra.mxu0 0.0
    %1148 = vmatprep.subr.mxu0 0.0
    %1149 = vmatpush2.msra.mxu0 0.0
    %1150 = vmatprep.subr.mxu0 0.0
    %1151 = vmatpush2.msra.mxu0 0.0
    %1152 = vmatprep.mubr.f32.mxu0 0.0
    %1153 = vmatmul.mubr.f32.gmra.mxu0 %v1086
    %v1154 = vpop.f32.mrf.mxu0
    %v1155 = vadd.f32 0.0, %v1154
    %v1156 = vpop.f32.mrf.mxu0
    %1157 = vdwg.mxu0
    %v1158 = vadd.f32 %v1082, %v1155
    %v1159 = vxor.u32 %v1158, 2147483648
    %v1160 = vmul.f32 %v1159, 1.442695
    %v1161 = vpow.pop %v1160
    %v1162 = vadd.f32 %v1161, 1.0
    %v1163 = vrcp.pop %v1162
    %v1164 = vmul.f32 1.0, %v1163
    %v1165 = vadd.f32 %v1155, %v421
    %1167 = vrot.lane.b32.xlu0 %v1165, 64
    %v1168 = vpop.permute.xlu0 %1167
    %v1170 = vmul.f32 %v1164, %v1168
    %1172 = vrot.lane.b32.xlu0 %v1170, 64
    %v1173 = vpop.permute.xlu0 %1172
    %v1175 = vadd.f32 %v1082, %v1173
    %v1176 = vtanh.pop %v1175
    %v1177 = vsub.f32 %v1081, %v1176
    %1179 = vrot.lane.b32.xlu0 %v1177, 96
    %v1180 = vpop.permute.xlu0 %1179
    %v1182 = vmul.f32 %v1164, %v1180
    %1184 = vrot.lane.b32.xlu0 %v1182, 32
    %v1185 = vpop.permute.xlu0 %1184
    %v1187 = vadd.f32 %v1176, %v1185
    %1189 = vrot.lane.b32.xlu0 %v1187, 64
    %v1190 = vpop.permute.xlu0 %1189
    %v1192 = vrot.slane %v1190, 4
    %v1194 = vsel %vm339, %v1192, 0
    %1196 = vmatprep.subr.mxu0 0.0
    %1197 = vmatpush1.msra.mxu0 0.0
    %1198 = vmatprep.subr.mxu0 0.0
    %1199 = vmatpush1.msra.mxu0 0.0
    %1200 = vmatprep.subr.mxu0 0.0
    %1201 = vmatpush1.msra.mxu0 0.0
    %1202 = vmatprep.subr.mxu0 0.0
    %1203 = vmatpush1.msra.mxu0 0.0
    %1204 = vmatprep.subr.mxu0 0.0
    %1205 = vmatpush1.msra.mxu0 0.0
    %1206 = vmatprep.subr.mxu0 0.0
    %1207 = vmatpush1.msra.mxu0 0.0
    %1208 = vmatprep.subr.mxu0 0.0
    %1209 = vmatpush1.msra.mxu0 0.0
    %1210 = vmatprep.subr.mxu0 0.0
    %1211 = vmatpush1.msra.mxu0 0.0
    %1212 = vmatprep.subr.mxu0 0.0
    %1213 = vmatpush1.msra.mxu0 0.0
    %1214 = vmatprep.subr.mxu0 0.0
    %1215 = vmatpush1.msra.mxu0 0.0
    %1216 = vmatprep.subr.mxu0 0.0
    %1217 = vmatpush1.msra.mxu0 0.0
    %1218 = vmatprep.subr.mxu0 0.0
    %1219 = vmatpush1.msra.mxu0 0.0
    %1220 = vmatprep.subr.mxu0 0.0
    %1221 = vmatpush1.msra.mxu0 %v331
    %1222 = vmatprep.subr.mxu0 0.0
    %1223 = vmatpush1.msra.mxu0 %v330
    %1224 = vmatprep.subr.mxu0 0.0
    %1225 = vmatpush1.msra.mxu0 %v329
    %1226 = vmatprep.subr.mxu0 0.0
    %1227 = vmatpush1.msra.mxu0 %v328
    %1228 = vmatprep.subr.mxu0 0.0
    %1229 = vmatpush2.msra.mxu0 0.0
    %1230 = vmatprep.subr.mxu0 0.0
    %1231 = vmatpush2.msra.mxu0 0.0
    %1232 = vmatprep.subr.mxu0 0.0
    %1233 = vmatpush2.msra.mxu0 0.0
    %1234 = vmatprep.subr.mxu0 0.0
    %1235 = vmatpush2.msra.mxu0 0.0
    %1236 = vmatprep.subr.mxu0 0.0
    %1237 = vmatpush2.msra.mxu0 0.0
    %1238 = vmatprep.subr.mxu0 0.0
    %1239 = vmatpush2.msra.mxu0 0.0
    %1240 = vmatprep.subr.mxu0 0.0
    %1241 = vmatpush2.msra.mxu0 0.0
    %1242 = vmatprep.subr.mxu0 0.0
    %1243 = vmatpush2.msra.mxu0 0.0
    %1244 = vmatprep.subr.mxu0 0.0
    %1245 = vmatpush2.msra.mxu0 0.0
    %1246 = vmatprep.subr.mxu0 0.0
    %1247 = vmatpush2.msra.mxu0 0.0
    %1248 = vmatprep.subr.mxu0 0.0
    %1249 = vmatpush2.msra.mxu0 0.0
    %1250 = vmatprep.subr.mxu0 0.0
    %1251 = vmatpush2.msra.mxu0 0.0
    %1252 = vmatprep.subr.mxu0 0.0
    %1253 = vmatpush2.msra.mxu0 0.0
    %1254 = vmatprep.subr.mxu0 0.0
    %1255 = vmatpush2.msra.mxu0 0.0
    %1256 = vmatprep.subr.mxu0 0.0
    %1257 = vmatpush2.msra.mxu0 0.0
    %1258 = vmatprep.subr.mxu0 0.0
    %1259 = vmatpush2.msra.mxu0 0.0
    %1260 = vmatprep.mubr.f32.mxu0 0.0
    %1261 = vmatmul.mubr.f32.gmra.mxu0 %v1194
    %v1262 = vpop.f32.mrf.mxu0
    %v1263 = vadd.f32 0.0, %v1262
    %v1264 = vpop.f32.mrf.mxu0
    %1265 = vdwg.mxu0
    %v1266 = vadd.f32 %v338, %v1263
    %v1267 = vxor.u32 %v1266, 2147483648
    %v1268 = vmul.f32 %v1267, 1.442695
    %v1269 = vpow.pop %v1268
    %v1270 = vadd.f32 %v1269, 1.0
    %v1271 = vrcp.pop %v1270
    %v1272 = vmul.f32 1.0, %v1271
    %v1273 = vadd.f32 %v1263, %v421
    %1275 = vrot.lane.b32.xlu0 %v1273, 64
    %v1276 = vpop.permute.xlu0 %1275
    %v1278 = vmul.f32 %v1272, %v1276
    %1280 = vrot.lane.b32.xlu0 %v1278, 64
    %v1281 = vpop.permute.xlu0 %1280
    %v1283 = vadd.f32 %v338, %v1281
    %v1284 = vtanh.pop %v1283
    %1286 = vrot.lane.b32.xlu0 %v1284, 64
    %v1287 = vpop.permute.xlu0 %1286
    %v1289 = vsub.f32 %v1192, %v1287
    %1291 = vrot.lane.b32.xlu0 %v1289, 32
    %v1292 = vpop.permute.xlu0 %1291
    %v1294 = vmul.f32 %v1272, %v1292
    %1296 = vrot.lane.b32.xlu0 %v1294, 32
    %v1297 = vpop.permute.xlu0 %1296
    %v1299 = vadd.f32 %v1284, %v1297
    %1301 = vrot.lane.b32.xlu0 %v1299, 64
    %v1302 = vpop.permute.xlu0 %1301
    %v1303 = vsel %vm339, %v1302, 0
    %1305 = vmatprep.subr.mxu0 0.0
    %1306 = vmatpush1.msra.mxu0 0.0
    %1307 = vmatprep.subr.mxu0 0.0
    %1308 = vmatpush1.msra.mxu0 0.0
    %1309 = vmatprep.subr.mxu0 0.0
    %1310 = vmatpush1.msra.mxu0 0.0
    %1311 = vmatprep.subr.mxu0 0.0
    %1312 = vmatpush1.msra.mxu0 0.0
    %1313 = vmatprep.subr.mxu0 0.0
    %1314 = vmatpush1.msra.mxu0 0.0
    %1315 = vmatprep.subr.mxu0 0.0
    %1316 = vmatpush1.msra.mxu0 0.0
    %1317 = vmatprep.subr.mxu0 0.0
    %1318 = vmatpush1.msra.mxu0 0.0
    %1319 = vmatprep.subr.mxu0 0.0
    %1320 = vmatpush1.msra.mxu0 0.0
    %1321 = vmatprep.subr.mxu0 0.0
    %1322 = vmatpush1.msra.mxu0 0.0
    %1323 = vmatprep.subr.mxu0 0.0
    %1324 = vmatpush1.msra.mxu0 0.0
    %1325 = vmatprep.subr.mxu0 0.0
    %1326 = vmatpush1.msra.mxu0 0.0
    %1327 = vmatprep.subr.mxu0 0.0
    %1328 = vmatpush1.msra.mxu0 0.0
    %1329 = vmatprep.subr.mxu0 0.0
    %1330 = vmatpush1.msra.mxu0 %v331
    %1331 = vmatprep.subr.mxu0 0.0
    %1332 = vmatpush1.msra.mxu0 %v330
    %1333 = vmatprep.subr.mxu0 0.0
    %1334 = vmatpush1.msra.mxu0 %v329
    %1335 = vmatprep.subr.mxu0 0.0
    %1336 = vmatpush1.msra.mxu0 %v328
    %1337 = vmatprep.subr.mxu0 0.0
    %1338 = vmatpush2.msra.mxu0 0.0
    %1339 = vmatprep.subr.mxu0 0.0
    %1340 = vmatpush2.msra.mxu0 0.0
    %1341 = vmatprep.subr.mxu0 0.0
    %1342 = vmatpush2.msra.mxu0 0.0
    %1343 = vmatprep.subr.mxu0 0.0
    %1344 = vmatpush2.msra.mxu0 0.0
    %1345 = vmatprep.subr.mxu0 0.0
    %1346 = vmatpush2.msra.mxu0 0.0
    %1347 = vmatprep.subr.mxu0 0.0
    %1348 = vmatpush2.msra.mxu0 0.0
    %1349 = vmatprep.subr.mxu0 0.0
    %1350 = vmatpush2.msra.mxu0 0.0
    %1351 = vmatprep.subr.mxu0 0.0
    %1352 = vmatpush2.msra.mxu0 0.0
    %1353 = vmatprep.subr.mxu0 0.0
    %1354 = vmatpush2.msra.mxu0 0.0
    %1355 = vmatprep.subr.mxu0 0.0
    %1356 = vmatpush2.msra.mxu0 0.0
    %1357 = vmatprep.subr.mxu0 0.0
    %1358 = vmatpush2.msra.mxu0 0.0
    %1359 = vmatprep.subr.mxu0 0.0
    %1360 = vmatpush2.msra.mxu0 0.0
    %1361 = vmatprep.subr.mxu0 0.0
    %1362 = vmatpush2.msra.mxu0 0.0
    %1363 = vmatprep.subr.mxu0 0.0
    %1364 = vmatpush2.msra.mxu0 0.0
    %1365 = vmatprep.subr.mxu0 0.0
    %1366 = vmatpush2.msra.mxu0 0.0
    %1367 = vmatprep.subr.mxu0 0.0
    %1368 = vmatpush2.msra.mxu0 0.0
    %1369 = vmatprep.mubr.f32.mxu0 0.0
    %1370 = vmatmul.mubr.f32.gmra.mxu0 %v1303
    %v1371 = vpop.f32.mrf.mxu0
    %v1372 = vadd.f32 0.0, %v1371
    %v1373 = vpop.f32.mrf.mxu0
    %1374 = vdwg.mxu0
    %v1375 = vadd.f32 %v446, %v1372
    %v1376 = vxor.u32 %v1375, 2147483648
    %v1377 = vmul.f32 %v1376, 1.442695
    %v1378 = vpow.pop %v1377
    %v1379 = vadd.f32 %v1378, 1.0
    %v1380 = vrcp.pop %v1379
    %v1381 = vmul.f32 1.0, %v1380
    %v1382 = vadd.f32 %v1372, %v421
    %1384 = vrot.lane.b32.xlu0 %v1382, 64
    %v1385 = vpop.permute.xlu0 %1384
    %v1387 = vmul.f32 %v1381, %v1385
    %1389 = vrot.lane.b32.xlu0 %v1387, 64
    %v1390 = vpop.permute.xlu0 %1389
    %v1392 = vadd.f32 %v446, %v1390
    %v1393 = vtanh.pop %v1392
    %v1394 = vsub.f32 %v1299, %v1393
    %1396 = vrot.lane.b32.xlu0 %v1394, 96
    %v1397 = vpop.permute.xlu0 %1396
    %v1399 = vmul.f32 %v1381, %v1397
    %1401 = vrot.lane.b32.xlu0 %v1399, 32
    %v1402 = vpop.permute.xlu0 %1401
    %v1404 = vadd.f32 %v1393, %v1402
    %1406 = vrot.lane.b32.xlu0 %v1404, 64
    %v1407 = vpop.permute.xlu0 %1406
    %v1408 = vsel %vm339, %v1407, 0
    %1410 = vmatprep.subr.mxu0 0.0
    %1411 = vmatpush1.msra.mxu0 0.0
    %1412 = vmatprep.subr.mxu0 0.0
    %1413 = vmatpush1.msra.mxu0 0.0
    %1414 = vmatprep.subr.mxu0 0.0
    %1415 = vmatpush1.msra.mxu0 0.0
    %1416 = vmatprep.subr.mxu0 0.0
    %1417 = vmatpush1.msra.mxu0 0.0
    %1418 = vmatprep.subr.mxu0 0.0
    %1419 = vmatpush1.msra.mxu0 0.0
    %1420 = vmatprep.subr.mxu0 0.0
    %1421 = vmatpush1.msra.mxu0 0.0
    %1422 = vmatprep.subr.mxu0 0.0
    %1423 = vmatpush1.msra.mxu0 0.0
    %1424 = vmatprep.subr.mxu0 0.0
    %1425 = vmatpush1.msra.mxu0 0.0
    %1426 = vmatprep.subr.mxu0 0.0
    %1427 = vmatpush1.msra.mxu0 0.0
    %1428 = vmatprep.subr.mxu0 0.0
    %1429 = vmatpush1.msra.mxu0 0.0
    %1430 = vmatprep.subr.mxu0 0.0
    %1431 = vmatpush1.msra.mxu0 0.0
    %1432 = vmatprep.subr.mxu0 0.0
    %1433 = vmatpush1.msra.mxu0 0.0
    %1434 = vmatprep.subr.mxu0 0.0
    %1435 = vmatpush1.msra.mxu0 %v331
    %1436 = vmatprep.subr.mxu0 0.0
    %1437 = vmatpush1.msra.mxu0 %v330
    %1438 = vmatprep.subr.mxu0 0.0
    %1439 = vmatpush1.msra.mxu0 %v329
    %1440 = vmatprep.subr.mxu0 0.0
    %1441 = vmatpush1.msra.mxu0 %v328
    %1442 = vmatprep.subr.mxu0 0.0
    %1443 = vmatpush2.msra.mxu0 0.0
    %1444 = vmatprep.subr.mxu0 0.0
    %1445 = vmatpush2.msra.mxu0 0.0
    %1446 = vmatprep.subr.mxu0 0.0
    %1447 = vmatpush2.msra.mxu0 0.0
    %1448 = vmatprep.subr.mxu0 0.0
    %1449 = vmatpush2.msra.mxu0 0.0
    %1450 = vmatprep.subr.mxu0 0.0
    %1451 = vmatpush2.msra.mxu0 0.0
    %1452 = vmatprep.subr.mxu0 0.0
    %1453 = vmatpush2.msra.mxu0 0.0
    %1454 = vmatprep.subr.mxu0 0.0
    %1455 = vmatpush2.msra.mxu0 0.0
    %1456 = vmatprep.subr.mxu0 0.0
    %1457 = vmatpush2.msra.mxu0 0.0
    %1458 = vmatprep.subr.mxu0 0.0
    %1459 = vmatpush2.msra.mxu0 0.0
    %1460 = vmatprep.subr.mxu0 0.0
    %1461 = vmatpush2.msra.mxu0 0.0
    %1462 = vmatprep.subr.mxu0 0.0
    %1463 = vmatpush2.msra.mxu0 0.0
    %1464 = vmatprep.subr.mxu0 0.0
    %1465 = vmatpush2.msra.mxu0 0.0
    %1466 = vmatprep.subr.mxu0 0.0
    %1467 = vmatpush2.msra.mxu0 0.0
    %1468 = vmatprep.subr.mxu0 0.0
    %1469 = vmatpush2.msra.mxu0 0.0
    %1470 = vmatprep.subr.mxu0 0.0
    %1471 = vmatpush2.msra.mxu0 0.0
    %1472 = vmatprep.subr.mxu0 0.0
    %1473 = vmatpush2.msra.mxu0 0.0
    %1474 = vmatprep.mubr.f32.mxu0 0.0
    %1475 = vmatmul.mubr.f32.gmra.mxu0 %v1408
    %v1476 = vpop.f32.mrf.mxu0
    %v1477 = vadd.f32 0.0, %v1476
    %v1478 = vpop.f32.mrf.mxu0
    %1479 = vdwg.mxu0
    %v1480 = vadd.f32 %v552, %v1477
    %v1481 = vxor.u32 %v1480, 2147483648
    %v1482 = vmul.f32 %v1481, 1.442695
    %v1483 = vpow.pop %v1482
    %v1484 = vadd.f32 %v1483, 1.0
    %v1485 = vrcp.pop %v1484
    %v1486 = vmul.f32 1.0, %v1485
    %v1487 = vadd.f32 %v1477, %v421
    %1489 = vrot.lane.b32.xlu0 %v1487, 64
    %v1490 = vpop.permute.xlu0 %1489
    %v1492 = vmul.f32 %v1486, %v1490
    %1494 = vrot.lane.b32.xlu0 %v1492, 64
    %v1495 = vpop.permute.xlu0 %1494
    %v1497 = vadd.f32 %v552, %v1495
    %v1498 = vtanh.pop %v1497
    %v1499 = vsub.f32 %v1404, %v1498
    %1501 = vrot.lane.b32.xlu0 %v1499, 96
    %v1502 = vpop.permute.xlu0 %1501
    %v1504 = vmul.f32 %v1486, %v1502
    %1506 = vrot.lane.b32.xlu0 %v1504, 32
    %v1507 = vpop.permute.xlu0 %1506
    %v1509 = vadd.f32 %v1498, %v1507
    %1511 = vrot.lane.b32.xlu0 %v1509, 64
    %v1512 = vpop.permute.xlu0 %1511
    %v1513 = vsel %vm339, %v1512, 0
    %1515 = vmatprep.subr.mxu0 0.0
    %1516 = vmatpush1.msra.mxu0 0.0
    %1517 = vmatprep.subr.mxu0 0.0
    %1518 = vmatpush1.msra.mxu0 0.0
    %1519 = vmatprep.subr.mxu0 0.0
    %1520 = vmatpush1.msra.mxu0 0.0
    %1521 = vmatprep.subr.mxu0 0.0
    %1522 = vmatpush1.msra.mxu0 0.0
    %1523 = vmatprep.subr.mxu0 0.0
    %1524 = vmatpush1.msra.mxu0 0.0
    %1525 = vmatprep.subr.mxu0 0.0
    %1526 = vmatpush1.msra.mxu0 0.0
    %1527 = vmatprep.subr.mxu0 0.0
    %1528 = vmatpush1.msra.mxu0 0.0
    %1529 = vmatprep.subr.mxu0 0.0
    %1530 = vmatpush1.msra.mxu0 0.0
    %1531 = vmatprep.subr.mxu0 0.0
    %1532 = vmatpush1.msra.mxu0 0.0
    %1533 = vmatprep.subr.mxu0 0.0
    %1534 = vmatpush1.msra.mxu0 0.0
    %1535 = vmatprep.subr.mxu0 0.0
    %1536 = vmatpush1.msra.mxu0 0.0
    %1537 = vmatprep.subr.mxu0 0.0
    %1538 = vmatpush1.msra.mxu0 0.0
    %1539 = vmatprep.subr.mxu0 0.0
    %1540 = vmatpush1.msra.mxu0 %v331
    %1541 = vmatprep.subr.mxu0 0.0
    %1542 = vmatpush1.msra.mxu0 %v330
    %1543 = vmatprep.subr.mxu0 0.0
    %1544 = vmatpush1.msra.mxu0 %v329
    %1545 = vmatprep.subr.mxu0 0.0
    %1546 = vmatpush1.msra.mxu0 %v328
    %1547 = vmatprep.subr.mxu0 0.0
    %1548 = vmatpush2.msra.mxu0 0.0
    %1549 = vmatprep.subr.mxu0 0.0
    %1550 = vmatpush2.msra.mxu0 0.0
    %1551 = vmatprep.subr.mxu0 0.0
    %1552 = vmatpush2.msra.mxu0 0.0
    %1553 = vmatprep.subr.mxu0 0.0
    %1554 = vmatpush2.msra.mxu0 0.0
    %1555 = vmatprep.subr.mxu0 0.0
    %1556 = vmatpush2.msra.mxu0 0.0
    %1557 = vmatprep.subr.mxu0 0.0
    %1558 = vmatpush2.msra.mxu0 0.0
    %1559 = vmatprep.subr.mxu0 0.0
    %1560 = vmatpush2.msra.mxu0 0.0
    %1561 = vmatprep.subr.mxu0 0.0
    %1562 = vmatpush2.msra.mxu0 0.0
    %1563 = vmatprep.subr.mxu0 0.0
    %1564 = vmatpush2.msra.mxu0 0.0
    %1565 = vmatprep.subr.mxu0 0.0
    %1566 = vmatpush2.msra.mxu0 0.0
    %1567 = vmatprep.subr.mxu0 0.0
    %1568 = vmatpush2.msra.mxu0 0.0
    %1569 = vmatprep.subr.mxu0 0.0
    %1570 = vmatpush2.msra.mxu0 0.0
    %1571 = vmatprep.subr.mxu0 0.0
    %1572 = vmatpush2.msra.mxu0 0.0
    %1573 = vmatprep.subr.mxu0 0.0
    %1574 = vmatpush2.msra.mxu0 0.0
    %1575 = vmatprep.subr.mxu0 0.0
    %1576 = vmatpush2.msra.mxu0 0.0
    %1577 = vmatprep.subr.mxu0 0.0
    %1578 = vmatpush2.msra.mxu0 0.0
    %1579 = vmatprep.mubr.f32.mxu0 0.0
    %1580 = vmatmul.mubr.f32.gmra.mxu0 %v1513
    %v1581 = vpop.f32.mrf.mxu0
    %v1582 = vadd.f32 0.0, %v1581
    %v1583 = vpop.f32.mrf.mxu0
    %1584 = vdwg.mxu0
    %v1585 = vadd.f32 %v658, %v1582
    %v1586 = vxor.u32 %v1585, 2147483648
    %v1587 = vmul.f32 %v1586, 1.442695
    %v1588 = vpow.pop %v1587
    %v1589 = vadd.f32 %v1588, 1.0
    %v1590 = vrcp.pop %v1589
    %v1591 = vmul.f32 1.0, %v1590
    %v1592 = vadd.f32 %v1582, %v421
    %1594 = vrot.lane.b32.xlu0 %v1592, 64
    %v1595 = vpop.permute.xlu0 %1594
    %v1597 = vmul.f32 %v1591, %v1595
    %1599 = vrot.lane.b32.xlu0 %v1597, 64
    %v1600 = vpop.permute.xlu0 %1599
    %v1602 = vadd.f32 %v658, %v1600
    %v1603 = vtanh.pop %v1602
    %v1604 = vsub.f32 %v1509, %v1603
    %1606 = vrot.lane.b32.xlu0 %v1604, 96
    %v1607 = vpop.permute.xlu0 %1606
    %v1609 = vmul.f32 %v1591, %v1607
    %1611 = vrot.lane.b32.xlu0 %v1609, 32
    %v1612 = vpop.permute.xlu0 %1611
    %v1614 = vadd.f32 %v1603, %v1612
    %1616 = vrot.lane.b32.xlu0 %v1614, 64
    %v1617 = vpop.permute.xlu0 %1616
    %v1618 = vsel %vm339, %v1617, 0
    %1620 = vmatprep.subr.mxu0 0.0
    %1621 = vmatpush1.msra.mxu0 0.0
    %1622 = vmatprep.subr.mxu0 0.0
    %1623 = vmatpush1.msra.mxu0 0.0
    %1624 = vmatprep.subr.mxu0 0.0
    %1625 = vmatpush1.msra.mxu0 0.0
    %1626 = vmatprep.subr.mxu0 0.0
    %1627 = vmatpush1.msra.mxu0 0.0
    %1628 = vmatprep.subr.mxu0 0.0
    %1629 = vmatpush1.msra.mxu0 0.0
    %1630 = vmatprep.subr.mxu0 0.0
    %1631 = vmatpush1.msra.mxu0 0.0
    %1632 = vmatprep.subr.mxu0 0.0
    %1633 = vmatpush1.msra.mxu0 0.0
    %1634 = vmatprep.subr.mxu0 0.0
    %1635 = vmatpush1.msra.mxu0 0.0
    %1636 = vmatprep.subr.mxu0 0.0
    %1637 = vmatpush1.msra.mxu0 0.0
    %1638 = vmatprep.subr.mxu0 0.0
    %1639 = vmatpush1.msra.mxu0 0.0
    %1640 = vmatprep.subr.mxu0 0.0
    %1641 = vmatpush1.msra.mxu0 0.0
    %1642 = vmatprep.subr.mxu0 0.0
    %1643 = vmatpush1.msra.mxu0 0.0
    %1644 = vmatprep.subr.mxu0 0.0
    %1645 = vmatpush1.msra.mxu0 %v331
    %1646 = vmatprep.subr.mxu0 0.0
    %1647 = vmatpush1.msra.mxu0 %v330
    %1648 = vmatprep.subr.mxu0 0.0
    %1649 = vmatpush1.msra.mxu0 %v329
    %1650 = vmatprep.subr.mxu0 0.0
    %1651 = vmatpush1.msra.mxu0 %v328
    %1652 = vmatprep.subr.mxu0 0.0
    %1653 = vmatpush2.msra.mxu0 0.0
    %1654 = vmatprep.subr.mxu0 0.0
    %1655 = vmatpush2.msra.mxu0 0.0
    %1656 = vmatprep.subr.mxu0 0.0
    %1657 = vmatpush2.msra.mxu0 0.0
    %1658 = vmatprep.subr.mxu0 0.0
    %1659 = vmatpush2.msra.mxu0 0.0
    %1660 = vmatprep.subr.mxu0 0.0
    %1661 = vmatpush2.msra.mxu0 0.0
    %1662 = vmatprep.subr.mxu0 0.0
    %1663 = vmatpush2.msra.mxu0 0.0
    %1664 = vmatprep.subr.mxu0 0.0
    %1665 = vmatpush2.msra.mxu0 0.0
    %1666 = vmatprep.subr.mxu0 0.0
    %1667 = vmatpush2.msra.mxu0 0.0
    %1668 = vmatprep.subr.mxu0 0.0
    %1669 = vmatpush2.msra.mxu0 0.0
    %1670 = vmatprep.subr.mxu0 0.0
    %1671 = vmatpush2.msra.mxu0 0.0
    %1672 = vmatprep.subr.mxu0 0.0
    %1673 = vmatpush2.msra.mxu0 0.0
    %1674 = vmatprep.subr.mxu0 0.0
    %1675 = vmatpush2.msra.mxu0 0.0
    %1676 = vmatprep.subr.mxu0 0.0
    %1677 = vmatpush2.msra.mxu0 0.0
    %1678 = vmatprep.subr.mxu0 0.0
    %1679 = vmatpush2.msra.mxu0 0.0
    %1680 = vmatprep.subr.mxu0 0.0
    %1681 = vmatpush2.msra.mxu0 0.0
    %1682 = vmatprep.subr.mxu0 0.0
    %1683 = vmatpush2.msra.mxu0 0.0
    %1684 = vmatprep.mubr.f32.mxu0 0.0
    %1685 = vmatmul.mubr.f32.gmra.mxu0 %v1618
    %v1686 = vpop.f32.mrf.mxu0
    %v1687 = vadd.f32 0.0, %v1686
    %v1688 = vpop.f32.mrf.mxu0
    %1689 = vdwg.mxu0
    %v1690 = vadd.f32 %v764, %v1687
    %v1691 = vxor.u32 %v1690, 2147483648
    %v1692 = vmul.f32 %v1691, 1.442695
    %v1693 = vpow.pop %v1692
    %v1694 = vadd.f32 %v1693, 1.0
    %v1695 = vrcp.pop %v1694
    %v1696 = vmul.f32 1.0, %v1695
    %v1697 = vadd.f32 %v1687, %v421
    %1699 = vrot.lane.b32.xlu0 %v1697, 64
    %v1700 = vpop.permute.xlu0 %1699
    %v1702 = vmul.f32 %v1696, %v1700
    %1704 = vrot.lane.b32.xlu0 %v1702, 64
    %v1705 = vpop.permute.xlu0 %1704
    %v1707 = vadd.f32 %v764, %v1705
    %v1708 = vtanh.pop %v1707
    %v1709 = vsub.f32 %v1614, %v1708
    %1711 = vrot.lane.b32.xlu0 %v1709, 96
    %v1712 = vpop.permute.xlu0 %1711
    %v1714 = vmul.f32 %v1696, %v1712
    %1716 = vrot.lane.b32.xlu0 %v1714, 32
    %v1717 = vpop.permute.xlu0 %1716
    %v1719 = vadd.f32 %v1708, %v1717
    %1721 = vrot.lane.b32.xlu0 %v1719, 64
    %v1722 = vpop.permute.xlu0 %1721
    %v1723 = vsel %vm339, %v1722, 0
    %1725 = vmatprep.subr.mxu0 0.0
    %1726 = vmatpush1.msra.mxu0 0.0
    %1727 = vmatprep.subr.mxu0 0.0
    %1728 = vmatpush1.msra.mxu0 0.0
    %1729 = vmatprep.subr.mxu0 0.0
    %1730 = vmatpush1.msra.mxu0 0.0
    %1731 = vmatprep.subr.mxu0 0.0
    %1732 = vmatpush1.msra.mxu0 0.0
    %1733 = vmatprep.subr.mxu0 0.0
    %1734 = vmatpush1.msra.mxu0 0.0
    %1735 = vmatprep.subr.mxu0 0.0
    %1736 = vmatpush1.msra.mxu0 0.0
    %1737 = vmatprep.subr.mxu0 0.0
    %1738 = vmatpush1.msra.mxu0 0.0
    %1739 = vmatprep.subr.mxu0 0.0
    %1740 = vmatpush1.msra.mxu0 0.0
    %1741 = vmatprep.subr.mxu0 0.0
    %1742 = vmatpush1.msra.mxu0 0.0
    %1743 = vmatprep.subr.mxu0 0.0
    %1744 = vmatpush1.msra.mxu0 0.0
    %1745 = vmatprep.subr.mxu0 0.0
    %1746 = vmatpush1.msra.mxu0 0.0
    %1747 = vmatprep.subr.mxu0 0.0
    %1748 = vmatpush1.msra.mxu0 0.0
    %1749 = vmatprep.subr.mxu0 0.0
    %1750 = vmatpush1.msra.mxu0 %v331
    %1751 = vmatprep.subr.mxu0 0.0
    %1752 = vmatpush1.msra.mxu0 %v330
    %1753 = vmatprep.subr.mxu0 0.0
    %1754 = vmatpush1.msra.mxu0 %v329
    %1755 = vmatprep.subr.mxu0 0.0
    %1756 = vmatpush1.msra.mxu0 %v328
    %1757 = vmatprep.subr.mxu0 0.0
    %1758 = vmatpush2.msra.mxu0 0.0
    %1759 = vmatprep.subr.mxu0 0.0
    %1760 = vmatpush2.msra.mxu0 0.0
    %1761 = vmatprep.subr.mxu0 0.0
    %1762 = vmatpush2.msra.mxu0 0.0
    %1763 = vmatprep.subr.mxu0 0.0
    %1764 = vmatpush2.msra.mxu0 0.0
    %1765 = vmatprep.subr.mxu0 0.0
    %1766 = vmatpush2.msra.mxu0 0.0
    %1767 = vmatprep.subr.mxu0 0.0
    %1768 = vmatpush2.msra.mxu0 0.0
    %1769 = vmatprep.subr.mxu0 0.0
    %1770 = vmatpush2.msra.mxu0 0.0
    %1771 = vmatprep.subr.mxu0 0.0
    %1772 = vmatpush2.msra.mxu0 0.0
    %1773 = vmatprep.subr.mxu0 0.0
    %1774 = vmatpush2.msra.mxu0 0.0
    %1775 = vmatprep.subr.mxu0 0.0
    %1776 = vmatpush2.msra.mxu0 0.0
    %1777 = vmatprep.subr.mxu0 0.0
    %1778 = vmatpush2.msra.mxu0 0.0
    %1779 = vmatprep.subr.mxu0 0.0
    %1780 = vmatpush2.msra.mxu0 0.0
    %1781 = vmatprep.subr.mxu0 0.0
    %1782 = vmatpush2.msra.mxu0 0.0
    %1783 = vmatprep.subr.mxu0 0.0
    %1784 = vmatpush2.msra.mxu0 0.0
    %1785 = vmatprep.subr.mxu0 0.0
    %1786 = vmatpush2.msra.mxu0 0.0
    %1787 = vmatprep.subr.mxu0 0.0
    %1788 = vmatpush2.msra.mxu0 0.0
    %1789 = vmatprep.mubr.f32.mxu0 0.0
    %1790 = vmatmul.mubr.f32.gmra.mxu0 %v1723
    %v1791 = vpop.f32.mrf.mxu0
    %v1792 = vadd.f32 0.0, %v1791
    %v1793 = vpop.f32.mrf.mxu0
    %1794 = vdwg.mxu0
    %v1795 = vadd.f32 %v870, %v1792
    %v1796 = vxor.u32 %v1795, 2147483648
    %v1797 = vmul.f32 %v1796, 1.442695
    %v1798 = vpow.pop %v1797
    %v1799 = vadd.f32 %v1798, 1.0
    %v1800 = vrcp.pop %v1799
    %v1801 = vmul.f32 1.0, %v1800
    %v1802 = vadd.f32 %v1792, %v421
    %1804 = vrot.lane.b32.xlu0 %v1802, 64
    %v1805 = vpop.permute.xlu0 %1804
    %v1807 = vmul.f32 %v1801, %v1805
    %1809 = vrot.lane.b32.xlu0 %v1807, 64
    %v1810 = vpop.permute.xlu0 %1809
    %v1812 = vadd.f32 %v870, %v1810
    %v1813 = vtanh.pop %v1812
    %v1814 = vsub.f32 %v1719, %v1813
    %1816 = vrot.lane.b32.xlu0 %v1814, 96
    %v1817 = vpop.permute.xlu0 %1816
    %v1819 = vmul.f32 %v1801, %v1817
    %1821 = vrot.lane.b32.xlu0 %v1819, 32
    %v1822 = vpop.permute.xlu0 %1821
    %v1824 = vadd.f32 %v1813, %v1822
    %1826 = vrot.lane.b32.xlu0 %v1824, 64
    %v1827 = vpop.permute.xlu0 %1826
    %v1828 = vsel %vm339, %v1827, 0
    %1830 = vmatprep.subr.mxu0 0.0
    %1831 = vmatpush1.msra.mxu0 0.0
    %1832 = vmatprep.subr.mxu0 0.0
    %1833 = vmatpush1.msra.mxu0 0.0
    %1834 = vmatprep.subr.mxu0 0.0
    %1835 = vmatpush1.msra.mxu0 0.0
    %1836 = vmatprep.subr.mxu0 0.0
    %1837 = vmatpush1.msra.mxu0 0.0
    %1838 = vmatprep.subr.mxu0 0.0
    %1839 = vmatpush1.msra.mxu0 0.0
    %1840 = vmatprep.subr.mxu0 0.0
    %1841 = vmatpush1.msra.mxu0 0.0
    %1842 = vmatprep.subr.mxu0 0.0
    %1843 = vmatpush1.msra.mxu0 0.0
    %1844 = vmatprep.subr.mxu0 0.0
    %1845 = vmatpush1.msra.mxu0 0.0
    %1846 = vmatprep.subr.mxu0 0.0
    %1847 = vmatpush1.msra.mxu0 0.0
    %1848 = vmatprep.subr.mxu0 0.0
    %1849 = vmatpush1.msra.mxu0 0.0
    %1850 = vmatprep.subr.mxu0 0.0
    %1851 = vmatpush1.msra.mxu0 0.0
    %1852 = vmatprep.subr.mxu0 0.0
    %1853 = vmatpush1.msra.mxu0 0.0
    %1854 = vmatprep.subr.mxu0 0.0
    %1855 = vmatpush1.msra.mxu0 %v331
    %1856 = vmatprep.subr.mxu0 0.0
    %1857 = vmatpush1.msra.mxu0 %v330
    %1858 = vmatprep.subr.mxu0 0.0
    %1859 = vmatpush1.msra.mxu0 %v329
    %1860 = vmatprep.subr.mxu0 0.0
    %1861 = vmatpush1.msra.mxu0 %v328
    %1862 = vmatprep.subr.mxu0 0.0
    %1863 = vmatpush2.msra.mxu0 0.0
    %1864 = vmatprep.subr.mxu0 0.0
    %1865 = vmatpush2.msra.mxu0 0.0
    %1866 = vmatprep.subr.mxu0 0.0
    %1867 = vmatpush2.msra.mxu0 0.0
    %1868 = vmatprep.subr.mxu0 0.0
    %1869 = vmatpush2.msra.mxu0 0.0
    %1870 = vmatprep.subr.mxu0 0.0
    %1871 = vmatpush2.msra.mxu0 0.0
    %1872 = vmatprep.subr.mxu0 0.0
    %1873 = vmatpush2.msra.mxu0 0.0
    %1874 = vmatprep.subr.mxu0 0.0
    %1875 = vmatpush2.msra.mxu0 0.0
    %1876 = vmatprep.subr.mxu0 0.0
    %1877 = vmatpush2.msra.mxu0 0.0
    %1878 = vmatprep.subr.mxu0 0.0
    %1879 = vmatpush2.msra.mxu0 0.0
    %1880 = vmatprep.subr.mxu0 0.0
    %1881 = vmatpush2.msra.mxu0 0.0
    %1882 = vmatprep.subr.mxu0 0.0
    %1883 = vmatpush2.msra.mxu0 0.0
    %1884 = vmatprep.subr.mxu0 0.0
    %1885 = vmatpush2.msra.mxu0 0.0
    %1886 = vmatprep.subr.mxu0 0.0
    %1887 = vmatpush2.msra.mxu0 0.0
    %1888 = vmatprep.subr.mxu0 0.0
    %1889 = vmatpush2.msra.mxu0 0.0
    %1890 = vmatprep.subr.mxu0 0.0
    %1891 = vmatpush2.msra.mxu0 0.0
    %1892 = vmatprep.subr.mxu0 0.0
    %1893 = vmatpush2.msra.mxu0 0.0
    %1894 = vmatprep.mubr.f32.mxu0 0.0
    %1895 = vmatmul.mubr.f32.gmra.mxu0 %v1828
    %v1896 = vpop.f32.mrf.mxu0
    %v1897 = vadd.f32 0.0, %v1896
    %v1898 = vpop.f32.mrf.mxu0
    %1899 = vdwg.mxu0
    %v1900 = vadd.f32 %v976, %v1897
    %v1901 = vxor.u32 %v1900, 2147483648
    %v1902 = vmul.f32 %v1901, 1.442695
    %v1903 = vpow.pop %v1902
    %v1904 = vadd.f32 %v1903, 1.0
    %v1905 = vrcp.pop %v1904
    %v1906 = vmul.f32 1.0, %v1905
    %v1907 = vadd.f32 %v1897, %v421
    %1909 = vrot.lane.b32.xlu0 %v1907, 64
    %v1910 = vpop.permute.xlu0 %1909
    %v1912 = vmul.f32 %v1906, %v1910
    %1914 = vrot.lane.b32.xlu0 %v1912, 64
    %v1915 = vpop.permute.xlu0 %1914
    %v1917 = vadd.f32 %v976, %v1915
    %v1918 = vtanh.pop %v1917
    %v1919 = vsub.f32 %v1824, %v1918
    %1921 = vrot.lane.b32.xlu0 %v1919, 96
    %v1922 = vpop.permute.xlu0 %1921
    %v1924 = vmul.f32 %v1906, %v1922
    %1926 = vrot.lane.b32.xlu0 %v1924, 32
    %v1927 = vpop.permute.xlu0 %1926
    %v1929 = vadd.f32 %v1918, %v1927
    %1931 = vrot.lane.b32.xlu0 %v1929, 64
    %v1932 = vpop.permute.xlu0 %1931
    %v1933 = vsel %vm339, %v1932, 0
    %1935 = vmatprep.subr.mxu0 0.0
    %1936 = vmatpush1.msra.mxu0 0.0
    %1937 = vmatprep.subr.mxu0 0.0
    %1938 = vmatpush1.msra.mxu0 0.0
    %1939 = vmatprep.subr.mxu0 0.0
    %1940 = vmatpush1.msra.mxu0 0.0
    %1941 = vmatprep.subr.mxu0 0.0
    %1942 = vmatpush1.msra.mxu0 0.0
    %1943 = vmatprep.subr.mxu0 0.0
    %1944 = vmatpush1.msra.mxu0 0.0
    %1945 = vmatprep.subr.mxu0 0.0
    %1946 = vmatpush1.msra.mxu0 0.0
    %1947 = vmatprep.subr.mxu0 0.0
    %1948 = vmatpush1.msra.mxu0 0.0
    %1949 = vmatprep.subr.mxu0 0.0
    %1950 = vmatpush1.msra.mxu0 0.0
    %1951 = vmatprep.subr.mxu0 0.0
    %1952 = vmatpush1.msra.mxu0 0.0
    %1953 = vmatprep.subr.mxu0 0.0
    %1954 = vmatpush1.msra.mxu0 0.0
    %1955 = vmatprep.subr.mxu0 0.0
    %1956 = vmatpush1.msra.mxu0 0.0
    %1957 = vmatprep.subr.mxu0 0.0
    %1958 = vmatpush1.msra.mxu0 0.0
    %1959 = vmatprep.subr.mxu0 0.0
    %1960 = vmatpush1.msra.mxu0 %v331
    %1961 = vmatprep.subr.mxu0 0.0
    %1962 = vmatpush1.msra.mxu0 %v330
    %1963 = vmatprep.subr.mxu0 0.0
    %1964 = vmatpush1.msra.mxu0 %v329
    %1965 = vmatprep.subr.mxu0 0.0
    %1966 = vmatpush1.msra.mxu0 %v328
    %1967 = vmatprep.subr.mxu0 0.0
    %1968 = vmatpush2.msra.mxu0 0.0
    %1969 = vmatprep.subr.mxu0 0.0
    %1970 = vmatpush2.msra.mxu0 0.0
    %1971 = vmatprep.subr.mxu0 0.0
    %1972 = vmatpush2.msra.mxu0 0.0
    %1973 = vmatprep.subr.mxu0 0.0
    %1974 = vmatpush2.msra.mxu0 0.0
    %1975 = vmatprep.subr.mxu0 0.0
    %1976 = vmatpush2.msra.mxu0 0.0
    %1977 = vmatprep.subr.mxu0 0.0
    %1978 = vmatpush2.msra.mxu0 0.0
    %1979 = vmatprep.subr.mxu0 0.0
    %1980 = vmatpush2.msra.mxu0 0.0
    %1981 = vmatprep.subr.mxu0 0.0
    %1982 = vmatpush2.msra.mxu0 0.0
    %1983 = vmatprep.subr.mxu0 0.0
    %1984 = vmatpush2.msra.mxu0 0.0
    %1985 = vmatprep.subr.mxu0 0.0
    %1986 = vmatpush2.msra.mxu0 0.0
    %1987 = vmatprep.subr.mxu0 0.0
    %1988 = vmatpush2.msra.mxu0 0.0
    %1989 = vmatprep.subr.mxu0 0.0
    %1990 = vmatpush2.msra.mxu0 0.0
    %1991 = vmatprep.subr.mxu0 0.0
    %1992 = vmatpush2.msra.mxu0 0.0
    %1993 = vmatprep.subr.mxu0 0.0
    %1994 = vmatpush2.msra.mxu0 0.0
    %1995 = vmatprep.subr.mxu0 0.0
    %1996 = vmatpush2.msra.mxu0 0.0
    %1997 = vmatprep.subr.mxu0 0.0
    %1998 = vmatpush2.msra.mxu0 0.0
    %1999 = vmatprep.mubr.f32.mxu0 0.0
    %2000 = vmatmul.mubr.f32.gmra.mxu0 %v1933
    %v2001 = vpop.f32.mrf.mxu0
    %v2002 = vadd.f32 0.0, %v2001
    %v2003 = vpop.f32.mrf.mxu0
    %2004 = vdwg.mxu0
    %v2005 = vadd.f32 %v1082, %v2002
    %v2006 = vxor.u32 %v2005, 2147483648
    %v2007 = vmul.f32 %v2006, 1.442695
    %v2008 = vpow.pop %v2007
    %v2009 = vadd.f32 %v2008, 1.0
    %v2010 = vrcp.pop %v2009
    %v2011 = vmul.f32 1.0, %v2010
    %v2012 = vadd.f32 %v2002, %v421
    %2014 = vrot.lane.b32.xlu0 %v2012, 64
    %v2015 = vpop.permute.xlu0 %2014
    %v2017 = vmul.f32 %v2011, %v2015
    %2019 = vrot.lane.b32.xlu0 %v2017, 64
    %v2020 = vpop.permute.xlu0 %2019
    %v2022 = vadd.f32 %v1082, %v2020
    %v2023 = vtanh.pop %v2022
    %v2024 = vsub.f32 %v1929, %v2023
    %2026 = vrot.lane.b32.xlu0 %v2024, 96
    %v2027 = vpop.permute.xlu0 %2026
    %v2029 = vmul.f32 %v2011, %v2027
    %2031 = vrot.lane.b32.xlu0 %v2029, 32
    %v2032 = vpop.permute.xlu0 %2031
    %v2034 = vadd.f32 %v2023, %v2032
    %2036 = vrot.lane.b32.xlu0 %v2034, 64
    %v2037 = vpop.permute.xlu0 %2036
    %v2039 = vrot.slane %v2037, 4
    %v2041 = vsel %vm339, %v2039, 0
    %2043 = vmatprep.subr.mxu0 0.0
    %2044 = vmatpush1.msra.mxu0 0.0
    %2045 = vmatprep.subr.mxu0 0.0
    %2046 = vmatpush1.msra.mxu0 0.0
    %2047 = vmatprep.subr.mxu0 0.0
    %2048 = vmatpush1.msra.mxu0 0.0
    %2049 = vmatprep.subr.mxu0 0.0
    %2050 = vmatpush1.msra.mxu0 0.0
    %2051 = vmatprep.subr.mxu0 0.0
    %2052 = vmatpush1.msra.mxu0 0.0
    %2053 = vmatprep.subr.mxu0 0.0
    %2054 = vmatpush1.msra.mxu0 0.0
    %2055 = vmatprep.subr.mxu0 0.0
    %2056 = vmatpush1.msra.mxu0 0.0
    %2057 = vmatprep.subr.mxu0 0.0
    %2058 = vmatpush1.msra.mxu0 0.0
    %2059 = vmatprep.subr.mxu0 0.0
    %2060 = vmatpush1.msra.mxu0 0.0
    %2061 = vmatprep.subr.mxu0 0.0
    %2062 = vmatpush1.msra.mxu0 0.0
    %2063 = vmatprep.subr.mxu0 0.0
    %2064 = vmatpush1.msra.mxu0 0.0
    %2065 = vmatprep.subr.mxu0 0.0
    %2066 = vmatpush1.msra.mxu0 0.0
    %2067 = vmatprep.subr.mxu0 0.0
    %2068 = vmatpush1.msra.mxu0 %v331
    %2069 = vmatprep.subr.mxu0 0.0
    %2070 = vmatpush1.msra.mxu0 %v330
    %2071 = vmatprep.subr.mxu0 0.0
    %2072 = vmatpush1.msra.mxu0 %v329
    %2073 = vmatprep.subr.mxu0 0.0
    %2074 = vmatpush1.msra.mxu0 %v328
    %2075 = vmatprep.subr.mxu0 0.0
    %2076 = vmatpush2.msra.mxu0 0.0
    %2077 = vmatprep.subr.mxu0 0.0
    %2078 = vmatpush2.msra.mxu0 0.0
    %2079 = vmatprep.subr.mxu0 0.0
    %2080 = vmatpush2.msra.mxu0 0.0
    %2081 = vmatprep.subr.mxu0 0.0
    %2082 = vmatpush2.msra.mxu0 0.0
    %2083 = vmatprep.subr.mxu0 0.0
    %2084 = vmatpush2.msra.mxu0 0.0
    %2085 = vmatprep.subr.mxu0 0.0
    %2086 = vmatpush2.msra.mxu0 0.0
    %2087 = vmatprep.subr.mxu0 0.0
    %2088 = vmatpush2.msra.mxu0 0.0
    %2089 = vmatprep.subr.mxu0 0.0
    %2090 = vmatpush2.msra.mxu0 0.0
    %2091 = vmatprep.subr.mxu0 0.0
    %2092 = vmatpush2.msra.mxu0 0.0
    %2093 = vmatprep.subr.mxu0 0.0
    %2094 = vmatpush2.msra.mxu0 0.0
    %2095 = vmatprep.subr.mxu0 0.0
    %2096 = vmatpush2.msra.mxu0 0.0
    %2097 = vmatprep.subr.mxu0 0.0
    %2098 = vmatpush2.msra.mxu0 0.0
    %2099 = vmatprep.subr.mxu0 0.0
    %2100 = vmatpush2.msra.mxu0 0.0
    %2101 = vmatprep.subr.mxu0 0.0
    %2102 = vmatpush2.msra.mxu0 0.0
    %2103 = vmatprep.subr.mxu0 0.0
    %2104 = vmatpush2.msra.mxu0 0.0
    %2105 = vmatprep.subr.mxu0 0.0
    %2106 = vmatpush2.msra.mxu0 0.0
    %2107 = vmatprep.mubr.f32.mxu0 0.0
    %2108 = vmatmul.mubr.f32.gmra.mxu0 %v2041
    %v2109 = vpop.f32.mrf.mxu0
    %v2110 = vadd.f32 0.0, %v2109
    %v2111 = vpop.f32.mrf.mxu0
    %2112 = vdwg.mxu0
    %v2113 = vadd.f32 %v338, %v2110
    %v2114 = vxor.u32 %v2113, 2147483648
    %v2115 = vmul.f32 %v2114, 1.442695
    %v2116 = vpow.pop %v2115
    %v2117 = vadd.f32 %v2116, 1.0
    %v2118 = vrcp.pop %v2117
    %v2119 = vmul.f32 1.0, %v2118
    %v2120 = vadd.f32 %v2110, %v421
    %2122 = vrot.lane.b32.xlu0 %v2120, 64
    %v2123 = vpop.permute.xlu0 %2122
    %v2125 = vmul.f32 %v2119, %v2123
    %2127 = vrot.lane.b32.xlu0 %v2125, 64
    %v2128 = vpop.permute.xlu0 %2127
    %v2130 = vadd.f32 %v338, %v2128
    %v2131 = vtanh.pop %v2130
    %2133 = vrot.lane.b32.xlu0 %v2131, 64
    %v2134 = vpop.permute.xlu0 %2133
    %v2136 = vsub.f32 %v2039, %v2134
    %2138 = vrot.lane.b32.xlu0 %v2136, 32
    %v2139 = vpop.permute.xlu0 %2138
    %v2141 = vmul.f32 %v2119, %v2139
    %2143 = vrot.lane.b32.xlu0 %v2141, 32
    %v2144 = vpop.permute.xlu0 %2143
    %v2146 = vadd.f32 %v2131, %v2144
    %2148 = vrot.lane.b32.xlu0 %v2146, 64
    %v2149 = vpop.permute.xlu0 %2148
    %v2150 = vsel %vm339, %v2149, 0
    %2152 = vmatprep.subr.mxu0 0.0
    %2153 = vmatpush1.msra.mxu0 0.0
    %2154 = vmatprep.subr.mxu0 0.0
    %2155 = vmatpush1.msra.mxu0 0.0
    %2156 = vmatprep.subr.mxu0 0.0
    %2157 = vmatpush1.msra.mxu0 0.0
    %2158 = vmatprep.subr.mxu0 0.0
    %2159 = vmatpush1.msra.mxu0 0.0
    %2160 = vmatprep.subr.mxu0 0.0
    %2161 = vmatpush1.msra.mxu0 0.0
    %2162 = vmatprep.subr.mxu0 0.0
    %2163 = vmatpush1.msra.mxu0 0.0
    %2164 = vmatprep.subr.mxu0 0.0
    %2165 = vmatpush1.msra.mxu0 0.0
    %2166 = vmatprep.subr.mxu0 0.0
    %2167 = vmatpush1.msra.mxu0 0.0
    %2168 = vmatprep.subr.mxu0 0.0
    %2169 = vmatpush1.msra.mxu0 0.0
    %2170 = vmatprep.subr.mxu0 0.0
    %2171 = vmatpush1.msra.mxu0 0.0
    %2172 = vmatprep.subr.mxu0 0.0
    %2173 = vmatpush1.msra.mxu0 0.0
    %2174 = vmatprep.subr.mxu0 0.0
    %2175 = vmatpush1.msra.mxu0 0.0
    %2176 = vmatprep.subr.mxu0 0.0
    %2177 = vmatpush1.msra.mxu0 %v331
    %2178 = vmatprep.subr.mxu0 0.0
    %2179 = vmatpush1.msra.mxu0 %v330
    %2180 = vmatprep.subr.mxu0 0.0
    %2181 = vmatpush1.msra.mxu0 %v329
    %2182 = vmatprep.subr.mxu0 0.0
    %2183 = vmatpush1.msra.mxu0 %v328
    %2184 = vmatprep.subr.mxu0 0.0
    %2185 = vmatpush2.msra.mxu0 0.0
    %2186 = vmatprep.subr.mxu0 0.0
    %2187 = vmatpush2.msra.mxu0 0.0
    %2188 = vmatprep.subr.mxu0 0.0
    %2189 = vmatpush2.msra.mxu0 0.0
    %2190 = vmatprep.subr.mxu0 0.0
    %2191 = vmatpush2.msra.mxu0 0.0
    %2192 = vmatprep.subr.mxu0 0.0
    %2193 = vmatpush2.msra.mxu0 0.0
    %2194 = vmatprep.subr.mxu0 0.0
    %2195 = vmatpush2.msra.mxu0 0.0
    %2196 = vmatprep.subr.mxu0 0.0
    %2197 = vmatpush2.msra.mxu0 0.0
    %2198 = vmatprep.subr.mxu0 0.0
    %2199 = vmatpush2.msra.mxu0 0.0
    %2200 = vmatprep.subr.mxu0 0.0
    %2201 = vmatpush2.msra.mxu0 0.0
    %2202 = vmatprep.subr.mxu0 0.0
    %2203 = vmatpush2.msra.mxu0 0.0
    %2204 = vmatprep.subr.mxu0 0.0
    %2205 = vmatpush2.msra.mxu0 0.0
    %2206 = vmatprep.subr.mxu0 0.0
    %2207 = vmatpush2.msra.mxu0 0.0
    %2208 = vmatprep.subr.mxu0 0.0
    %2209 = vmatpush2.msra.mxu0 0.0
    %2210 = vmatprep.subr.mxu0 0.0
    %2211 = vmatpush2.msra.mxu0 0.0
    %2212 = vmatprep.subr.mxu0 0.0
    %2213 = vmatpush2.msra.mxu0 0.0
    %2214 = vmatprep.subr.mxu0 0.0
    %2215 = vmatpush2.msra.mxu0 0.0
    %2216 = vmatprep.mubr.f32.mxu0 0.0
    %2217 = vmatmul.mubr.f32.gmra.mxu0 %v2150
    %v2218 = vpop.f32.mrf.mxu0
    %v2219 = vadd.f32 0.0, %v2218
    %v2220 = vpop.f32.mrf.mxu0
    %2221 = vdwg.mxu0
    %v2222 = vadd.f32 %v446, %v2219
    %v2223 = vxor.u32 %v2222, 2147483648
    %v2224 = vmul.f32 %v2223, 1.442695
    %v2225 = vpow.pop %v2224
    %v2226 = vadd.f32 %v2225, 1.0
    %v2227 = vrcp.pop %v2226
    %v2228 = vmul.f32 1.0, %v2227
    %v2229 = vadd.f32 %v2219, %v421
    %2231 = vrot.lane.b32.xlu0 %v2229, 64
    %v2232 = vpop.permute.xlu0 %2231
    %v2234 = vmul.f32 %v2228, %v2232
    %2236 = vrot.lane.b32.xlu0 %v2234, 64
    %v2237 = vpop.permute.xlu0 %2236
    %v2239 = vadd.f32 %v446, %v2237
    %v2240 = vtanh.pop %v2239
    %v2241 = vsub.f32 %v2146, %v2240
    %2243 = vrot.lane.b32.xlu0 %v2241, 96
    %v2244 = vpop.permute.xlu0 %2243
    %v2246 = vmul.f32 %v2228, %v2244
    %2248 = vrot.lane.b32.xlu0 %v2246, 32
    %v2249 = vpop.permute.xlu0 %2248
    %v2251 = vadd.f32 %v2240, %v2249
    %2253 = vrot.lane.b32.xlu0 %v2251, 64
    %v2254 = vpop.permute.xlu0 %2253
    %v2255 = vsel %vm339, %v2254, 0
    %2257 = vmatprep.subr.mxu0 0.0
    %2258 = vmatpush1.msra.mxu0 0.0
    %2259 = vmatprep.subr.mxu0 0.0
    %2260 = vmatpush1.msra.mxu0 0.0
    %2261 = vmatprep.subr.mxu0 0.0
    %2262 = vmatpush1.msra.mxu0 0.0
    %2263 = vmatprep.subr.mxu0 0.0
    %2264 = vmatpush1.msra.mxu0 0.0
    %2265 = vmatprep.subr.mxu0 0.0
    %2266 = vmatpush1.msra.mxu0 0.0
    %2267 = vmatprep.subr.mxu0 0.0
    %2268 = vmatpush1.msra.mxu0 0.0
    %2269 = vmatprep.subr.mxu0 0.0
    %2270 = vmatpush1.msra.mxu0 0.0
    %2271 = vmatprep.subr.mxu0 0.0
    %2272 = vmatpush1.msra.mxu0 0.0
    %2273 = vmatprep.subr.mxu0 0.0
    %2274 = vmatpush1.msra.mxu0 0.0
    %2275 = vmatprep.subr.mxu0 0.0
    %2276 = vmatpush1.msra.mxu0 0.0
    %2277 = vmatprep.subr.mxu0 0.0
    %2278 = vmatpush1.msra.mxu0 0.0
    %2279 = vmatprep.subr.mxu0 0.0
    %2280 = vmatpush1.msra.mxu0 0.0
    %2281 = vmatprep.subr.mxu0 0.0
    %2282 = vmatpush1.msra.mxu0 %v331
    %2283 = vmatprep.subr.mxu0 0.0
    %2284 = vmatpush1.msra.mxu0 %v330
    %2285 = vmatprep.subr.mxu0 0.0
    %2286 = vmatpush1.msra.mxu0 %v329
    %2287 = vmatprep.subr.mxu0 0.0
    %2288 = vmatpush1.msra.mxu0 %v328
    %2289 = vmatprep.subr.mxu0 0.0
    %2290 = vmatpush2.msra.mxu0 0.0
    %2291 = vmatprep.subr.mxu0 0.0
    %2292 = vmatpush2.msra.mxu0 0.0
    %2293 = vmatprep.subr.mxu0 0.0
    %2294 = vmatpush2.msra.mxu0 0.0
    %2295 = vmatprep.subr.mxu0 0.0
    %2296 = vmatpush2.msra.mxu0 0.0
    %2297 = vmatprep.subr.mxu0 0.0
    %2298 = vmatpush2.msra.mxu0 0.0
    %2299 = vmatprep.subr.mxu0 0.0
    %2300 = vmatpush2.msra.mxu0 0.0
    %2301 = vmatprep.subr.mxu0 0.0
    %2302 = vmatpush2.msra.mxu0 0.0
    %2303 = vmatprep.subr.mxu0 0.0
    %2304 = vmatpush2.msra.mxu0 0.0
    %2305 = vmatprep.subr.mxu0 0.0
    %2306 = vmatpush2.msra.mxu0 0.0
    %2307 = vmatprep.subr.mxu0 0.0
    %2308 = vmatpush2.msra.mxu0 0.0
    %2309 = vmatprep.subr.mxu0 0.0
    %2310 = vmatpush2.msra.mxu0 0.0
    %2311 = vmatprep.subr.mxu0 0.0
    %2312 = vmatpush2.msra.mxu0 0.0
    %2313 = vmatprep.subr.mxu0 0.0
    %2314 = vmatpush2.msra.mxu0 0.0
    %2315 = vmatprep.subr.mxu0 0.0
    %2316 = vmatpush2.msra.mxu0 0.0
    %2317 = vmatprep.subr.mxu0 0.0
    %2318 = vmatpush2.msra.mxu0 0.0
    %2319 = vmatprep.subr.mxu0 0.0
    %2320 = vmatpush2.msra.mxu0 0.0
    %2321 = vmatprep.mubr.f32.mxu0 0.0
    %2322 = vmatmul.mubr.f32.gmra.mxu0 %v2255
    %v2323 = vpop.f32.mrf.mxu0
    %v2324 = vadd.f32 0.0, %v2323
    %v2325 = vpop.f32.mrf.mxu0
    %2326 = vdwg.mxu0
    %v2327 = vadd.f32 %v552, %v2324
    %v2328 = vxor.u32 %v2327, 2147483648
    %v2329 = vmul.f32 %v2328, 1.442695
    %v2330 = vpow.pop %v2329
    %v2331 = vadd.f32 %v2330, 1.0
    %v2332 = vrcp.pop %v2331
    %v2333 = vmul.f32 1.0, %v2332
    %v2334 = vadd.f32 %v2324, %v421
    %2336 = vrot.lane.b32.xlu0 %v2334, 64
    %v2337 = vpop.permute.xlu0 %2336
    %v2339 = vmul.f32 %v2333, %v2337
    %2341 = vrot.lane.b32.xlu0 %v2339, 64
    %v2342 = vpop.permute.xlu0 %2341
    %v2344 = vadd.f32 %v552, %v2342
    %v2345 = vtanh.pop %v2344
    %v2346 = vsub.f32 %v2251, %v2345
    %2348 = vrot.lane.b32.xlu0 %v2346, 96
    %v2349 = vpop.permute.xlu0 %2348
    %v2351 = vmul.f32 %v2333, %v2349
    %2353 = vrot.lane.b32.xlu0 %v2351, 32
    %v2354 = vpop.permute.xlu0 %2353
    %v2356 = vadd.f32 %v2345, %v2354
    %2358 = vrot.lane.b32.xlu0 %v2356, 64
    %v2359 = vpop.permute.xlu0 %2358
    %v2360 = vsel %vm339, %v2359, 0
    %2362 = vmatprep.subr.mxu0 0.0
    %2363 = vmatpush1.msra.mxu0 0.0
    %2364 = vmatprep.subr.mxu0 0.0
    %2365 = vmatpush1.msra.mxu0 0.0
    %2366 = vmatprep.subr.mxu0 0.0
    %2367 = vmatpush1.msra.mxu0 0.0
    %2368 = vmatprep.subr.mxu0 0.0
    %2369 = vmatpush1.msra.mxu0 0.0
    %2370 = vmatprep.subr.mxu0 0.0
    %2371 = vmatpush1.msra.mxu0 0.0
    %2372 = vmatprep.subr.mxu0 0.0
    %2373 = vmatpush1.msra.mxu0 0.0
    %2374 = vmatprep.subr.mxu0 0.0
    %2375 = vmatpush1.msra.mxu0 0.0
    %2376 = vmatprep.subr.mxu0 0.0
    %2377 = vmatpush1.msra.mxu0 0.0
    %2378 = vmatprep.subr.mxu0 0.0
    %2379 = vmatpush1.msra.mxu0 0.0
    %2380 = vmatprep.subr.mxu0 0.0
    %2381 = vmatpush1.msra.mxu0 0.0
    %2382 = vmatprep.subr.mxu0 0.0
    %2383 = vmatpush1.msra.mxu0 0.0
    %2384 = vmatprep.subr.mxu0 0.0
    %2385 = vmatpush1.msra.mxu0 0.0
    %2386 = vmatprep.subr.mxu0 0.0
    %2387 = vmatpush1.msra.mxu0 %v331
    %2388 = vmatprep.subr.mxu0 0.0
    %2389 = vmatpush1.msra.mxu0 %v330
    %2390 = vmatprep.subr.mxu0 0.0
    %2391 = vmatpush1.msra.mxu0 %v329
    %2392 = vmatprep.subr.mxu0 0.0
    %2393 = vmatpush1.msra.mxu0 %v328
    %2394 = vmatprep.subr.mxu0 0.0
    %2395 = vmatpush2.msra.mxu0 0.0
    %2396 = vmatprep.subr.mxu0 0.0
    %2397 = vmatpush2.msra.mxu0 0.0
    %2398 = vmatprep.subr.mxu0 0.0
    %2399 = vmatpush2.msra.mxu0 0.0
    %2400 = vmatprep.subr.mxu0 0.0
    %2401 = vmatpush2.msra.mxu0 0.0
    %2402 = vmatprep.subr.mxu0 0.0
    %2403 = vmatpush2.msra.mxu0 0.0
    %2404 = vmatprep.subr.mxu0 0.0
    %2405 = vmatpush2.msra.mxu0 0.0
    %2406 = vmatprep.subr.mxu0 0.0
    %2407 = vmatpush2.msra.mxu0 0.0
    %2408 = vmatprep.subr.mxu0 0.0
    %2409 = vmatpush2.msra.mxu0 0.0
    %2410 = vmatprep.subr.mxu0 0.0
    %2411 = vmatpush2.msra.mxu0 0.0
    %2412 = vmatprep.subr.mxu0 0.0
    %2413 = vmatpush2.msra.mxu0 0.0
    %2414 = vmatprep.subr.mxu0 0.0
    %2415 = vmatpush2.msra.mxu0 0.0
    %2416 = vmatprep.subr.mxu0 0.0
    %2417 = vmatpush2.msra.mxu0 0.0
    %2418 = vmatprep.subr.mxu0 0.0
    %2419 = vmatpush2.msra.mxu0 0.0
    %2420 = vmatprep.subr.mxu0 0.0
    %2421 = vmatpush2.msra.mxu0 0.0
    %2422 = vmatprep.subr.mxu0 0.0
    %2423 = vmatpush2.msra.mxu0 0.0
    %2424 = vmatprep.subr.mxu0 0.0
    %2425 = vmatpush2.msra.mxu0 0.0
    %2426 = vmatprep.mubr.f32.mxu0 0.0
    %2427 = vmatmul.mubr.f32.gmra.mxu0 %v2360
    %v2428 = vpop.f32.mrf.mxu0
    %v2429 = vadd.f32 0.0, %v2428
    %v2430 = vpop.f32.mrf.mxu0
    %2431 = vdwg.mxu0
    %v2432 = vadd.f32 %v658, %v2429
    %v2433 = vxor.u32 %v2432, 2147483648
    %v2434 = vmul.f32 %v2433, 1.442695
    %v2435 = vpow.pop %v2434
    %v2436 = vadd.f32 %v2435, 1.0
    %v2437 = vrcp.pop %v2436
    %v2438 = vmul.f32 1.0, %v2437
    %v2439 = vadd.f32 %v2429, %v421
    %2441 = vrot.lane.b32.xlu0 %v2439, 64
    %v2442 = vpop.permute.xlu0 %2441
    %v2444 = vmul.f32 %v2438, %v2442
    %2446 = vrot.lane.b32.xlu0 %v2444, 64
    %v2447 = vpop.permute.xlu0 %2446
    %v2449 = vadd.f32 %v658, %v2447
    %v2450 = vtanh.pop %v2449
    %v2451 = vsub.f32 %v2356, %v2450
    %2453 = vrot.lane.b32.xlu0 %v2451, 96
    %v2454 = vpop.permute.xlu0 %2453
    %v2456 = vmul.f32 %v2438, %v2454
    %2458 = vrot.lane.b32.xlu0 %v2456, 32
    %v2459 = vpop.permute.xlu0 %2458
    %v2461 = vadd.f32 %v2450, %v2459
    %2463 = vrot.lane.b32.xlu0 %v2461, 64
    %v2464 = vpop.permute.xlu0 %2463
    %v2465 = vsel %vm339, %v2464, 0
    %2467 = vmatprep.subr.mxu0 0.0
    %2468 = vmatpush1.msra.mxu0 0.0
    %2469 = vmatprep.subr.mxu0 0.0
    %2470 = vmatpush1.msra.mxu0 0.0
    %2471 = vmatprep.subr.mxu0 0.0
    %2472 = vmatpush1.msra.mxu0 0.0
    %2473 = vmatprep.subr.mxu0 0.0
    %2474 = vmatpush1.msra.mxu0 0.0
    %2475 = vmatprep.subr.mxu0 0.0
    %2476 = vmatpush1.msra.mxu0 0.0
    %2477 = vmatprep.subr.mxu0 0.0
    %2478 = vmatpush1.msra.mxu0 0.0
    %2479 = vmatprep.subr.mxu0 0.0
    %2480 = vmatpush1.msra.mxu0 0.0
    %2481 = vmatprep.subr.mxu0 0.0
    %2482 = vmatpush1.msra.mxu0 0.0
    %2483 = vmatprep.subr.mxu0 0.0
    %2484 = vmatpush1.msra.mxu0 0.0
    %2485 = vmatprep.subr.mxu0 0.0
    %2486 = vmatpush1.msra.mxu0 0.0
    %2487 = vmatprep.subr.mxu0 0.0
    %2488 = vmatpush1.msra.mxu0 0.0
    %2489 = vmatprep.subr.mxu0 0.0
    %2490 = vmatpush1.msra.mxu0 0.0
    %2491 = vmatprep.subr.mxu0 0.0
    %2492 = vmatpush1.msra.mxu0 %v331
    %2493 = vmatprep.subr.mxu0 0.0
    %2494 = vmatpush1.msra.mxu0 %v330
    %2495 = vmatprep.subr.mxu0 0.0
    %2496 = vmatpush1.msra.mxu0 %v329
    %2497 = vmatprep.subr.mxu0 0.0
    %2498 = vmatpush1.msra.mxu0 %v328
    %2499 = vmatprep.subr.mxu0 0.0
    %2500 = vmatpush2.msra.mxu0 0.0
    %2501 = vmatprep.subr.mxu0 0.0
    %2502 = vmatpush2.msra.mxu0 0.0
    %2503 = vmatprep.subr.mxu0 0.0
    %2504 = vmatpush2.msra.mxu0 0.0
    %2505 = vmatprep.subr.mxu0 0.0
    %2506 = vmatpush2.msra.mxu0 0.0
    %2507 = vmatprep.subr.mxu0 0.0
    %2508 = vmatpush2.msra.mxu0 0.0
    %2509 = vmatprep.subr.mxu0 0.0
    %2510 = vmatpush2.msra.mxu0 0.0
    %2511 = vmatprep.subr.mxu0 0.0
    %2512 = vmatpush2.msra.mxu0 0.0
    %2513 = vmatprep.subr.mxu0 0.0
    %2514 = vmatpush2.msra.mxu0 0.0
    %2515 = vmatprep.subr.mxu0 0.0
    %2516 = vmatpush2.msra.mxu0 0.0
    %2517 = vmatprep.subr.mxu0 0.0
    %2518 = vmatpush2.msra.mxu0 0.0
    %2519 = vmatprep.subr.mxu0 0.0
    %2520 = vmatpush2.msra.mxu0 0.0
    %2521 = vmatprep.subr.mxu0 0.0
    %2522 = vmatpush2.msra.mxu0 0.0
    %2523 = vmatprep.subr.mxu0 0.0
    %2524 = vmatpush2.msra.mxu0 0.0
    %2525 = vmatprep.subr.mxu0 0.0
    %2526 = vmatpush2.msra.mxu0 0.0
    %2527 = vmatprep.subr.mxu0 0.0
    %2528 = vmatpush2.msra.mxu0 0.0
    %2529 = vmatprep.subr.mxu0 0.0
    %2530 = vmatpush2.msra.mxu0 0.0
    %2531 = vmatprep.mubr.f32.mxu0 0.0
    %2532 = vmatmul.mubr.f32.gmra.mxu0 %v2465
    %v2533 = vpop.f32.mrf.mxu0
    %v2534 = vadd.f32 0.0, %v2533
    %v2535 = vpop.f32.mrf.mxu0
    %2536 = vdwg.mxu0
    %v2537 = vadd.f32 %v764, %v2534
    %v2538 = vxor.u32 %v2537, 2147483648
    %v2539 = vmul.f32 %v2538, 1.442695
    %v2540 = vpow.pop %v2539
    %v2541 = vadd.f32 %v2540, 1.0
    %v2542 = vrcp.pop %v2541
    %v2543 = vmul.f32 1.0, %v2542
    %v2544 = vadd.f32 %v2534, %v421
    %2546 = vrot.lane.b32.xlu0 %v2544, 64
    %v2547 = vpop.permute.xlu0 %2546
    %v2549 = vmul.f32 %v2543, %v2547
    %2551 = vrot.lane.b32.xlu0 %v2549, 64
    %v2552 = vpop.permute.xlu0 %2551
    %v2554 = vadd.f32 %v764, %v2552
    %v2555 = vtanh.pop %v2554
    %v2556 = vsub.f32 %v2461, %v2555
    %2558 = vrot.lane.b32.xlu0 %v2556, 96
    %v2559 = vpop.permute.xlu0 %2558
    %v2561 = vmul.f32 %v2543, %v2559
    %2563 = vrot.lane.b32.xlu0 %v2561, 32
    %v2564 = vpop.permute.xlu0 %2563
    %v2566 = vadd.f32 %v2555, %v2564
    %2568 = vrot.lane.b32.xlu0 %v2566, 64
    %v2569 = vpop.permute.xlu0 %2568
    %v2570 = vsel %vm339, %v2569, 0
    %2572 = vmatprep.subr.mxu0 0.0
    %2573 = vmatpush1.msra.mxu0 0.0
    %2574 = vmatprep.subr.mxu0 0.0
    %2575 = vmatpush1.msra.mxu0 0.0
    %2576 = vmatprep.subr.mxu0 0.0
    %2577 = vmatpush1.msra.mxu0 0.0
    %2578 = vmatprep.subr.mxu0 0.0
    %2579 = vmatpush1.msra.mxu0 0.0
    %2580 = vmatprep.subr.mxu0 0.0
    %2581 = vmatpush1.msra.mxu0 0.0
    %2582 = vmatprep.subr.mxu0 0.0
    %2583 = vmatpush1.msra.mxu0 0.0
    %2584 = vmatprep.subr.mxu0 0.0
    %2585 = vmatpush1.msra.mxu0 0.0
    %2586 = vmatprep.subr.mxu0 0.0
    %2587 = vmatpush1.msra.mxu0 0.0
    %2588 = vmatprep.subr.mxu0 0.0
    %2589 = vmatpush1.msra.mxu0 0.0
    %2590 = vmatprep.subr.mxu0 0.0
    %2591 = vmatpush1.msra.mxu0 0.0
    %2592 = vmatprep.subr.mxu0 0.0
    %2593 = vmatpush1.msra.mxu0 0.0
    %2594 = vmatprep.subr.mxu0 0.0
    %2595 = vmatpush1.msra.mxu0 0.0
    %2596 = vmatprep.subr.mxu0 0.0
    %2597 = vmatpush1.msra.mxu0 %v331
    %2598 = vmatprep.subr.mxu0 0.0
    %2599 = vmatpush1.msra.mxu0 %v330
    %2600 = vmatprep.subr.mxu0 0.0
    %2601 = vmatpush1.msra.mxu0 %v329
    %2602 = vmatprep.subr.mxu0 0.0
    %2603 = vmatpush1.msra.mxu0 %v328
    %2604 = vmatprep.subr.mxu0 0.0
    %2605 = vmatpush2.msra.mxu0 0.0
    %2606 = vmatprep.subr.mxu0 0.0
    %2607 = vmatpush2.msra.mxu0 0.0
    %2608 = vmatprep.subr.mxu0 0.0
    %2609 = vmatpush2.msra.mxu0 0.0
    %2610 = vmatprep.subr.mxu0 0.0
    %2611 = vmatpush2.msra.mxu0 0.0
    %2612 = vmatprep.subr.mxu0 0.0
    %2613 = vmatpush2.msra.mxu0 0.0
    %2614 = vmatprep.subr.mxu0 0.0
    %2615 = vmatpush2.msra.mxu0 0.0
    %2616 = vmatprep.subr.mxu0 0.0
    %2617 = vmatpush2.msra.mxu0 0.0
    %2618 = vmatprep.subr.mxu0 0.0
    %2619 = vmatpush2.msra.mxu0 0.0
    %2620 = vmatprep.subr.mxu0 0.0
    %2621 = vmatpush2.msra.mxu0 0.0
    %2622 = vmatprep.subr.mxu0 0.0
    %2623 = vmatpush2.msra.mxu0 0.0
    %2624 = vmatprep.subr.mxu0 0.0
    %2625 = vmatpush2.msra.mxu0 0.0
    %2626 = vmatprep.subr.mxu0 0.0
    %2627 = vmatpush2.msra.mxu0 0.0
    %2628 = vmatprep.subr.mxu0 0.0
    %2629 = vmatpush2.msra.mxu0 0.0
    %2630 = vmatprep.subr.mxu0 0.0
    %2631 = vmatpush2.msra.mxu0 0.0
    %2632 = vmatprep.subr.mxu0 0.0
    %2633 = vmatpush2.msra.mxu0 0.0
    %2634 = vmatprep.subr.mxu0 0.0
    %2635 = vmatpush2.msra.mxu0 0.0
    %2636 = vmatprep.mubr.f32.mxu0 0.0
    %2637 = vmatmul.mubr.f32.gmra.mxu0 %v2570
    %v2638 = vpop.f32.mrf.mxu0
    %v2639 = vadd.f32 0.0, %v2638
    %v2640 = vpop.f32.mrf.mxu0
    %2641 = vdwg.mxu0
    %v2642 = vadd.f32 %v870, %v2639
    %v2643 = vxor.u32 %v2642, 2147483648
    %v2644 = vmul.f32 %v2643, 1.442695
    %v2645 = vpow.pop %v2644
    %v2646 = vadd.f32 %v2645, 1.0
    %v2647 = vrcp.pop %v2646
    %v2648 = vmul.f32 1.0, %v2647
    %v2649 = vadd.f32 %v2639, %v421
    %2651 = vrot.lane.b32.xlu0 %v2649, 64
    %v2652 = vpop.permute.xlu0 %2651
    %v2654 = vmul.f32 %v2648, %v2652
    %2656 = vrot.lane.b32.xlu0 %v2654, 64
    %v2657 = vpop.permute.xlu0 %2656
    %v2659 = vadd.f32 %v870, %v2657
    %v2660 = vtanh.pop %v2659
    %v2661 = vsub.f32 %v2566, %v2660
    %2663 = vrot.lane.b32.xlu0 %v2661, 96
    %v2664 = vpop.permute.xlu0 %2663
    %v2666 = vmul.f32 %v2648, %v2664
    %2668 = vrot.lane.b32.xlu0 %v2666, 32
    %v2669 = vpop.permute.xlu0 %2668
    %v2671 = vadd.f32 %v2660, %v2669
    %2673 = vrot.lane.b32.xlu0 %v2671, 64
    %v2674 = vpop.permute.xlu0 %2673
    %v2675 = vsel %vm339, %v2674, 0
    %2677 = vmatprep.subr.mxu0 0.0
    %2678 = vmatpush1.msra.mxu0 0.0
    %2679 = vmatprep.subr.mxu0 0.0
    %2680 = vmatpush1.msra.mxu0 0.0
    %2681 = vmatprep.subr.mxu0 0.0
    %2682 = vmatpush1.msra.mxu0 0.0
    %2683 = vmatprep.subr.mxu0 0.0
    %2684 = vmatpush1.msra.mxu0 0.0
    %2685 = vmatprep.subr.mxu0 0.0
    %2686 = vmatpush1.msra.mxu0 0.0
    %2687 = vmatprep.subr.mxu0 0.0
    %2688 = vmatpush1.msra.mxu0 0.0
    %2689 = vmatprep.subr.mxu0 0.0
    %2690 = vmatpush1.msra.mxu0 0.0
    %2691 = vmatprep.subr.mxu0 0.0
    %2692 = vmatpush1.msra.mxu0 0.0
    %2693 = vmatprep.subr.mxu0 0.0
    %2694 = vmatpush1.msra.mxu0 0.0
    %2695 = vmatprep.subr.mxu0 0.0
    %2696 = vmatpush1.msra.mxu0 0.0
    %2697 = vmatprep.subr.mxu0 0.0
    %2698 = vmatpush1.msra.mxu0 0.0
    %2699 = vmatprep.subr.mxu0 0.0
    %2700 = vmatpush1.msra.mxu0 0.0
    %2701 = vmatprep.subr.mxu0 0.0
    %2702 = vmatpush1.msra.mxu0 %v331
    %2703 = vmatprep.subr.mxu0 0.0
    %2704 = vmatpush1.msra.mxu0 %v330
    %2705 = vmatprep.subr.mxu0 0.0
    %2706 = vmatpush1.msra.mxu0 %v329
    %2707 = vmatprep.subr.mxu0 0.0
    %2708 = vmatpush1.msra.mxu0 %v328
    %2709 = vmatprep.subr.mxu0 0.0
    %2710 = vmatpush2.msra.mxu0 0.0
    %2711 = vmatprep.subr.mxu0 0.0
    %2712 = vmatpush2.msra.mxu0 0.0
    %2713 = vmatprep.subr.mxu0 0.0
    %2714 = vmatpush2.msra.mxu0 0.0
    %2715 = vmatprep.subr.mxu0 0.0
    %2716 = vmatpush2.msra.mxu0 0.0
    %2717 = vmatprep.subr.mxu0 0.0
    %2718 = vmatpush2.msra.mxu0 0.0
    %2719 = vmatprep.subr.mxu0 0.0
    %2720 = vmatpush2.msra.mxu0 0.0
    %2721 = vmatprep.subr.mxu0 0.0
    %2722 = vmatpush2.msra.mxu0 0.0
    %2723 = vmatprep.subr.mxu0 0.0
    %2724 = vmatpush2.msra.mxu0 0.0
    %2725 = vmatprep.subr.mxu0 0.0
    %2726 = vmatpush2.msra.mxu0 0.0
    %2727 = vmatprep.subr.mxu0 0.0
    %2728 = vmatpush2.msra.mxu0 0.0
    %2729 = vmatprep.subr.mxu0 0.0
    %2730 = vmatpush2.msra.mxu0 0.0
    %2731 = vmatprep.subr.mxu0 0.0
    %2732 = vmatpush2.msra.mxu0 0.0
    %2733 = vmatprep.subr.mxu0 0.0
    %2734 = vmatpush2.msra.mxu0 0.0
    %2735 = vmatprep.subr.mxu0 0.0
    %2736 = vmatpush2.msra.mxu0 0.0
    %2737 = vmatprep.subr.mxu0 0.0
    %2738 = vmatpush2.msra.mxu0 0.0
    %2739 = vmatprep.subr.mxu0 0.0
    %2740 = vmatpush2.msra.mxu0 0.0
    %2741 = vmatprep.mubr.f32.mxu0 0.0
    %2742 = vmatmul.mubr.f32.gmra.mxu0 %v2675
    %v2743 = vpop.f32.mrf.mxu0
    %v2744 = vadd.f32 0.0, %v2743
    %v2745 = vpop.f32.mrf.mxu0
    %2746 = vdwg.mxu0
    %v2747 = vadd.f32 %v976, %v2744
    %v2748 = vxor.u32 %v2747, 2147483648
    %v2749 = vmul.f32 %v2748, 1.442695
    %v2750 = vpow.pop %v2749
    %v2751 = vadd.f32 %v2750, 1.0
    %v2752 = vrcp.pop %v2751
    %v2753 = vmul.f32 1.0, %v2752
    %v2754 = vadd.f32 %v2744, %v421
    %2756 = vrot.lane.b32.xlu0 %v2754, 64
    %v2757 = vpop.permute.xlu0 %2756
    %v2759 = vmul.f32 %v2753, %v2757
    %2761 = vrot.lane.b32.xlu0 %v2759, 64
    %v2762 = vpop.permute.xlu0 %2761
    %v2764 = vadd.f32 %v976, %v2762
    %v2765 = vtanh.pop %v2764
    %v2766 = vsub.f32 %v2671, %v2765
    %2768 = vrot.lane.b32.xlu0 %v2766, 96
    %v2769 = vpop.permute.xlu0 %2768
    %v2771 = vmul.f32 %v2753, %v2769
    %2773 = vrot.lane.b32.xlu0 %v2771, 32
    %v2774 = vpop.permute.xlu0 %2773
    %v2776 = vadd.f32 %v2765, %v2774
    %2778 = vrot.lane.b32.xlu0 %v2776, 64
    %v2779 = vpop.permute.xlu0 %2778
    %v2780 = vsel %vm339, %v2779, 0
    %2782 = vmatprep.subr.mxu0 0.0
    %2783 = vmatpush1.msra.mxu0 0.0
    %2784 = vmatprep.subr.mxu0 0.0
    %2785 = vmatpush1.msra.mxu0 0.0
    %2786 = vmatprep.subr.mxu0 0.0
    %2787 = vmatpush1.msra.mxu0 0.0
    %2788 = vmatprep.subr.mxu0 0.0
    %2789 = vmatpush1.msra.mxu0 0.0
    %2790 = vmatprep.subr.mxu0 0.0
    %2791 = vmatpush1.msra.mxu0 0.0
    %2792 = vmatprep.subr.mxu0 0.0
    %2793 = vmatpush1.msra.mxu0 0.0
    %2794 = vmatprep.subr.mxu0 0.0
    %2795 = vmatpush1.msra.mxu0 0.0
    %2796 = vmatprep.subr.mxu0 0.0
    %2797 = vmatpush1.msra.mxu0 0.0
    %2798 = vmatprep.subr.mxu0 0.0
    %2799 = vmatpush1.msra.mxu0 0.0
    %2800 = vmatprep.subr.mxu0 0.0
    %2801 = vmatpush1.msra.mxu0 0.0
    %2802 = vmatprep.subr.mxu0 0.0
    %2803 = vmatpush1.msra.mxu0 0.0
    %2804 = vmatprep.subr.mxu0 0.0
    %2805 = vmatpush1.msra.mxu0 0.0
    %2806 = vmatprep.subr.mxu0 0.0
    %2807 = vmatpush1.msra.mxu0 %v331
    %2808 = vmatprep.subr.mxu0 0.0
    %2809 = vmatpush1.msra.mxu0 %v330
    %2810 = vmatprep.subr.mxu0 0.0
    %2811 = vmatpush1.msra.mxu0 %v329
    %2812 = vmatprep.subr.mxu0 0.0
    %2813 = vmatpush1.msra.mxu0 %v328
    %2814 = vmatprep.subr.mxu0 0.0
    %2815 = vmatpush2.msra.mxu0 0.0
    %2816 = vmatprep.subr.mxu0 0.0
    %2817 = vmatpush2.msra.mxu0 0.0
    %2818 = vmatprep.subr.mxu0 0.0
    %2819 = vmatpush2.msra.mxu0 0.0
    %2820 = vmatprep.subr.mxu0 0.0
    %2821 = vmatpush2.msra.mxu0 0.0
    %2822 = vmatprep.subr.mxu0 0.0
    %2823 = vmatpush2.msra.mxu0 0.0
    %2824 = vmatprep.subr.mxu0 0.0
    %2825 = vmatpush2.msra.mxu0 0.0
    %2826 = vmatprep.subr.mxu0 0.0
    %2827 = vmatpush2.msra.mxu0 0.0
    %2828 = vmatprep.subr.mxu0 0.0
    %2829 = vmatpush2.msra.mxu0 0.0
    %2830 = vmatprep.subr.mxu0 0.0
    %2831 = vmatpush2.msra.mxu0 0.0
    %2832 = vmatprep.subr.mxu0 0.0
    %2833 = vmatpush2.msra.mxu0 0.0
    %2834 = vmatprep.subr.mxu0 0.0
    %2835 = vmatpush2.msra.mxu0 0.0
    %2836 = vmatprep.subr.mxu0 0.0
    %2837 = vmatpush2.msra.mxu0 0.0
    %2838 = vmatprep.subr.mxu0 0.0
    %2839 = vmatpush2.msra.mxu0 0.0
    %2840 = vmatprep.subr.mxu0 0.0
    %2841 = vmatpush2.msra.mxu0 0.0
    %2842 = vmatprep.subr.mxu0 0.0
    %2843 = vmatpush2.msra.mxu0 0.0
    %2844 = vmatprep.subr.mxu0 0.0
    %2845 = vmatpush2.msra.mxu0 0.0
    %2846 = vmatprep.mubr.f32.mxu0 0.0
    %2847 = vmatmul.mubr.f32.gmra.mxu0 %v2780
    %v2848 = vpop.f32.mrf.mxu0
    %v2849 = vadd.f32 0.0, %v2848
    %v2850 = vpop.f32.mrf.mxu0
    %2851 = vdwg.mxu0
    %v2852 = vadd.f32 %v1082, %v2849
    %v2853 = vxor.u32 %v2852, 2147483648
    %v2854 = vmul.f32 %v2853, 1.442695
    %v2855 = vpow.pop %v2854
    %v2856 = vadd.f32 %v2855, 1.0
    %v2857 = vrcp.pop %v2856
    %v2858 = vmul.f32 1.0, %v2857
    %v2859 = vadd.f32 %v2849, %v421
    %2861 = vrot.lane.b32.xlu0 %v2859, 64
    %v2862 = vpop.permute.xlu0 %2861
    %v2864 = vmul.f32 %v2858, %v2862
    %2866 = vrot.lane.b32.xlu0 %v2864, 64
    %v2867 = vpop.permute.xlu0 %2866
    %v2869 = vadd.f32 %v1082, %v2867
    %v2870 = vtanh.pop %v2869
    %v2871 = vsub.f32 %v2776, %v2870
    %2873 = vrot.lane.b32.xlu0 %v2871, 96
    %v2874 = vpop.permute.xlu0 %2873
    %v2876 = vmul.f32 %v2858, %v2874
    %2878 = vrot.lane.b32.xlu0 %v2876, 32
    %v2879 = vpop.permute.xlu0 %2878
    %v2881 = vadd.f32 %v2870, %v2879
    %2883 = vrot.lane.b32.xlu0 %v2881, 64
    %v2884 = vpop.permute.xlu0 %2883
    %v2886 = vrot.slane %v2884, 4
    %2888 = vrot.lane.b32.xlu0 %v2886, 64
    %v2889 = vpop.permute.xlu0 %2888
    %v2891 = vsub.f32 %v2034, %v2889
    %v2892 = vand.u32 2147483647, %v2891
    %v2893 = vld [vmem:[%s5] sm:$0xff]
    %v2894 = vld [vmem:[%s5 + $0x8] sm:$0xff]
    %v2895 = vld [vmem:[%s5 + $0x10] sm:$0xff]
    %v2896 = vld [vmem:[%s5 + $0x18] sm:$0xff]
    %v2897 = vld [vmem:[%s6] sm:$0x1]
    %v2899 = vlaneseq
    %v2900 = vshrl.u32 %v2899, 7
    %v2901 = vsub.s32 0, %v2900
    %v2902 = vrot.slane %v2897, %v2901
    %2905 = vrot.lane.b32.xlu0 %v2892, 64
    %v2906 = vpop.permute.xlu0 %2905
    %v2907 = vsel %vm339, %v2906, 0
    %2909 = vmatprep.subr.mxu0 0.0
    %2910 = vmatpush1.msra.mxu0 0.0
    %2911 = vmatprep.subr.mxu0 0.0
    %2912 = vmatpush1.msra.mxu0 0.0
    %2913 = vmatprep.subr.mxu0 0.0
    %2914 = vmatpush1.msra.mxu0 0.0
    %2915 = vmatprep.subr.mxu0 0.0
    %2916 = vmatpush1.msra.mxu0 0.0
    %2917 = vmatprep.subr.mxu0 0.0
    %2918 = vmatpush1.msra.mxu0 0.0
    %2919 = vmatprep.subr.mxu0 0.0
    %2920 = vmatpush1.msra.mxu0 0.0
    %2921 = vmatprep.subr.mxu0 0.0
    %2922 = vmatpush1.msra.mxu0 0.0
    %2923 = vmatprep.subr.mxu0 0.0
    %2924 = vmatpush1.msra.mxu0 0.0
    %2925 = vmatprep.subr.mxu0 0.0
    %2926 = vmatpush1.msra.mxu0 0.0
    %2927 = vmatprep.subr.mxu0 0.0
    %2928 = vmatpush1.msra.mxu0 0.0
    %2929 = vmatprep.subr.mxu0 0.0
    %2930 = vmatpush1.msra.mxu0 0.0
    %2931 = vmatprep.subr.mxu0 0.0
    %2932 = vmatpush1.msra.mxu0 0.0
    %2933 = vmatprep.subr.mxu0 0.0
    %2934 = vmatpush1.msra.mxu0 %v2896
    %2935 = vmatprep.subr.mxu0 0.0
    %2936 = vmatpush1.msra.mxu0 %v2895
    %2937 = vmatprep.subr.mxu0 0.0
    %2938 = vmatpush1.msra.mxu0 %v2894
    %2939 = vmatprep.subr.mxu0 0.0
    %2940 = vmatpush1.msra.mxu0 %v2893
    %2941 = vmatprep.subr.mxu0 0.0
    %2942 = vmatpush2.msra.mxu0 0.0
    %2943 = vmatprep.subr.mxu0 0.0
    %2944 = vmatpush2.msra.mxu0 0.0
    %2945 = vmatprep.subr.mxu0 0.0
    %2946 = vmatpush2.msra.mxu0 0.0
    %2947 = vmatprep.subr.mxu0 0.0
    %2948 = vmatpush2.msra.mxu0 0.0
    %2949 = vmatprep.subr.mxu0 0.0
    %2950 = vmatpush2.msra.mxu0 0.0
    %2951 = vmatprep.subr.mxu0 0.0
    %2952 = vmatpush2.msra.mxu0 0.0
    %2953 = vmatprep.subr.mxu0 0.0
    %2954 = vmatpush2.msra.mxu0 0.0
    %2955 = vmatprep.subr.mxu0 0.0
    %2956 = vmatpush2.msra.mxu0 0.0
    %2957 = vmatprep.subr.mxu0 0.0
    %2958 = vmatpush2.msra.mxu0 0.0
    %2959 = vmatprep.subr.mxu0 0.0
    %2960 = vmatpush2.msra.mxu0 0.0
    %2961 = vmatprep.subr.mxu0 0.0
    %2962 = vmatpush2.msra.mxu0 0.0
    %2963 = vmatprep.subr.mxu0 0.0
    %2964 = vmatpush2.msra.mxu0 0.0
    %2965 = vmatprep.subr.mxu0 0.0
    %2966 = vmatpush2.msra.mxu0 0.0
    %2967 = vmatprep.subr.mxu0 0.0
    %2968 = vmatpush2.msra.mxu0 0.0
    %2969 = vmatprep.subr.mxu0 0.0
    %2970 = vmatpush2.msra.mxu0 0.0
    %2971 = vmatprep.subr.mxu0 0.0
    %2972 = vmatpush2.msra.mxu0 0.0
    %2973 = vmatprep.mubr.f32.mxu0 0.0
    %2974 = vmatmul.mubr.f32.gmra.mxu0 %v2907
    %v2975 = vpop.f32.mrf.mxu0
    %v2976 = vadd.f32 %v2902, %v2975
    %v2977 = vpop.f32.mrf.mxu0
    %2978 = vdwg.mxu0
    %2980 = vrot.lane.b32.xlu0 %v2976, 1
    %v2981 = vpop.permute.xlu0 %2980
    %v2983 = vsub.f32 %v2976, %v2981
    %v2984 = vxor.u32 %v2983, 2147483648
    %v2985 = vmul.f32 %v2984, 1.442695
    %v2986 = vpow.pop %v2985
    %v2987 = vadd.f32 %v2986, 1.0
    %v2988 = vrcp.pop %v2987
    %v2989 = vmul.f32 1.0, %v2988
    %v2990 = vsub.f32 1.0, %v2989
    %2992 = vrot.lane.b32.xlu0 %v2990, 127
    %v2993 = vpop.permute.xlu0 %2992
    %vm2995 = vcmask 7168
    %v2996 = vsel %vm2995, %v2993, %v2989
    %vm2997 = vcmask 11264
    %2998 = vst.msk [vmem:[%s7] sm:$0xf] %vm2997, %v2996
    // Predicated region
    $region42: #{matcher_forward.1} parent=1 // pred_check
      _
    $region43: #{matcher_forward.1} parent=1 // pred_check_branch
      %3000 = sbr.rel (0) target = $region45
    $region44: #{matcher_forward.1} parent=1 // pred_region
      _
    $region45: #{matcher_forward.1} parent=1 // pred_fallthru
      _
    // Predicated region
    $region46: #{matcher_forward.1} parent=1 // pred_check
      _
    $region47: #{matcher_forward.1} parent=1 // pred_check_branch
      %3002 = sbr.rel (0) target = $region49
    $region48: #{matcher_forward.1} parent=1 // pred_region
      _
    $region49: #{matcher_forward.1} parent=1 // pred_fallthru
      _
    %3003 = vsyncpa [#allocation4], 1
    %3004 = vsyncpa [#allocation5], 1
    %3005 = vsyncpa [#allocation7], 1

</llo_original>
